<compile_context>
chip_gen: v7x
topology: tpu7x:2x2x1
jax: 0.10.0
libtpu: 0.0.40
codegen_flags: <defaults>
</compile_context>

<pallas_src>
import functools

import jax
import jax.numpy as jnp
from jax import lax
from jax.experimental import pallas as pl
from jax.experimental.pallas import tpu as pltpu


LANE = 128  # pad Cout to a multiple of the lane width / MXU tile


# ---------------------------------------------------------------------------
# Kernel 1: conv1 (3x3, stride s) + folded BN1 + ReLU  [+ fused 1x1 shortcut]
# ---------------------------------------------------------------------------
def _conv1_kernel(x_ref, w_ref, b_ref, *rest, stride, th, wo, cin, has_proj,
                  sc_par, sc_off):
    """One (image, row-tile) per grid step.

    x_ref : (s*s, Hs, Ws, Cin)   bf16  padded parity planes (full image,
                                       resident across the row-tile axis)
    w_ref : (9*Cin, Cp)          bf16  BN1-scale-folded conv1 weights
    b_ref : (1, Cp)              f32   folded BN1 bias
    ws_ref: (Cin, Cp)            bf16  [proj] folded shortcut weights
    bs_ref: (1, Cp)              f32   [proj] folded shortcut bias
    o_ref : (1, th*Wo, Cp)       bf16  relu(bn1(conv1(x)))
    s_ref : (1, th*Wo, Cp)       bf16  [proj] bn_sc(conv1x1(x))
    slab  : (th*Wo, 9*Cin)       bf16  VMEM im2col slab
    """
    if has_proj:
        ws_ref, bs_ref, o_ref, s_ref, slab_ref = rest
    else:
        o_ref, slab_ref = rest

    s = stride
    rows = th * wo
    row0 = pl.multiple_of(pl.program_id(1) * th, th)

    # Build the (rows, 9*Cin) im2col slab in VMEM -> single K = 9*Cin matmul.
    t = 0
    for kh in range(3):
        for kw in range(3):
            par = (kh % s) * s + (kw % s)
            r0, c0 = kh // s, kw // s
            win = x_ref[par, pl.ds(row0 + r0, th), pl.ds(c0, wo), :]
            slab_ref[:, t * cin:(t + 1) * cin] = win.reshape(rows, cin)
            t += 1

    acc = jnp.dot(slab_ref[...], w_ref[...], preferred_element_type=jnp.float32)
    out = jnp.maximum(acc + b_ref[...], 0.0)               # conv1+bn1+relu
    o_ref[...] = out.reshape(o_ref.shape).astype(o_ref.dtype)

    if has_proj:
        # 1x1 (strided) projection shortcut reuses the resident parity planes:
        # its input is exactly one contiguous window of one plane.
        xs = x_ref[sc_par, pl.ds(row0 + sc_off, th), pl.ds(sc_off, wo), :]
        sh = jnp.dot(xs.reshape(rows, cin), ws_ref[...],
                     preferred_element_type=jnp.float32) + bs_ref[...]
        s_ref[...] = sh.reshape(s_ref.shape).astype(s_ref.dtype)


# ---------------------------------------------------------------------------
# Kernel 2: conv2 (3x3, stride 1) + folded BN2 + residual + ReLU
# ---------------------------------------------------------------------------
def _conv2_kernel(x_ref, w_ref, b_ref, r_ref, o_ref, xpad_ref, slab_ref, *,
                  th, ho, wo, cp, c_res, res_is_plane):
    """x_ref : (1, Ho*Wo, Cp)        bf16  conv1 output (full image, resident)
    w_ref : (9*Cp + c_res, Cp)       bf16  BN2-folded weights + identity rows
    b_ref : (1, Cp)                  f32
    r_ref : residual — (1, th*Wo, Cp) bf16 projection output, or
                       (1, H+2, W+2, Cin) bf16 padded input planes (identity)
    o_ref : (1, th*Wo, Cp)           f32
    xpad  : (Ho+2, Wo+2, Cp)         bf16  VMEM zero-haloed conv1 output
    slab  : (th*Wo, 9*Cp + c_res)    bf16  VMEM im2col slab (+ residual lanes)
    """
    rows = th * wo
    m = pl.program_id(1)

    # Stage conv1's bf16 output into a zero-haloed VMEM buffer once per image:
    # no HBM pad/cast round-trip between the two convs.
    @pl.when(m == 0)
    def _():
        xpad_ref[...] = jnp.zeros_like(xpad_ref)
        for r in range(ho):                       # static unroll, once/image
            xpad_ref[1 + r, 1:wo + 1, :] = x_ref[0, r * wo:(r + 1) * wo, :]

    row0 = pl.multiple_of(m * th, th)
    t = 0
    for kh in range(3):
        for kw in range(3):
            win = xpad_ref[pl.ds(row0 + kh, th), pl.ds(kw, wo), :]
            slab_ref[:, t * cp:(t + 1) * cp] = win.reshape(rows, cp)
            t += 1

    # Residual is appended to the slab and passed through identity rows of the
    # weight matrix -> it rides the same MXU pass (bf16 in, exact f32 acc).
    if res_is_plane:
        res = r_ref[0, pl.ds(1 + row0, th), pl.ds(1, wo), :].reshape(rows, c_res)
    else:
        res = r_ref[0]
    slab_ref[:, 9 * cp:9 * cp + c_res] = res

    acc = jnp.dot(slab_ref[...], w_ref[...], preferred_element_type=jnp.float32)
    out = jnp.maximum(acc + b_ref[...], 0.0)      # bn2(conv2) + residual, relu
    o_ref[...] = out.reshape(o_ref.shape).astype(o_ref.dtype)


# ---------------------------------------------------------------------------
# Wrapper glue (plain JAX): parity planes, BN folding, weight layout
# ---------------------------------------------------------------------------
def _parity_planes(x, stride, pad=1):
    """[N,H,W,C] f32 -> bf16 [N*s*s, Hs, Ws, C] parity planes of the padded
    input; 3x3 tap (kh,kw) reads a contiguous window of plane (kh%s, kw%s)."""
    n, h, w, c = x.shape
    s = stride
    xp = jnp.pad(x, ((0, 0), (pad, pad), (pad, pad), (0, 0)))
    hp, wp = h + 2 * pad, w + 2 * pad
    ho = (hp - 3) // s + 1
    wo = (wp - 3) // s + 1
    hs, ws = -(-hp // s), -(-wp // s)
    if s == 1:
        xpar = xp[:, None]
    else:
        planes = []
        for p in range(s):
            for q in range(s):
                pln = xp[:, p::s, q::s, :]
                planes.append(jnp.pad(
                    pln, ((0, 0), (0, hs - pln.shape[1]),
                          (0, ws - pln.shape[2]), (0, 0))))
        xpar = jnp.stack(planes, axis=1)
    xpar = xpar.reshape(n * s * s, hs, ws, c)
    return xpar.astype(jnp.bfloat16), ho, wo


def _pick_th(ho, wo, target_rows=128):
    """Row-tile height: th*Wo ~ target rows per matmul, th | Ho."""
    th = max(1, min(ho, target_rows // max(1, wo)))
    while ho % th:
        th -= 1
    return th


def bn_fold(gamma, beta, mean, var, eps=1e-5):
    scale = gamma / jnp.sqrt(var + eps)
    return scale, beta - mean * scale


def prep_conv_bn(w_oihw, bn_params, cin_pad, cout_pad):
    """PyTorch conv weight [Cout,Cin,KH,KW] + BN(eval) ->
    (bf16 [KH*KW*cin_pad, cout_pad] with BN scale folded, f32 [1, cout_pad])."""
    cout, cin, kh, kw = w_oihw.shape
    scale, bias = bn_fold(*bn_params)
    w = jnp.transpose(w_oihw, (2, 3, 1, 0)) * scale.reshape(1, 1, 1, cout)
    w = jnp.pad(w, ((0, 0), (0, 0), (0, cin_pad - cin), (0, cout_pad - cout)))
    w = w.reshape(kh * kw * cin_pad, cout_pad)
    b = jnp.pad(bias, (0, cout_pad - cout)).reshape(1, cout_pad)
    return w.astype(jnp.bfloat16), b.astype(jnp.float32)


def prepare_block(params, stride):
    """One-time parameter preprocessing (hoist out of the per-step path)."""
    planes, in_planes = params["conv1_w"].shape[0], params["conv1_w"].shape[1]
    cp = -(-planes // LANE) * LANE
    has_proj = (stride != 1) or (in_planes != planes)
    c_res = cp if has_proj else in_planes

    w1, b1 = prep_conv_bn(params["conv1_w"], params["bn1"], in_planes, cp)
    # conv2 consumes conv1's channel-padded output -> zero weight rows there;
    # identity rows at the tail add the residual inside the same matmul.
    w2, b2 = prep_conv_bn(params["conv2_w"], params["bn2"], cp, cp)
    w2 = jnp.concatenate([w2, jnp.eye(c_res, cp, dtype=jnp.bfloat16)], axis=0)

    prepped = {"stride": stride, "planes": planes, "in_planes": in_planes,
               "cp": cp, "has_proj": has_proj, "c_res": c_res,
               "conv1": (w1, b1), "conv2": (w2, b2)}
    if has_proj:
        prepped["sc"] = prep_conv_bn(params["sc_w"], params["sc_bn"],
                                     in_planes, cp)
    return prepped


# ---------------------------------------------------------------------------
# BasicBlock forward
# ---------------------------------------------------------------------------
def basic_block_forward_nhwc(x_nhwc, prepped):
    s, planes, cp = prepped["stride"], prepped["planes"], prepped["cp"]
    cin, has_proj, c_res = (prepped["in_planes"], prepped["has_proj"],
                            prepped["c_res"])
    n = x_nhwc.shape[0]

    xpar, ho, wo = _parity_planes(x_nhwc, s)
    s2, hs, wsz = s * s, xpar.shape[1], xpar.shape[2]
    th = _pick_th(ho, wo)
    n_mt = ho // th
    rows = th * wo
    sems = pltpu.CompilerParams(dimension_semantics=("parallel", "arbitrary"))

    # ---- conv1 -> bn1 -> relu  (+ fused projection shortcut), bf16 out -----
    w1, b1 = prepped["conv1"]
    in_specs = [
        pl.BlockSpec((s2, hs, wsz, cin), lambda i, m: (i, 0, 0, 0)),
        pl.BlockSpec(w1.shape, lambda i, m: (0, 0)),
        pl.BlockSpec(b1.shape, lambda i, m: (0, 0)),
    ]
    args = [xpar, w1, b1]
    out_block = pl.BlockSpec((1, rows, cp), lambda i, m: (i, m, 0))
    out_sds = jax.ShapeDtypeStruct((n, ho * wo, cp), jnp.bfloat16)
    if has_proj:
        ws_m, bs = prepped["sc"]
        in_specs += [pl.BlockSpec(ws_m.shape, lambda i, m: (0, 0)),
                     pl.BlockSpec(bs.shape, lambda i, m: (0, 0))]
        args += [ws_m, bs]
        out_specs, out_shapes = (out_block, out_block), (out_sds, out_sds)
    else:
        out_specs, out_shapes = out_block, out_sds

    sc_a = 1 % s
    kern1 = functools.partial(
        _conv1_kernel, stride=s, th=th, wo=wo, cin=cin, has_proj=has_proj,
        sc_par=sc_a * s + sc_a, sc_off=1 // s)
    res1 = pl.pallas_call(
        kern1, grid=(n, n_mt), in_specs=in_specs, out_specs=out_specs,
        out_shape=out_shapes,
        scratch_shapes=[pltpu.VMEM((rows, 9 * cin), jnp.bfloat16)],
        compiler_params=sems,
    )(*args)
    out1, short = (res1 if has_proj else (res1, None))

    # ---- conv2 -> bn2 -> (+residual) -> relu --------------------------------
    w2, b2 = prepped["conv2"]
    if has_proj:
        resid, res_is_plane = short, False
        res_spec = pl.BlockSpec((1, rows, cp), lambda i, m: (i, m, 0))
    else:
        # Identity shortcut: reuse the already-materialized padded bf16 input
        # planes (no channel-padded f32 copy of x is ever written to HBM).
        resid, res_is_plane = xpar, True
        res_spec = pl.BlockSpec((1, hs, wsz, cin), lambda i, m: (i, 0, 0, 0))

    kern2 = functools.partial(_conv2_kernel, th=th, ho=ho, wo=wo, cp=cp,
                              c_res=c_res, res_is_plane=res_is_plane)
    out = pl.pallas_call(
        kern2, grid=(n, n_mt),
        in_specs=[pl.BlockSpec((1, ho * wo, cp), lambda i, m: (i, 0, 0)),
                  pl.BlockSpec(w2.shape, lambda i, m: (0, 0)),
                  pl.BlockSpec(b2.shape, lambda i, m: (0, 0)),
                  res_spec],
        out_specs=pl.BlockSpec((1, rows, cp), lambda i, m: (i, m, 0)),
        out_shape=jax.ShapeDtypeStruct((n, ho * wo, cp), jnp.float32),
        scratch_shapes=[pltpu.VMEM((ho + 2, wo + 2, cp), jnp.bfloat16),
                        pltpu.VMEM((rows, 9 * cp + c_res), jnp.bfloat16)],
        compiler_params=sems,
    )(out1, w2, b2, resid)

    # Padded output channels [planes, cp) stay zero; slice them off once.
    return out.reshape(n, ho, wo, cp)[..., :planes]


def basic_block_forward(x_nchw, params, stride):
    # NCHW (PyTorch) boundary.  In a full ResNet keep activations NHWC
    # end-to-end and call prepare_block() once per layer instead.
    prepped = prepare_block(params, stride)
    x = jnp.transpose(x_nchw, (0, 2, 3, 1)).astype(jnp.float32)
    out = basic_block_forward_nhwc(x, prepped)
    return jnp.transpose(out, (0, 3, 1, 2))


# ---------------------------------------------------------------------------
# Pure-JAX references (correctness checks)
# ---------------------------------------------------------------------------
def ref_forward(x_nchw, params, stride, *, mxu_dtype=jnp.bfloat16, eps=1e-5):
    """BasicBlock reference.  With mxu_dtype=bf16 it mirrors the kernel's
    numerics (bf16 MXU inputs, bf16 intermediates/residual, f32 accumulation);
    with f32 it gives the exact module numerics."""
    x = jnp.transpose(x_nchw, (0, 2, 3, 1)).astype(jnp.float32)

    def conv_bn(inp, w_oihw, bn, s, pad):
        scale, bias = bn_fold(*bn, eps=eps)
        w = jnp.transpose(w_oihw, (2, 3, 1, 0)) * scale.reshape(1, 1, 1, -1)
        out = lax.conv_general_dilated(
            inp.astype(mxu_dtype), w.astype(mxu_dtype),
            window_strides=(s, s), padding=[(pad, pad), (pad, pad)],
            dimension_numbers=("NHWC", "HWIO", "NHWC"),
            preferred_element_type=jnp.float32)
        return out + bias.reshape(1, 1, 1, -1)

    out1 = jax.nn.relu(conv_bn(x, params["conv1_w"], params["bn1"], stride, 1))
    if mxu_dtype != jnp.float32:
        out1 = out1.astype(mxu_dtype).astype(jnp.float32)
    out = conv_bn(out1, params["conv2_w"], params["bn2"], 1, 1)
    if stride != 1 or x.shape[-1] != params["conv1_w"].shape[0]:
        short = conv_bn(x, params["sc_w"], params["sc_bn"], stride, 0)
    else:
        short = x
    if mxu_dtype != jnp.float32:
        short = short.astype(mxu_dtype).astype(jnp.float32)
    out = jax.nn.relu(out + short)
    return jnp.transpose(out, (0, 3, 1, 2))


# ---------------------------------------------------------------------------
def make_params(key, in_planes, planes):
    ks = jax.random.split(key, 6)

    def bn_params(k):
        k1, k2, k3, k4 = jax.random.split(k, 4)
        gamma = jax.random.uniform(k1, (planes,), jnp.float32, 0.5, 1.5)
        beta = 0.1 * jax.random.normal(k2, (planes,), jnp.float32)
        mean = 0.1 * jax.random.normal(k3, (planes,), jnp.float32)
        var = jax.random.uniform(k4, (planes,), jnp.float32, 0.5, 1.5)
        return (gamma, beta, mean, var)

    return {
        "conv1_w": 0.2 * jax.random.normal(ks[0], (planes, in_planes, 3, 3),
                                           jnp.float32),
        "conv2_w": 0.2 * jax.random.normal(ks[1], (planes, planes, 3, 3),
                                           jnp.float32),
        "sc_w": 0.2 * jax.random.normal(ks[2], (planes, in_planes, 1, 1),
                                        jnp.float32),
        "bn1": bn_params(ks[3]),
        "bn2": bn_params(ks[4]),
        "sc_bn": bn_params(ks[5]),
    }


if __name__ == "__main__":
    key = jax.random.PRNGKey(0)

    configs = [
        # (N, in_planes, planes, H, W, stride)
        (2, 4, 8, 16, 16, 2),     # projection shortcut (1x1, stride 2)
        (2, 8, 8, 8, 8, 1),       # identity shortcut
        (2, 16, 16, 16, 16, 1),   # identity shortcut, 2 row tiles
        (2, 8, 16, 32, 32, 2),    # projection, stride 2, 2 row tiles
        (2, 4, 8, 16, 16, 1),     # projection shortcut, stride 1
    ]
    for idx, (n, cin, cout, h, w, stride) in enumerate(configs):
        k_x, k_p = jax.random.split(jax.random.fold_in(key, idx))
        x = jax.random.normal(k_x, (n, cin, h, w), jnp.float32)   # NCHW input
        params = make_params(k_p, cin, cout)

        fwd = jax.jit(functools.partial(basic_block_forward, params=params,
                                        stride=stride))
        out = jax.block_until_ready(fwd(x))
        assert out.shape == (n, cout, h // stride, w // stride), out.shape

        # tight check vs a reference that mirrors the kernel's bf16 numerics
        ref_bf16 = jax.block_until_ready(ref_forward(x, params, stride))
        err = float(jnp.max(jnp.abs(out - ref_bf16)))
        assert jnp.allclose(out, ref_bf16, atol=2e-2, rtol=2e-2), (idx, err)

        # loose sanity check vs the exact f32 module numerics
        ref_f32 = ref_forward(x, params, stride, mxu_dtype=jnp.float32)
        err32 = float(jnp.max(jnp.abs(out - ref_f32)))
        assert jnp.allclose(out, ref_f32, atol=1.5e-1, rtol=1.5e-1), (idx, err32)

    print("KERNEL_OK")
</pallas_src>

<mosaic_0001>
module attributes {stable_mosaic.version = 11 : i64} {
  func.func @_conv1_kernel(%arg0: i32, %arg1: i32, %arg2: memref<4x9x9x4xbf16, #tpu.memory_space<vmem>>, %arg3: memref<36x128xbf16, #tpu.memory_space<vmem>>, %arg4: memref<1x128xf32, #tpu.memory_space<vmem>>, %arg5: memref<4x128xbf16, #tpu.memory_space<vmem>>, %arg6: memref<1x128xf32, #tpu.memory_space<vmem>>, %arg7: memref<1x64x128xbf16, #tpu.memory_space<vmem>>, %arg8: memref<1x64x128xbf16, #tpu.memory_space<vmem>>, %arg9: memref<64x36xbf16, #tpu.memory_space<vmem>>) attributes {dimension_semantics = [#tpu.dimension_semantics<parallel>, #tpu.dimension_semantics<arbitrary>], iteration_bounds = array<i64: 2, 1>, scalar_prefetch = 0 : i64, scratch_operands = 1 : i64, tpu.core_type = #tpu.core_type<tc>, window_params = [{transform_indices = @transform_0, window_bounds = array<i64: 4, 9, 9, 4>}, {pipeline_mode = #tpu.pipeline_mode<synchronous>, transform_indices = @transform_1, window_bounds = array<i64: 36, 128>}, {pipeline_mode = #tpu.pipeline_mode<synchronous>, transform_indices = @transform_2, window_bounds = array<i64: 1, 128>}, {pipeline_mode = #tpu.pipeline_mode<synchronous>, transform_indices = @transform_3, window_bounds = array<i64: 4, 128>}, {pipeline_mode = #tpu.pipeline_mode<synchronous>, transform_indices = @transform_4, window_bounds = array<i64: 1, 128>}, {transform_indices = @transform_5, window_bounds = array<i64: 1, 64, 128>}, {transform_indices = @transform_6, window_bounds = array<i64: 1, 64, 128>}]} {
    %c8_i32 = arith.constant 8 : i32
    %0 = arith.muli %arg1, %c8_i32 : i32
    %1 = tpu.assume_multiple %0, 8 : i32
    %c0_i32 = arith.constant 0 : i32
    %2 = arith.addi %1, %c0_i32 : i32
    %c0 = arith.constant 0 : index
    %3 = arith.index_cast %2 : i32 to index
    %c0_0 = arith.constant 0 : index
    %c0_1 = arith.constant 0 : index
    %4 = vector.load %arg2[%c0, %3, %c0_0, %c0_1] : memref<4x9x9x4xbf16, #tpu.memory_space<vmem>>, vector<1x8x8x4xbf16>
    %5 = vector.shape_cast %4 : vector<1x8x8x4xbf16> to vector<8x8x4xbf16>
    %6 = vector.shape_cast %5 : vector<8x8x4xbf16> to vector<64x4xbf16>
    %c0_2 = arith.constant 0 : index
    %c0_3 = arith.constant 0 : index
    %7 = vector.load %arg9[%c0_2, %c0_3] : memref<64x36xbf16, #tpu.memory_space<vmem>>, vector<64x4xbf16>
    tpu.vector_store %arg9[%c0_2, %c0_3], %6 {strides = array<i32>} : memref<64x36xbf16, #tpu.memory_space<vmem>>, vector<64x4xbf16>,
    %c0_i32_4 = arith.constant 0 : i32
    %8 = arith.addi %1, %c0_i32_4 : i32
    %c1 = arith.constant 1 : index
    %9 = arith.index_cast %8 : i32 to index
    %c0_5 = arith.constant 0 : index
    %c0_6 = arith.constant 0 : index
    %10 = vector.load %arg2[%c1, %9, %c0_5, %c0_6] : memref<4x9x9x4xbf16, #tpu.memory_space<vmem>>, vector<1x8x8x4xbf16>
    %11 = vector.shape_cast %10 : vector<1x8x8x4xbf16> to vector<8x8x4xbf16>
    %12 = vector.shape_cast %11 : vector<8x8x4xbf16> to vector<64x4xbf16>
    %c0_7 = arith.constant 0 : index
    %c4 = arith.constant 4 : index
    %13 = vector.load %arg9[%c0_7, %c4] : memref<64x36xbf16, #tpu.memory_space<vmem>>, vector<64x4xbf16>
    tpu.vector_store %arg9[%c0_7, %c4], %12 {strides = array<i32>} : memref<64x36xbf16, #tpu.memory_space<vmem>>, vector<64x4xbf16>,
    %c0_i32_8 = arith.constant 0 : i32
    %14 = arith.addi %1, %c0_i32_8 : i32
    %c0_9 = arith.constant 0 : index
    %15 = arith.index_cast %14 : i32 to index
    %c1_10 = arith.constant 1 : index
    %c0_11 = arith.constant 0 : index
    %16 = vector.load %arg2[%c0_9, %15, %c1_10, %c0_11] : memref<4x9x9x4xbf16, #tpu.memory_space<vmem>>, vector<1x8x8x4xbf16>
    %17 = vector.shape_cast %16 : vector<1x8x8x4xbf16> to vector<8x8x4xbf16>
    %18 = vector.shape_cast %17 : vector<8x8x4xbf16> to vector<64x4xbf16>
    %c0_12 = arith.constant 0 : index
    %c8 = arith.constant 8 : index
    %19 = vector.load %arg9[%c0_12, %c8] : memref<64x36xbf16, #tpu.memory_space<vmem>>, vector<64x4xbf16>
    tpu.vector_store %arg9[%c0_12, %c8], %18 {strides = array<i32>} : memref<64x36xbf16, #tpu.memory_space<vmem>>, vector<64x4xbf16>,
    %c0_i32_13 = arith.constant 0 : i32
    %20 = arith.addi %1, %c0_i32_13 : i32
    %c2 = arith.constant 2 : index
    %21 = arith.index_cast %20 : i32 to index
    %c0_14 = arith.constant 0 : index
    %c0_15 = arith.constant 0 : index
    %22 = vector.load %arg2[%c2, %21, %c0_14, %c0_15] : memref<4x9x9x4xbf16, #tpu.memory_space<vmem>>, vector<1x8x8x4xbf16>
    %23 = vector.shape_cast %22 : vector<1x8x8x4xbf16> to vector<8x8x4xbf16>
    %24 = vector.shape_cast %23 : vector<8x8x4xbf16> to vector<64x4xbf16>
    %c0_16 = arith.constant 0 : index
    %c12 = arith.constant 12 : index
    %25 = vector.load %arg9[%c0_16, %c12] : memref<64x36xbf16, #tpu.memory_space<vmem>>, vector<64x4xbf16>
    tpu.vector_store %arg9[%c0_16, %c12], %24 {strides = array<i32>} : memref<64x36xbf16, #tpu.memory_space<vmem>>, vector<64x4xbf16>,
    %c0_i32_17 = arith.constant 0 : i32
    %26 = arith.addi %1, %c0_i32_17 : i32
    %c3 = arith.constant 3 : index
    %27 = arith.index_cast %26 : i32 to index
    %c0_18 = arith.constant 0 : index
    %c0_19 = arith.constant 0 : index
    %28 = vector.load %arg2[%c3, %27, %c0_18, %c0_19] : memref<4x9x9x4xbf16, #tpu.memory_space<vmem>>, vector<1x8x8x4xbf16>
    %29 = vector.shape_cast %28 : vector<1x8x8x4xbf16> to vector<8x8x4xbf16>
    %30 = vector.shape_cast %29 : vector<8x8x4xbf16> to vector<64x4xbf16>
    %c0_20 = arith.constant 0 : index
    %c16 = arith.constant 16 : index
    %31 = vector.load %arg9[%c0_20, %c16] : memref<64x36xbf16, #tpu.memory_space<vmem>>, vector<64x4xbf16>
    tpu.vector_store %arg9[%c0_20, %c16], %30 {strides = array<i32>} : memref<64x36xbf16, #tpu.memory_space<vmem>>, vector<64x4xbf16>,
    %c0_i32_21 = arith.constant 0 : i32
    %32 = arith.addi %1, %c0_i32_21 : i32
    %c2_22 = arith.constant 2 : index
    %33 = arith.index_cast %32 : i32 to index
    %c1_23 = arith.constant 1 : index
    %c0_24 = arith.constant 0 : index
    %34 = vector.load %arg2[%c2_22, %33, %c1_23, %c0_24] : memref<4x9x9x4xbf16, #tpu.memory_space<vmem>>, vector<1x8x8x4xbf16>
    %35 = vector.shape_cast %34 : vector<1x8x8x4xbf16> to vector<8x8x4xbf16>
    %36 = vector.shape_cast %35 : vector<8x8x4xbf16> to vector<64x4xbf16>
    %c0_25 = arith.constant 0 : index
    %c20 = arith.constant 20 : index
    %37 = vector.load %arg9[%c0_25, %c20] : memref<64x36xbf16, #tpu.memory_space<vmem>>, vector<64x4xbf16>
    tpu.vector_store %arg9[%c0_25, %c20], %36 {strides = array<i32>} : memref<64x36xbf16, #tpu.memory_space<vmem>>, vector<64x4xbf16>,
    %c1_i32 = arith.constant 1 : i32
    %38 = arith.addi %1, %c1_i32 : i32
    %c0_26 = arith.constant 0 : index
    %39 = arith.index_cast %38 : i32 to index
    %c0_27 = arith.constant 0 : index
    %c0_28 = arith.constant 0 : index
    %40 = vector.load %arg2[%c0_26, %39, %c0_27, %c0_28] : memref<4x9x9x4xbf16, #tpu.memory_space<vmem>>, vector<1x8x8x4xbf16>
    %41 = vector.shape_cast %40 : vector<1x8x8x4xbf16> to vector<8x8x4xbf16>
    %42 = vector.shape_cast %41 : vector<8x8x4xbf16> to vector<64x4xbf16>
    %c0_29 = arith.constant 0 : index
    %c24 = arith.constant 24 : index
    %43 = vector.load %arg9[%c0_29, %c24] : memref<64x36xbf16, #tpu.memory_space<vmem>>, vector<64x4xbf16>
    tpu.vector_store %arg9[%c0_29, %c24], %42 {strides = array<i32>} : memref<64x36xbf16, #tpu.memory_space<vmem>>, vector<64x4xbf16>,
    %c1_i32_30 = arith.constant 1 : i32
    %44 = arith.addi %1, %c1_i32_30 : i32
    %c1_31 = arith.constant 1 : index
    %45 = arith.index_cast %44 : i32 to index
    %c0_32 = arith.constant 0 : index
    %c0_33 = arith.constant 0 : index
    %46 = vector.load %arg2[%c1_31, %45, %c0_32, %c0_33] : memref<4x9x9x4xbf16, #tpu.memory_space<vmem>>, vector<1x8x8x4xbf16>
    %47 = vector.shape_cast %46 : vector<1x8x8x4xbf16> to vector<8x8x4xbf16>
    %48 = vector.shape_cast %47 : vector<8x8x4xbf16> to vector<64x4xbf16>
    %c0_34 = arith.constant 0 : index
    %c28 = arith.constant 28 : index
    %49 = vector.load %arg9[%c0_34, %c28] : memref<64x36xbf16, #tpu.memory_space<vmem>>, vector<64x4xbf16>
    tpu.vector_store %arg9[%c0_34, %c28], %48 {strides = array<i32>} : memref<64x36xbf16, #tpu.memory_space<vmem>>, vector<64x4xbf16>,
    %c1_i32_35 = arith.constant 1 : i32
    %50 = arith.addi %1, %c1_i32_35 : i32
    %c0_36 = arith.constant 0 : index
    %51 = arith.index_cast %50 : i32 to index
    %c1_37 = arith.constant 1 : index
    %c0_38 = arith.constant 0 : index
    %52 = vector.load %arg2[%c0_36, %51, %c1_37, %c0_38] : memref<4x9x9x4xbf16, #tpu.memory_space<vmem>>, vector<1x8x8x4xbf16>
    %53 = vector.shape_cast %52 : vector<1x8x8x4xbf16> to vector<8x8x4xbf16>
    %54 = vector.shape_cast %53 : vector<8x8x4xbf16> to vector<64x4xbf16>
    %c0_39 = arith.constant 0 : index
    %c32 = arith.constant 32 : index
    %55 = vector.load %arg9[%c0_39, %c32] : memref<64x36xbf16, #tpu.memory_space<vmem>>, vector<64x4xbf16>
    tpu.vector_store %arg9[%c0_39, %c32], %54 {strides = array<i32>} : memref<64x36xbf16, #tpu.memory_space<vmem>>, vector<64x4xbf16>,
    %c0_40 = arith.constant 0 : index
    %c0_41 = arith.constant 0 : index
    %56 = vector.load %arg9[%c0_40, %c0_41] : memref<64x36xbf16, #tpu.memory_space<vmem>>, vector<64x36xbf16>
    %c0_42 = arith.constant 0 : index
    %c0_43 = arith.constant 0 : index
    %57 = vector.load %arg3[%c0_42, %c0_43] : memref<36x128xbf16, #tpu.memory_space<vmem>>, vector<36x128xbf16>
    %cst = arith.constant dense<0.000000e+00> : vector<64x128xf32>
    %58 = tpu.matmul %56, %57, %cst {dimension_numbers = #tpu.dot_dimension_numbers<[1], [0], [0], [1], [0, 0, 1, 1], [], []>} : vector<64x36xbf16>, vector<36x128xbf16>, vector<64x128xf32> -> vector<64x128xf32>
    %c0_44 = arith.constant 0 : index
    %c0_45 = arith.constant 0 : index
    %59 = vector.load %arg4[%c0_44, %c0_45] : memref<1x128xf32, #tpu.memory_space<vmem>>, vector<1x128xf32>
    %60 = vector.broadcast %59 : vector<1x128xf32> to vector<64x128xf32>
    %61 = arith.addf %58, %60 : vector<64x128xf32>
    %cst_46 = arith.constant 0.000000e+00 : f32
    %62 = vector.broadcast %cst_46 : f32 to vector<64x128xf32>
    %63 = arith.maximumf %61, %62 : vector<64x128xf32>
    %64 = vector.shape_cast %63 : vector<64x128xf32> to vector<1x64x128xf32>
    %65 = arith.truncf %64 : vector<1x64x128xf32> to vector<1x64x128xbf16>
    %c0_47 = arith.constant 0 : index
    %c0_48 = arith.constant 0 : index
    %c0_49 = arith.constant 0 : index
    %66 = vector.load %arg7[%c0_47, %c0_48, %c0_49] : memref<1x64x128xbf16, #tpu.memory_space<vmem>>, vector<1x64x128xbf16>
    tpu.vector_store %arg7[%c0_47, %c0_48, %c0_49], %65 {strides = array<i32>} : memref<1x64x128xbf16, #tpu.memory_space<vmem>>, vector<1x64x128xbf16>,
    %c0_i32_50 = arith.constant 0 : i32
    %67 = arith.addi %1, %c0_i32_50 : i32
    %c3_51 = arith.constant 3 : index
    %68 = arith.index_cast %67 : i32 to index
    %c0_52 = arith.constant 0 : index
    %c0_53 = arith.constant 0 : index
    %69 = vector.load %arg2[%c3_51, %68, %c0_52, %c0_53] : memref<4x9x9x4xbf16, #tpu.memory_space<vmem>>, vector<1x8x8x4xbf16>
    %70 = vector.shape_cast %69 : vector<1x8x8x4xbf16> to vector<8x8x4xbf16>
    %71 = vector.shape_cast %70 : vector<8x8x4xbf16> to vector<64x4xbf16>
    %c0_54 = arith.constant 0 : index
    %c0_55 = arith.constant 0 : index
    %72 = vector.load %arg5[%c0_54, %c0_55] : memref<4x128xbf16, #tpu.memory_space<vmem>>, vector<4x128xbf16>
    %cst_56 = arith.constant dense<0.000000e+00> : vector<64x128xf32>
    %73 = tpu.matmul %71, %72, %cst_56 {dimension_numbers = #tpu.dot_dimension_numbers<[1], [0], [0], [1], [0, 0, 1, 1], [], []>} : vector<64x4xbf16>, vector<4x128xbf16>, vector<64x128xf32> -> vector<64x128xf32>
    %c0_57 = arith.constant 0 : index
    %c0_58 = arith.constant 0 : index
    %74 = vector.load %arg6[%c0_57, %c0_58] : memref<1x128xf32, #tpu.memory_space<vmem>>, vector<1x128xf32>
    %75 = vector.broadcast %74 : vector<1x128xf32> to vector<64x128xf32>
    %76 = arith.addf %73, %75 : vector<64x128xf32>
    %77 = vector.shape_cast %76 : vector<64x128xf32> to vector<1x64x128xf32>
    %78 = arith.truncf %77 : vector<1x64x128xf32> to vector<1x64x128xbf16>
    %c0_59 = arith.constant 0 : index
    %c0_60 = arith.constant 0 : index
    %c0_61 = arith.constant 0 : index
    %79 = vector.load %arg8[%c0_59, %c0_60, %c0_61] : memref<1x64x128xbf16, #tpu.memory_space<vmem>>, vector<1x64x128xbf16>
    tpu.vector_store %arg8[%c0_59, %c0_60, %c0_61], %78 {strides = array<i32>} : memref<1x64x128xbf16, #tpu.memory_space<vmem>>, vector<1x64x128xbf16>,
    return
  }
  func.func @transform_0(%arg0: i32, %arg1: i32) -> (i32, i32, i32, i32) {
    %c0_i32 = arith.constant 0 : i32
    %c0_i32_0 = arith.constant 0 : i32
    %c0_i32_1 = arith.constant 0 : i32
    %c0_i32_2 = arith.constant 0 : i32
    return %arg0, %c0_i32, %c0_i32_0, %c0_i32_1 : i32, i32, i32, i32
  }
  func.func @transform_1(%arg0: i32, %arg1: i32) -> (i32, i32) {
    %c0_i32 = arith.constant 0 : i32
    %c0_i32_0 = arith.constant 0 : i32
    %c0_i32_1 = arith.constant 0 : i32
    return %c0_i32, %c0_i32_0 : i32, i32
  }
  func.func @transform_2(%arg0: i32, %arg1: i32) -> (i32, i32) {
    %c0_i32 = arith.constant 0 : i32
    %c0_i32_0 = arith.constant 0 : i32
    %c0_i32_1 = arith.constant 0 : i32
    return %c0_i32, %c0_i32_0 : i32, i32
  }
  func.func @transform_3(%arg0: i32, %arg1: i32) -> (i32, i32) {
    %c0_i32 = arith.constant 0 : i32
    %c0_i32_0 = arith.constant 0 : i32
    %c0_i32_1 = arith.constant 0 : i32
    return %c0_i32, %c0_i32_0 : i32, i32
  }
  func.func @transform_4(%arg0: i32, %arg1: i32) -> (i32, i32) {
    %c0_i32 = arith.constant 0 : i32
    %c0_i32_0 = arith.constant 0 : i32
    %c0_i32_1 = arith.constant 0 : i32
    return %c0_i32, %c0_i32_0 : i32, i32
  }
  func.func @transform_5(%arg0: i32, %arg1: i32) -> (i32, i32, i32) {
    %c0_i32 = arith.constant 0 : i32
    %c0_i32_0 = arith.constant 0 : i32
    return %arg0, %arg1, %c0_i32 : i32, i32, i32
  }
  func.func @transform_6(%arg0: i32, %arg1: i32) -> (i32, i32, i32) {
    %c0_i32 = arith.constant 0 : i32
    %c0_i32_0 = arith.constant 0 : i32
    return %arg0, %arg1, %c0_i32 : i32, i32, i32
  }
}

module attributes {stable_mosaic.version = 11 : i64} {
  func.func @_conv2_kernel(%arg0: i32, %arg1: i32, %arg2: memref<1x64x128xbf16, #tpu.memory_space<vmem>>, %arg3: memref<1280x128xbf16, #tpu.memory_space<vmem>>, %arg4: memref<1x128xf32, #tpu.memory_space<vmem>>, %arg5: memref<1x64x128xbf16, #tpu.memory_space<vmem>>, %arg6: memref<1x64x128xf32, #tpu.memory_space<vmem>>, %arg7: memref<10x10x128xbf16, #tpu.memory_space<vmem>>, %arg8: memref<64x1280xbf16, #tpu.memory_space<vmem>>) attributes {dimension_semantics = [#tpu.dimension_semantics<parallel>, #tpu.dimension_semantics<arbitrary>], iteration_bounds = array<i64: 2, 1>, scalar_prefetch = 0 : i64, scratch_operands = 2 : i64, tpu.core_type = #tpu.core_type<tc>, window_params = [{transform_indices = @transform_0, window_bounds = array<i64: 1, 64, 128>}, {pipeline_mode = #tpu.pipeline_mode<synchronous>, transform_indices = @transform_1, window_bounds = array<i64: 1280, 128>}, {pipeline_mode = #tpu.pipeline_mode<synchronous>, transform_indices = @transform_2, window_bounds = array<i64: 1, 128>}, {transform_indices = @transform_3, window_bounds = array<i64: 1, 64, 128>}, {transform_indices = @transform_4, window_bounds = array<i64: 1, 64, 128>}]} {
    %c0_i32 = arith.constant 0 : i32
    %0 = arith.cmpi eq, %arg1, %c0_i32 : i32
    %1 = arith.extui %0 : i1 to i32
    %c0_i32_0 = arith.constant 0 : i32
    %2 = arith.cmpi ne, %1, %c0_i32_0 : i32
    scf.if %2 {
      %cst_47 = arith.constant 0.000000e+00 : bf16
      %63 = vector.broadcast %cst_47 : bf16 to vector<10x10x128xbf16>
      %c0_48 = arith.constant 0 : index
      %c0_49 = arith.constant 0 : index
      %c0_50 = arith.constant 0 : index
      %64 = vector.load %arg7[%c0_48, %c0_49, %c0_50] : memref<10x10x128xbf16, #tpu.memory_space<vmem>>, vector<10x10x128xbf16>
      tpu.vector_store %arg7[%c0_48, %c0_49, %c0_50], %63 {strides = array<i32>} : memref<10x10x128xbf16, #tpu.memory_space<vmem>>, vector<10x10x128xbf16>,
      %c0_51 = arith.constant 0 : index
      %c0_52 = arith.constant 0 : index
      %c0_53 = arith.constant 0 : index
      %65 = vector.load %arg2[%c0_51, %c0_52, %c0_53] : memref<1x64x128xbf16, #tpu.memory_space<vmem>>, vector<1x8x128xbf16>
      %66 = vector.shape_cast %65 : vector<1x8x128xbf16> to vector<8x128xbf16>
      %c1_54 = arith.constant 1 : index
      %c1_55 = arith.constant 1 : index
      %c0_56 = arith.constant 0 : index
      %67 = vector.load %arg7[%c1_54, %c1_55, %c0_56] : memref<10x10x128xbf16, #tpu.memory_space<vmem>>, vector<1x8x128xbf16>
      %68 = vector.shape_cast %67 : vector<1x8x128xbf16> to vector<8x128xbf16>
      %69 = vector.shape_cast %66 : vector<8x128xbf16> to vector<1x8x128xbf16>
      tpu.vector_store %arg7[%c1_54, %c1_55, %c0_56], %69 {strides = array<i32>} : memref<10x10x128xbf16, #tpu.memory_space<vmem>>, vector<1x8x128xbf16>,
      %c0_57 = arith.constant 0 : index
      %c8 = arith.constant 8 : index
      %c0_58 = arith.constant 0 : index
      %70 = vector.load %arg2[%c0_57, %c8, %c0_58] : memref<1x64x128xbf16, #tpu.memory_space<vmem>>, vector<1x8x128xbf16>
      %71 = vector.shape_cast %70 : vector<1x8x128xbf16> to vector<8x128xbf16>
      %c2_59 = arith.constant 2 : index
      %c1_60 = arith.constant 1 : index
      %c0_61 = arith.constant 0 : index
      %72 = vector.load %arg7[%c2_59, %c1_60, %c0_61] : memref<10x10x128xbf16, #tpu.memory_space<vmem>>, vector<1x8x128xbf16>
      %73 = vector.shape_cast %72 : vector<1x8x128xbf16> to vector<8x128xbf16>
      %74 = vector.shape_cast %71 : vector<8x128xbf16> to vector<1x8x128xbf16>
      tpu.vector_store %arg7[%c2_59, %c1_60, %c0_61], %74 {strides = array<i32>} : memref<10x10x128xbf16, #tpu.memory_space<vmem>>, vector<1x8x128xbf16>,
      %c0_62 = arith.constant 0 : index
      %c16 = arith.constant 16 : index
      %c0_63 = arith.constant 0 : index
      %75 = vector.load %arg2[%c0_62, %c16, %c0_63] : memref<1x64x128xbf16, #tpu.memory_space<vmem>>, vector<1x8x128xbf16>
      %76 = vector.shape_cast %75 : vector<1x8x128xbf16> to vector<8x128xbf16>
      %c3 = arith.constant 3 : index
      %c1_64 = arith.constant 1 : index
      %c0_65 = arith.constant 0 : index
      %77 = vector.load %arg7[%c3, %c1_64, %c0_65] : memref<10x10x128xbf16, #tpu.memory_space<vmem>>, vector<1x8x128xbf16>
      %78 = vector.shape_cast %77 : vector<1x8x128xbf16> to vector<8x128xbf16>
      %79 = vector.shape_cast %76 : vector<8x128xbf16> to vector<1x8x128xbf16>
      tpu.vector_store %arg7[%c3, %c1_64, %c0_65], %79 {strides = array<i32>} : memref<10x10x128xbf16, #tpu.memory_space<vmem>>, vector<1x8x128xbf16>,
      %c0_66 = arith.constant 0 : index
      %c24 = arith.constant 24 : index
      %c0_67 = arith.constant 0 : index
      %80 = vector.load %arg2[%c0_66, %c24, %c0_67] : memref<1x64x128xbf16, #tpu.memory_space<vmem>>, vector<1x8x128xbf16>
      %81 = vector.shape_cast %80 : vector<1x8x128xbf16> to vector<8x128xbf16>
      %c4 = arith.constant 4 : index
      %c1_68 = arith.constant 1 : index
      %c0_69 = arith.constant 0 : index
      %82 = vector.load %arg7[%c4, %c1_68, %c0_69] : memref<10x10x128xbf16, #tpu.memory_space<vmem>>, vector<1x8x128xbf16>
      %83 = vector.shape_cast %82 : vector<1x8x128xbf16> to vector<8x128xbf16>
      %84 = vector.shape_cast %81 : vector<8x128xbf16> to vector<1x8x128xbf16>
      tpu.vector_store %arg7[%c4, %c1_68, %c0_69], %84 {strides = array<i32>} : memref<10x10x128xbf16, #tpu.memory_space<vmem>>, vector<1x8x128xbf16>,
      %c0_70 = arith.constant 0 : index
      %c32 = arith.constant 32 : index
      %c0_71 = arith.constant 0 : index
      %85 = vector.load %arg2[%c0_70, %c32, %c0_71] : memref<1x64x128xbf16, #tpu.memory_space<vmem>>, vector<1x8x128xbf16>
      %86 = vector.shape_cast %85 : vector<1x8x128xbf16> to vector<8x128xbf16>
      %c5 = arith.constant 5 : index
      %c1_72 = arith.constant 1 : index
      %c0_73 = arith.constant 0 : index
      %87 = vector.load %arg7[%c5, %c1_72, %c0_73] : memref<10x10x128xbf16, #tpu.memory_space<vmem>>, vector<1x8x128xbf16>
      %88 = vector.shape_cast %87 : vector<1x8x128xbf16> to vector<8x128xbf16>
      %89 = vector.shape_cast %86 : vector<8x128xbf16> to vector<1x8x128xbf16>
      tpu.vector_store %arg7[%c5, %c1_72, %c0_73], %89 {strides = array<i32>} : memref<10x10x128xbf16, #tpu.memory_space<vmem>>, vector<1x8x128xbf16>,
      %c0_74 = arith.constant 0 : index
      %c40 = arith.constant 40 : index
      %c0_75 = arith.constant 0 : index
      %90 = vector.load %arg2[%c0_74, %c40, %c0_75] : memref<1x64x128xbf16, #tpu.memory_space<vmem>>, vector<1x8x128xbf16>
      %91 = vector.shape_cast %90 : vector<1x8x128xbf16> to vector<8x128xbf16>
      %c6 = arith.constant 6 : index
      %c1_76 = arith.constant 1 : index
      %c0_77 = arith.constant 0 : index
      %92 = vector.load %arg7[%c6, %c1_76, %c0_77] : memref<10x10x128xbf16, #tpu.memory_space<vmem>>, vector<1x8x128xbf16>
      %93 = vector.shape_cast %92 : vector<1x8x128xbf16> to vector<8x128xbf16>
      %94 = vector.shape_cast %91 : vector<8x128xbf16> to vector<1x8x128xbf16>
      tpu.vector_store %arg7[%c6, %c1_76, %c0_77], %94 {strides = array<i32>} : memref<10x10x128xbf16, #tpu.memory_space<vmem>>, vector<1x8x128xbf16>,
      %c0_78 = arith.constant 0 : index
      %c48 = arith.constant 48 : index
      %c0_79 = arith.constant 0 : index
      %95 = vector.load %arg2[%c0_78, %c48, %c0_79] : memref<1x64x128xbf16, #tpu.memory_space<vmem>>, vector<1x8x128xbf16>
      %96 = vector.shape_cast %95 : vector<1x8x128xbf16> to vector<8x128xbf16>
      %c7 = arith.constant 7 : index
      %c1_80 = arith.constant 1 : index
      %c0_81 = arith.constant 0 : index
      %97 = vector.load %arg7[%c7, %c1_80, %c0_81] : memref<10x10x128xbf16, #tpu.memory_space<vmem>>, vector<1x8x128xbf16>
      %98 = vector.shape_cast %97 : vector<1x8x128xbf16> to vector<8x128xbf16>
      %99 = vector.shape_cast %96 : vector<8x128xbf16> to vector<1x8x128xbf16>
      tpu.vector_store %arg7[%c7, %c1_80, %c0_81], %99 {strides = array<i32>} : memref<10x10x128xbf16, #tpu.memory_space<vmem>>, vector<1x8x128xbf16>,
      %c0_82 = arith.constant 0 : index
      %c56 = arith.constant 56 : index
      %c0_83 = arith.constant 0 : index
      %100 = vector.load %arg2[%c0_82, %c56, %c0_83] : memref<1x64x128xbf16, #tpu.memory_space<vmem>>, vector<1x8x128xbf16>
      %101 = vector.shape_cast %100 : vector<1x8x128xbf16> to vector<8x128xbf16>
      %c8_84 = arith.constant 8 : index
      %c1_85 = arith.constant 1 : index
      %c0_86 = arith.constant 0 : index
      %102 = vector.load %arg7[%c8_84, %c1_85, %c0_86] : memref<10x10x128xbf16, #tpu.memory_space<vmem>>, vector<1x8x128xbf16>
      %103 = vector.shape_cast %102 : vector<1x8x128xbf16> to vector<8x128xbf16>
      %104 = vector.shape_cast %101 : vector<8x128xbf16> to vector<1x8x128xbf16>
      tpu.vector_store %arg7[%c8_84, %c1_85, %c0_86], %104 {strides = array<i32>} : memref<10x10x128xbf16, #tpu.memory_space<vmem>>, vector<1x8x128xbf16>,
    } else {
    }
    %c8_i32 = arith.constant 8 : i32
    %3 = arith.muli %arg1, %c8_i32 : i32
    %4 = tpu.assume_multiple %3, 8 : i32
    %c0_i32_1 = arith.constant 0 : i32
    %5 = arith.addi %4, %c0_i32_1 : i32
    %6 = arith.index_cast %5 : i32 to index
    %c0 = arith.constant 0 : index
    %c0_2 = arith.constant 0 : index
    %7 = vector.load %arg7[%6, %c0, %c0_2] : memref<10x10x128xbf16, #tpu.memory_space<vmem>>, vector<8x8x128xbf16>
    %8 = vector.shape_cast %7 : vector<8x8x128xbf16> to vector<64x128xbf16>
    %c0_3 = arith.constant 0 : index
    %c0_4 = arith.constant 0 : index
    %9 = vector.load %arg8[%c0_3, %c0_4] : memref<64x1280xbf16, #tpu.memory_space<vmem>>, vector<64x128xbf16>
    tpu.vector_store %arg8[%c0_3, %c0_4], %8 {strides = array<i32>} : memref<64x1280xbf16, #tpu.memory_space<vmem>>, vector<64x128xbf16>,
    %c0_i32_5 = arith.constant 0 : i32
    %10 = arith.addi %4, %c0_i32_5 : i32
    %11 = arith.index_cast %10 : i32 to index
    %c1 = arith.constant 1 : index
    %c0_6 = arith.constant 0 : index
    %12 = vector.load %arg7[%11, %c1, %c0_6] : memref<10x10x128xbf16, #tpu.memory_space<vmem>>, vector<8x8x128xbf16>
    %13 = vector.shape_cast %12 : vector<8x8x128xbf16> to vector<64x128xbf16>
    %c0_7 = arith.constant 0 : index
    %c128 = arith.constant 128 : index
    %14 = vector.load %arg8[%c0_7, %c128] : memref<64x1280xbf16, #tpu.memory_space<vmem>>, vector<64x128xbf16>
    tpu.vector_store %arg8[%c0_7, %c128], %13 {strides = array<i32>} : memref<64x1280xbf16, #tpu.memory_space<vmem>>, vector<64x128xbf16>,
    %c0_i32_8 = arith.constant 0 : i32
    %15 = arith.addi %4, %c0_i32_8 : i32
    %16 = arith.index_cast %15 : i32 to index
    %c2 = arith.constant 2 : index
    %c0_9 = arith.constant 0 : index
    %17 = vector.load %arg7[%16, %c2, %c0_9] : memref<10x10x128xbf16, #tpu.memory_space<vmem>>, vector<8x8x128xbf16>
    %18 = vector.shape_cast %17 : vector<8x8x128xbf16> to vector<64x128xbf16>
    %c0_10 = arith.constant 0 : index
    %c256 = arith.constant 256 : index
    %19 = vector.load %arg8[%c0_10, %c256] : memref<64x1280xbf16, #tpu.memory_space<vmem>>, vector<64x128xbf16>
    tpu.vector_store %arg8[%c0_10, %c256], %18 {strides = array<i32>} : memref<64x1280xbf16, #tpu.memory_space<vmem>>, vector<64x128xbf16>,
    %c1_i32 = arith.constant 1 : i32
    %20 = arith.addi %4, %c1_i32 : i32
    %21 = arith.index_cast %20 : i32 to index
    %c0_11 = arith.constant 0 : index
    %c0_12 = arith.constant 0 : index
    %22 = vector.load %arg7[%21, %c0_11, %c0_12] : memref<10x10x128xbf16, #tpu.memory_space<vmem>>, vector<8x8x128xbf16>
    %23 = vector.shape_cast %22 : vector<8x8x128xbf16> to vector<64x128xbf16>
    %c0_13 = arith.constant 0 : index
    %c384 = arith.constant 384 : index
    %24 = vector.load %arg8[%c0_13, %c384] : memref<64x1280xbf16, #tpu.memory_space<vmem>>, vector<64x128xbf16>
    tpu.vector_store %arg8[%c0_13, %c384], %23 {strides = array<i32>} : memref<64x1280xbf16, #tpu.memory_space<vmem>>, vector<64x128xbf16>,
    %c1_i32_14 = arith.constant 1 : i32
    %25 = arith.addi %4, %c1_i32_14 : i32
    %26 = arith.index_cast %25 : i32 to index
    %c1_15 = arith.constant 1 : index
    %c0_16 = arith.constant 0 : index
    %27 = vector.load %arg7[%26, %c1_15, %c0_16] : memref<10x10x128xbf16, #tpu.memory_space<vmem>>, vector<8x8x128xbf16>
    %28 = vector.shape_cast %27 : vector<8x8x128xbf16> to vector<64x128xbf16>
    %c0_17 = arith.constant 0 : index
    %c512 = arith.constant 512 : index
    %29 = vector.load %arg8[%c0_17, %c512] : memref<64x1280xbf16, #tpu.memory_space<vmem>>, vector<64x128xbf16>
    tpu.vector_store %arg8[%c0_17, %c512], %28 {strides = array<i32>} : memref<64x1280xbf16, #tpu.memory_space<vmem>>, vector<64x128xbf16>,
    %c1_i32_18 = arith.constant 1 : i32
    %30 = arith.addi %4, %c1_i32_18 : i32
    %31 = arith.index_cast %30 : i32 to index
    %c2_19 = arith.constant 2 : index
    %c0_20 = arith.constant 0 : index
    %32 = vector.load %arg7[%31, %c2_19, %c0_20] : memref<10x10x128xbf16, #tpu.memory_space<vmem>>, vector<8x8x128xbf16>
    %33 = vector.shape_cast %32 : vector<8x8x128xbf16> to vector<64x128xbf16>
    %c0_21 = arith.constant 0 : index
    %c640 = arith.constant 640 : index
    %34 = vector.load %arg8[%c0_21, %c640] : memref<64x1280xbf16, #tpu.memory_space<vmem>>, vector<64x128xbf16>
    tpu.vector_store %arg8[%c0_21, %c640], %33 {strides = array<i32>} : memref<64x1280xbf16, #tpu.memory_space<vmem>>, vector<64x128xbf16>,
    %c2_i32 = arith.constant 2 : i32
    %35 = arith.addi %4, %c2_i32 : i32
    %36 = arith.index_cast %35 : i32 to index
    %c0_22 = arith.constant 0 : index
    %c0_23 = arith.constant 0 : index
    %37 = vector.load %arg7[%36, %c0_22, %c0_23] : memref<10x10x128xbf16, #tpu.memory_space<vmem>>, vector<8x8x128xbf16>
    %38 = vector.shape_cast %37 : vector<8x8x128xbf16> to vector<64x128xbf16>
    %c0_24 = arith.constant 0 : index
    %c768 = arith.constant 768 : index
    %39 = vector.load %arg8[%c0_24, %c768] : memref<64x1280xbf16, #tpu.memory_space<vmem>>, vector<64x128xbf16>
    tpu.vector_store %arg8[%c0_24, %c768], %38 {strides = array<i32>} : memref<64x1280xbf16, #tpu.memory_space<vmem>>, vector<64x128xbf16>,
    %c2_i32_25 = arith.constant 2 : i32
    %40 = arith.addi %4, %c2_i32_25 : i32
    %41 = arith.index_cast %40 : i32 to index
    %c1_26 = arith.constant 1 : index
    %c0_27 = arith.constant 0 : index
    %42 = vector.load %arg7[%41, %c1_26, %c0_27] : memref<10x10x128xbf16, #tpu.memory_space<vmem>>, vector<8x8x128xbf16>
    %43 = vector.shape_cast %42 : vector<8x8x128xbf16> to vector<64x128xbf16>
    %c0_28 = arith.constant 0 : index
    %c896 = arith.constant 896 : index
    %44 = vector.load %arg8[%c0_28, %c896] : memref<64x1280xbf16, #tpu.memory_space<vmem>>, vector<64x128xbf16>
    tpu.vector_store %arg8[%c0_28, %c896], %43 {strides = array<i32>} : memref<64x1280xbf16, #tpu.memory_space<vmem>>, vector<64x128xbf16>,
    %c2_i32_29 = arith.constant 2 : i32
    %45 = arith.addi %4, %c2_i32_29 : i32
    %46 = arith.index_cast %45 : i32 to index
    %c2_30 = arith.constant 2 : index
    %c0_31 = arith.constant 0 : index
    %47 = vector.load %arg7[%46, %c2_30, %c0_31] : memref<10x10x128xbf16, #tpu.memory_space<vmem>>, vector<8x8x128xbf16>
    %48 = vector.shape_cast %47 : vector<8x8x128xbf16> to vector<64x128xbf16>
    %c0_32 = arith.constant 0 : index
    %c1024 = arith.constant 1024 : index
    %49 = vector.load %arg8[%c0_32, %c1024] : memref<64x1280xbf16, #tpu.memory_space<vmem>>, vector<64x128xbf16>
    tpu.vector_store %arg8[%c0_32, %c1024], %48 {strides = array<i32>} : memref<64x1280xbf16, #tpu.memory_space<vmem>>, vector<64x128xbf16>,
    %c0_33 = arith.constant 0 : index
    %c0_34 = arith.constant 0 : index
    %c0_35 = arith.constant 0 : index
    %50 = vector.load %arg5[%c0_33, %c0_34, %c0_35] : memref<1x64x128xbf16, #tpu.memory_space<vmem>>, vector<1x64x128xbf16>
    %51 = vector.shape_cast %50 : vector<1x64x128xbf16> to vector<64x128xbf16>
    %c0_36 = arith.constant 0 : index
    %c1152 = arith.constant 1152 : index
    %52 = vector.load %arg8[%c0_36, %c1152] : memref<64x1280xbf16, #tpu.memory_space<vmem>>, vector<64x128xbf16>
    tpu.vector_store %arg8[%c0_36, %c1152], %51 {strides = array<i32>} : memref<64x1280xbf16, #tpu.memory_space<vmem>>, vector<64x128xbf16>,
    %c0_37 = arith.constant 0 : index
    %c0_38 = arith.constant 0 : index
    %53 = vector.load %arg8[%c0_37, %c0_38] : memref<64x1280xbf16, #tpu.memory_space<vmem>>, vector<64x1280xbf16>
    %c0_39 = arith.constant 0 : index
    %c0_40 = arith.constant 0 : index
    %54 = vector.load %arg3[%c0_39, %c0_40] : memref<1280x128xbf16, #tpu.memory_space<vmem>>, vector<1280x128xbf16>
    %cst = arith.constant dense<0.000000e+00> : vector<64x128xf32>
    %55 = tpu.matmul %53, %54, %cst {dimension_numbers = #tpu.dot_dimension_numbers<[1], [0], [0], [1], [0, 0, 1, 1], [], []>} : vector<64x1280xbf16>, vector<1280x128xbf16>, vector<64x128xf32> -> vector<64x128xf32>
    %c0_41 = arith.constant 0 : index
    %c0_42 = arith.constant 0 : index
    %56 = vector.load %arg4[%c0_41, %c0_42] : memref<1x128xf32, #tpu.memory_space<vmem>>, vector<1x128xf32>
    %57 = vector.broadcast %56 : vector<1x128xf32> to vector<64x128xf32>
    %58 = arith.addf %55, %57 : vector<64x128xf32>
    %cst_43 = arith.constant 0.000000e+00 : f32
    %59 = vector.broadcast %cst_43 : f32 to vector<64x128xf32>
    %60 = arith.maximumf %58, %59 : vector<64x128xf32>
    %61 = vector.shape_cast %60 : vector<64x128xf32> to vector<1x64x128xf32>
    %c0_44 = arith.constant 0 : index
    %c0_45 = arith.constant 0 : index
    %c0_46 = arith.constant 0 : index
    %62 = vector.load %arg6[%c0_44, %c0_45, %c0_46] : memref<1x64x128xf32, #tpu.memory_space<vmem>>, vector<1x64x128xf32>
    tpu.vector_store %arg6[%c0_44, %c0_45, %c0_46], %61 {strides = array<i32>} : memref<1x64x128xf32, #tpu.memory_space<vmem>>, vector<1x64x128xf32>,
    return
  }
  func.func @transform_0(%arg0: i32, %arg1: i32) -> (i32, i32, i32) {
    %c0_i32 = arith.constant 0 : i32
    %c0_i32_0 = arith.constant 0 : i32
    %c0_i32_1 = arith.constant 0 : i32
    return %arg0, %c0_i32, %c0_i32_0 : i32, i32, i32
  }
  func.func @transform_1(%arg0: i32, %arg1: i32) -> (i32, i32) {
    %c0_i32 = arith.constant 0 : i32
    %c0_i32_0 = arith.constant 0 : i32
    %c0_i32_1 = arith.constant 0 : i32
    return %c0_i32, %c0_i32_0 : i32, i32
  }
  func.func @transform_2(%arg0: i32, %arg1: i32) -> (i32, i32) {
    %c0_i32 = arith.constant 0 : i32
    %c0_i32_0 = arith.constant 0 : i32
    %c0_i32_1 = arith.constant 0 : i32
    return %c0_i32, %c0_i32_0 : i32, i32
  }
  func.func @transform_3(%arg0: i32, %arg1: i32) -> (i32, i32, i32) {
    %c0_i32 = arith.constant 0 : i32
    %c0_i32_0 = arith.constant 0 : i32
    return %arg0, %arg1, %c0_i32 : i32, i32, i32
  }
  func.func @transform_4(%arg0: i32, %arg1: i32) -> (i32, i32, i32) {
    %c0_i32 = arith.constant 0 : i32
    %c0_i32_0 = arith.constant 0 : i32
    return %arg0, %arg1, %c0_i32 : i32, i32, i32
  }
}

</mosaic_0001>

<llo_original>
// kernel: basic_block_forward.2
$region0: #{basic_block_forward.2}
  #allocation0 [shape = 'u32[]', space=smem, size = 0x4, offset = 0x4, fixed_abs, tag = 'smem constant byte address 0x4 - core index']
  #allocation1 [shape = 'u32[144,128]{1,0:T(1,128)}', space=vmem, size = 0x12000, scoped, tag = 'internal scratch']
  #allocation2 [shape = 'bf16[64,36]{1,0:T(16,128)(2,1)}', space=vmem, size = 0x4000, scoped, tag = 'scratch operand']
  %s0 = inlined_call_operand.vmem [shape: bf16[8,9,9,4], index: 0, kind: input, shape index: {}]
  %s1 = inlined_call_operand.vmem [shape: bf16[36,128], index: 1, kind: input, shape index: {}]
  %s2 = inlined_call_operand.vmem [shape: f32[1,128], index: 2, kind: input, shape index: {}]
  %s3 = inlined_call_operand.vmem [shape: bf16[4,128], index: 3, kind: input, shape index: {}]
  %s4 = inlined_call_operand.vmem [shape: f32[1,128], index: 4, kind: input, shape index: {}]
  %s5 = inlined_call_operand.vmem [shape: bf16[2,64,128], index: 5, kind: output, shape index: {0}]
  %s6 = inlined_call_operand.vmem [shape: bf16[2,64,128], index: 6, kind: output, shape index: {1}]
  %7 = xla_tuple %s5, %s6
  %s8 = sld [smem:[#allocation0]]
  $region61: #{basic_block_forward.2} parent=0
    _
  %s10 = ssub.s32 1, %s8
  %s11 = scalar_select 0, %s10, %s8
  loop: start=0, step=1, limit=4
  $region2: #{basic_block_forward.2} parent=0 // loop_pre_header
    _
  $region3: #{basic_block_forward.2} parent=0 // loop_header
    %s13 = sphi 0, %s17
    %p14 = scmp.ge.s32.totalorder %s13, 4
    %s20 = sphi 0, %s32
    %s21 = sphi 0, %s28
    %s22 = sphi 0, %s20
    %s23 = sphi 0, %s21
    %s24 = sphi 0, %s22
    %s25 = sphi 0, %s23
    %s35 = sphi 0, %s37
    %s38 = sphi 0, %s35
    %s39 = sphi 0, %s38
    %s55 = sphi 0, %s39
    %s59 = sphi 0, %s59
    %s61 = sphi 0, %s59
    %s62 = sphi 0, %s61
    %s76 = sphi 0, %s62
    %s80 = sphi 0, %s80
    %s82 = sphi 0, %s80
    %s83 = sphi 0, %s82
    %s97 = sphi 0, %s83
    %s101 = sphi 0, %s101
    %s103 = sphi 0, %s101
    %s104 = sphi 0, %s103
    %s118 = sphi 0, %s104
    %s122 = sphi 0, %s122
    %s124 = sphi 0, %s122
    %s125 = sphi 0, %s124
    %s139 = sphi 0, %s125
    %s147 = sphi 0, %s149
    %s150 = sphi 0, %s147
    %s151 = sphi 0, %s150
    %s167 = sphi 0, %s151
    %s175 = sphi 0, %s177
    %s178 = sphi 0, %s175
    %s179 = sphi 0, %s178
    %s195 = sphi 0, %s179
  $region4: #{basic_block_forward.2} parent=0 // loop_header_branch
    %16 = sbr.rel (%p14) target = $region8
  $region5: #{basic_block_forward.2} parent=0 // loop_body
    %s18 = ssub.s32 %s13, 1
    %s19 = ssub.s32 %s13, 2
    %s26 = sadd.s32 1, %s21
    %p27 = scmp.ge.s32.totalorder %s26, 1
    %s28 = scalar_select %p27, 0, %s26
    %s29 = sadd.s32 1, %s20
    %s30 = scalar_select %p27, %s29, %s20
    %p31 = scmp.ge.s32.totalorder %s30, 2
    %s32 = scalar_select %p31, 0, %s30
    %s33 = ssub.s32 %s20, %s32
    %p34 = scmp.eq.s32.totalorder %s33, 0
    %s36 = sadd.s32 %s35, 1
    %s37 = scalar_select %p34, %s35, %s36
    %p40 = pneg %p34
    %p41 = scmp.eq.s32.totalorder %s13, 1
    %p42 = por %p40, %p41
    %p43 = scmp.ne.s32.totalorder %s35, %s38
    %p44 = scmp.eq.s32.totalorder %s13, 0
    %p45 = por %p43, %p44
    %p46 = scmp.ne.s32.totalorder %s35, %s38
    %p47 = scmp.eq.s32.totalorder %s18, 1
    %p48 = por %p46, %p47
    %p49 = scmp.ne.s32.totalorder %s38, %s39
    %p50 = scmp.eq.s32.totalorder %s18, 0
    %p51 = por %p49, %p50
    %p52 = scmp.ne.s32.totalorder %s38, %s39
    %p53 = scmp.eq.s32.totalorder %s19, 1
    %p54 = por %p52, %p53
    %p56 = scmp.ne.s32.totalorder %s39, %s55
    %p57 = scmp.eq.s32.totalorder %s19, 0
    %p58 = por %p56, %p57
    %s60 = sadd.s32 %s59, 1
    %p63 = scmp.eq.s32.totalorder %s13, 1
    %p64 = scmp.ne.s32.totalorder %s59, %s61
    %p65 = scmp.eq.s32.totalorder %s13, 0
    %p66 = por %p64, %p65
    %p67 = scmp.ne.s32.totalorder %s59, %s61
    %p68 = scmp.eq.s32.totalorder %s18, 1
    %p69 = por %p67, %p68
    %p70 = scmp.ne.s32.totalorder %s61, %s62
    %p71 = scmp.eq.s32.totalorder %s18, 0
    %p72 = por %p70, %p71
    %p73 = scmp.ne.s32.totalorder %s61, %s62
    %p74 = scmp.eq.s32.totalorder %s19, 1
    %p75 = por %p73, %p74
    %p77 = scmp.ne.s32.totalorder %s62, %s76
    %p78 = scmp.eq.s32.totalorder %s19, 0
    %p79 = por %p77, %p78
    %s81 = sadd.s32 %s80, 1
    %p84 = scmp.eq.s32.totalorder %s13, 1
    %p85 = scmp.ne.s32.totalorder %s80, %s82
    %p86 = scmp.eq.s32.totalorder %s13, 0
    %p87 = por %p85, %p86
    %p88 = scmp.ne.s32.totalorder %s80, %s82
    %p89 = scmp.eq.s32.totalorder %s18, 1
    %p90 = por %p88, %p89
    %p91 = scmp.ne.s32.totalorder %s82, %s83
    %p92 = scmp.eq.s32.totalorder %s18, 0
    %p93 = por %p91, %p92
    %p94 = scmp.ne.s32.totalorder %s82, %s83
    %p95 = scmp.eq.s32.totalorder %s19, 1
    %p96 = por %p94, %p95
    %p98 = scmp.ne.s32.totalorder %s83, %s97
    %p99 = scmp.eq.s32.totalorder %s19, 0
    %p100 = por %p98, %p99
    %s102 = sadd.s32 %s101, 1
    %p105 = scmp.eq.s32.totalorder %s13, 1
    %p106 = scmp.ne.s32.totalorder %s101, %s103
    %p107 = scmp.eq.s32.totalorder %s13, 0
    %p108 = por %p106, %p107
    %p109 = scmp.ne.s32.totalorder %s101, %s103
    %p110 = scmp.eq.s32.totalorder %s18, 1
    %p111 = por %p109, %p110
    %p112 = scmp.ne.s32.totalorder %s103, %s104
    %p113 = scmp.eq.s32.totalorder %s18, 0
    %p114 = por %p112, %p113
    %p115 = scmp.ne.s32.totalorder %s103, %s104
    %p116 = scmp.eq.s32.totalorder %s19, 1
    %p117 = por %p115, %p116
    %p119 = scmp.ne.s32.totalorder %s104, %s118
    %p120 = scmp.eq.s32.totalorder %s19, 0
    %p121 = por %p119, %p120
    %s123 = sadd.s32 %s122, 1
    %p126 = scmp.eq.s32.totalorder %s13, 1
    %p127 = scmp.ne.s32.totalorder %s122, %s124
    %p128 = scmp.eq.s32.totalorder %s13, 0
    %p129 = por %p127, %p128
    %p130 = scmp.ne.s32.totalorder %s122, %s124
    %p131 = scmp.eq.s32.totalorder %s18, 1
    %p132 = por %p130, %p131
    %p133 = scmp.ne.s32.totalorder %s124, %s125
    %p134 = scmp.eq.s32.totalorder %s18, 0
    %p135 = por %p133, %p134
    %p136 = scmp.ne.s32.totalorder %s124, %s125
    %p137 = scmp.eq.s32.totalorder %s19, 1
    %p138 = por %p136, %p137
    %p140 = scmp.ne.s32.totalorder %s125, %s139
    %p141 = scmp.eq.s32.totalorder %s19, 0
    %p142 = por %p140, %p141
    %s143 = ssub.s32 %s20, %s32
    %s144 = ssub.s32 %s21, %s28
    %s145 = sor.u32 %s143, %s144
    %p146 = scmp.eq.s32.totalorder %s145, 0
    %s148 = sadd.s32 %s147, 1
    %s149 = scalar_select %p146, %s147, %s148
    %p152 = pneg %p146
    %p153 = scmp.eq.s32.totalorder %s13, 1
    %p154 = por %p152, %p153
    %p155 = scmp.ne.s32.totalorder %s147, %s150
    %p156 = scmp.eq.s32.totalorder %s13, 0
    %p157 = por %p155, %p156
    %p158 = scmp.ne.s32.totalorder %s147, %s150
    %p159 = scmp.eq.s32.totalorder %s18, 1
    %p160 = por %p158, %p159
    %p161 = scmp.ne.s32.totalorder %s150, %s151
    %p162 = scmp.eq.s32.totalorder %s18, 0
    %p163 = por %p161, %p162
    %p164 = scmp.ne.s32.totalorder %s150, %s151
    %p165 = scmp.eq.s32.totalorder %s19, 1
    %p166 = por %p164, %p165
    %p168 = scmp.ne.s32.totalorder %s151, %s167
    %p169 = scmp.eq.s32.totalorder %s19, 0
    %p170 = por %p168, %p169
    %s171 = ssub.s32 %s20, %s32
    %s172 = ssub.s32 %s21, %s28
    %s173 = sor.u32 %s171, %s172
    %p174 = scmp.eq.s32.totalorder %s173, 0
    %s176 = sadd.s32 %s175, 1
    %s177 = scalar_select %p174, %s175, %s176
    %p180 = pneg %p174
    %p181 = scmp.eq.s32.totalorder %s13, 1
    %p182 = por %p180, %p181
    %p183 = scmp.ne.s32.totalorder %s175, %s178
    %p184 = scmp.eq.s32.totalorder %s13, 0
    %p185 = por %p183, %p184
    %p186 = scmp.ne.s32.totalorder %s175, %s178
    %p187 = scmp.eq.s32.totalorder %s18, 1
    %p188 = por %p186, %p187
    %p189 = scmp.ne.s32.totalorder %s178, %s179
    %p190 = scmp.eq.s32.totalorder %s18, 0
    %p191 = por %p189, %p190
    %p192 = scmp.ne.s32.totalorder %s178, %s179
    %p193 = scmp.eq.s32.totalorder %s19, 1
    %p194 = por %p192, %p193
    %p196 = scmp.ne.s32.totalorder %s179, %s195
    %p197 = scmp.eq.s32.totalorder %s19, 0
    %p198 = por %p196, %p197
    %p199 = scmp.le.s32.totalorder 1, %s13
    %p200 = scmp.lt.s32.totalorder %s13, 3
    %p201 = pnand %p199, %p200
    %p202 = pneg %p201
    // Predicated region
    $region9: #{basic_block_forward.2} parent=5 // pred_check
      _
    $region10: #{basic_block_forward.2} parent=5 // pred_check_branch
      %204 = sbr.rel (%p201) target = $region12
    $region11: #{basic_block_forward.2} parent=5 // pred_region
      %s205 = ssub.s32 %s13, 1
      // Predicated region
      $region13: #{basic_block_forward.2} parent=11 // pred_check
        %p206 = pneg %p72
      $region14: #{basic_block_forward.2} parent=11 // pred_check_branch
        %208 = sbr.rel (%p206) target = $region16
      $region15: #{basic_block_forward.2} parent=11 // pred_region
        _
      $region16: #{basic_block_forward.2} parent=11 // pred_fallthru
        _
      // Predicated region
      $region17: #{basic_block_forward.2} parent=11 // pred_check
        %p209 = pneg %p93
      $region18: #{basic_block_forward.2} parent=11 // pred_check_branch
        %211 = sbr.rel (%p209) target = $region20
      $region19: #{basic_block_forward.2} parent=11 // pred_region
        _
      $region20: #{basic_block_forward.2} parent=11 // pred_fallthru
        _
      // Predicated region
      $region21: #{basic_block_forward.2} parent=11 // pred_check
        %p212 = pneg %p114
      $region22: #{basic_block_forward.2} parent=11 // pred_check_branch
        %214 = sbr.rel (%p212) target = $region24
      $region23: #{basic_block_forward.2} parent=11 // pred_region
        _
      $region24: #{basic_block_forward.2} parent=11 // pred_fallthru
        _
      // Predicated region
      $region25: #{basic_block_forward.2} parent=11 // pred_check
        %p215 = pneg %p135
      $region26: #{basic_block_forward.2} parent=11 // pred_check_branch
        %217 = sbr.rel (%p215) target = $region28
      $region27: #{basic_block_forward.2} parent=11 // pred_region
        _
      $region28: #{basic_block_forward.2} parent=11 // pred_fallthru
        _
    $region12: #{basic_block_forward.2} parent=5 // pred_fallthru
      _
    %p218 = scmp.lt.s32.totalorder %s13, 2
    // Predicated region
    $region29: #{basic_block_forward.2} parent=5 // pred_check
      %p219 = pneg %p218
    $region30: #{basic_block_forward.2} parent=5 // pred_check_branch
      %221 = sbr.rel (%p219) target = $region32
    $region31: #{basic_block_forward.2} parent=5 // pred_region
      // Predicated region
      $region33: #{basic_block_forward.2} parent=31 // pred_check
        %p222 = pneg %p45
      $region34: #{basic_block_forward.2} parent=31 // pred_check_branch
        %224 = sbr.rel (%p222) target = $region36
      $region35: #{basic_block_forward.2} parent=31 // pred_region
        %s225 = smul.u32 4, %s20
        %p226 = scmp.lt.s32.totalorder %s225, 7
        %s227 = scalar_select %p226, %s225, 7
        %s228 = smul.addr %s227, 18
        %s229 = smul.addr %s228, 4
        %s230 = scalar_lea.vmem %s0, %s229
        %s231 = smul.u32 4, %s20
      $region36: #{basic_block_forward.2} parent=31 // pred_fallthru
        _
    $region32: #{basic_block_forward.2} parent=5 // pred_fallthru
      _
    %p232 = scmp.le.s32.totalorder 1, %s13
    %p233 = scmp.lt.s32.totalorder %s13, 3
    %p234 = pnand %p232, %p233
    %p235 = pneg %p234
    // Predicated region
    $region37: #{basic_block_forward.2} parent=5 // pred_check
      _
    $region38: #{basic_block_forward.2} parent=5 // pred_check_branch
      %237 = sbr.rel (%p234) target = $region40
    $region39: #{basic_block_forward.2} parent=5 // pred_region
      %s238 = ssub.s32 %s13, 1
      %s239 = smul.u32 4, %s22
      %p240 = scmp.lt.s32.totalorder %s239, 7
      %s241 = scalar_select %p240, %s239, 7
      %s242 = smul.addr %s241, 18
      %s243 = smul.addr %s242, 4
      %s244 = scalar_lea.vmem %s0, %s243
      %p245 = pneg %p51
      %p246 = pneg %p48
      %p247 = pneg %p72
      %p248 = pneg %p69
      %p249 = pneg %p93
      %p250 = pneg %p90
      %p251 = pneg %p114
      %p252 = pneg %p111
      %p253 = pneg %p135
      %p254 = pneg %p132
      %p255 = pneg %p163
      %p256 = pneg %p160
      %s257 = smul.u32 8, %s23
      %p258 = scmp.lt.s32.totalorder %s22, 1
      %s259 = scalar_select %p258, %s22, 1
      %p260 = scmp.lt.s32.totalorder %s257, 7
      %s261 = scalar_select %p260, %s257, 7
      %s262 = smul.addr %s259, 8
      %s263 = sadd.s32 %s261, %s262
      %s264 = smul.addr %s263, 4
      %s265 = scalar_lea.vmem %s5, %s264
      %p266 = pneg %p191
      %p267 = pneg %p188
      %s268 = smul.u32 8, %s23
      %p269 = scmp.lt.s32.totalorder %s22, 1
      %s270 = scalar_select %p269, %s22, 1
      %p271 = scmp.lt.s32.totalorder %s268, 7
      %s272 = scalar_select %p271, %s268, 7
      %s273 = smul.addr %s270, 8
      %s274 = sadd.s32 %s272, %s273
      %s275 = smul.addr %s274, 4
      %s276 = scalar_lea.vmem %s6, %s275
      %s277 = smul.u32 4, %s22
      %p278 = scmp.lt.s32.totalorder %s277, 7
      %s279 = scalar_select %p278, %s277, 7
      %s280 = smul.addr %s279, 18
      %s281 = smul.addr %s280, 4
      %s282 = scalar_lea.vmem %s0, %s281
      %s283 = smul.u32 4, %s22
      %s284 = smul.u32 8, %s23
      %p285 = scmp.lt.s32.totalorder %s22, 1
      %s286 = scalar_select %p285, %s22, 1
      %p287 = scmp.lt.s32.totalorder %s284, 7
      %s288 = scalar_select %p287, %s284, 7
      %s289 = smul.addr %s286, 8
      %s290 = sadd.s32 %s288, %s289
      %s291 = smul.addr %s290, 4
      %s292 = scalar_lea.vmem %s5, %s291
      %s293 = smul.u32 8, %s23
      %s294 = smul.u32 8, %s23
      %p295 = scmp.lt.s32.totalorder %s22, 1
      %s296 = scalar_select %p295, %s22, 1
      %p297 = scmp.lt.s32.totalorder %s294, 7
      %s298 = scalar_select %p297, %s294, 7
      %s299 = smul.addr %s296, 8
      %s300 = sadd.s32 %s298, %s299
      %s301 = smul.addr %s300, 4
      %s302 = scalar_lea.vmem %s6, %s301
      %s303 = smul.u32 8, %s23
      %s305 = smul.u32 %s23, 8
      %s306 = smul.u32 %s305, 2
      %s307 = smul.addr %s306, 4
      %s308 = scalar_lea.vmem %s282, %s307
      %v309 = vld [vmem:[%s308] sm:$0xf]
      %v310 = vld [vmem:[%s308 + $0x8] sm:$0xf]
      %v311 = vld [vmem:[%s308 + $0x10] sm:$0xf]
      %v312 = vld [vmem:[%s308 + $0x18] sm:$0xf]
      %v313 = vld [vmem:[%s308 + $0x20] sm:$0xf]
      %v314 = vld [vmem:[%s308 + $0x28] sm:$0xf]
      %v315 = vld [vmem:[%s308 + $0x30] sm:$0xf]
      %v316 = vld [vmem:[%s308 + $0x38] sm:$0xf]
      %v325 = vunpack.c.l.b16 %v309
      %v326 = vunpack.c.l.b16 %v310
      %v327 = vunpack.c.l.b16 %v311
      %v328 = vunpack.c.l.b16 %v312
      %v329 = vunpack.c.l.b16 %v313
      %v330 = vunpack.c.l.b16 %v314
      %v331 = vunpack.c.l.b16 %v315
      %v332 = vunpack.c.l.b16 %v316
      %v333 = vpack.c.b16 %v326, %v325
      %v334 = vpack.c.b16 %v328, %v327
      %v335 = vpack.c.b16 %v330, %v329
      %v336 = vpack.c.b16 %v332, %v331
      %vm341 = vcmask 31744
      %342 = vst.msk [vmem:[#allocation2] sm:$0xff] %vm341, %v333
      %343 = vst.msk [vmem:[#allocation2 + $0x8] sm:$0xff] %vm341, %v334
      %344 = vst.msk [vmem:[#allocation2 + $0x10] sm:$0xff] %vm341, %v335
      %345 = vst.msk [vmem:[#allocation2 + $0x18] sm:$0xff] %vm341, %v336
      %s346 = sadd.s32 %s306, 18
      %s347 = smul.addr %s346, 4
      %s348 = scalar_lea.vmem %s282, %s347
      %v349 = vld [vmem:[%s348] sm:$0xf]
      %v350 = vld [vmem:[%s348 + $0x8] sm:$0xf]
      %v351 = vld [vmem:[%s348 + $0x10] sm:$0xf]
      %v352 = vld [vmem:[%s348 + $0x18] sm:$0xf]
      %v353 = vld [vmem:[%s348 + $0x20] sm:$0xf]
      %v354 = vld [vmem:[%s348 + $0x28] sm:$0xf]
      %v355 = vld [vmem:[%s348 + $0x30] sm:$0xf]
      %v356 = vld [vmem:[%s348 + $0x38] sm:$0xf]
      %v365 = vunpack.c.l.b16 %v349
      %v366 = vunpack.c.l.b16 %v350
      %v367 = vunpack.c.l.b16 %v351
      %v368 = vunpack.c.l.b16 %v352
      %v369 = vunpack.c.l.b16 %v353
      %v370 = vunpack.c.l.b16 %v354
      %v371 = vunpack.c.l.b16 %v355
      %v372 = vunpack.c.l.b16 %v356
      %v373 = vpack.c.b16 %v366, %v365
      %v374 = vpack.c.b16 %v368, %v367
      %v375 = vpack.c.b16 %v370, %v369
      %v376 = vpack.c.b16 %v372, %v371
      %377 = vrot.lane.b32.xlu0 %v373, 4
      %v378 = vpop.permute.xlu0 %377
      %379 = vrot.lane.b32.xlu0 %v374, 4
      %v380 = vpop.permute.xlu0 %379
      %381 = vrot.lane.b32.xlu0 %v375, 4
      %v382 = vpop.permute.xlu0 %381
      %383 = vrot.lane.b32.xlu0 %v376, 4
      %v384 = vpop.permute.xlu0 %383
      %vm389 = vcmask 64544
      %390 = vst.msk [vmem:[#allocation2] sm:$0xff] %vm389, %v378
      %391 = vst.msk [vmem:[#allocation2 + $0x8] sm:$0xff] %vm389, %v380
      %392 = vst.msk [vmem:[#allocation2 + $0x10] sm:$0xff] %vm389, %v382
      %393 = vst.msk [vmem:[#allocation2 + $0x18] sm:$0xff] %vm389, %v384
      %v394 = vld [vmem:[%s308] sm:$0xf]
      %v395 = vld [vmem:[%s308 + $0x4] sm:$0x1]
      %v396 = vld [vmem:[%s308 + $0x8] sm:$0xf]
      %v397 = vld [vmem:[%s308 + $0xc] sm:$0x1]
      %v398 = vld [vmem:[%s308 + $0x10] sm:$0xf]
      %v399 = vld [vmem:[%s308 + $0x14] sm:$0x1]
      %v400 = vld [vmem:[%s308 + $0x18] sm:$0xf]
      %v401 = vld [vmem:[%s308 + $0x1c] sm:$0x1]
      %v402 = vld [vmem:[%s308 + $0x20] sm:$0xf]
      %v403 = vld [vmem:[%s308 + $0x24] sm:$0x1]
      %v404 = vld [vmem:[%s308 + $0x28] sm:$0xf]
      %v405 = vld [vmem:[%s308 + $0x2c] sm:$0x1]
      %v406 = vld [vmem:[%s308 + $0x30] sm:$0xf]
      %v407 = vld [vmem:[%s308 + $0x34] sm:$0x1]
      %v408 = vld [vmem:[%s308 + $0x38] sm:$0xf]
      %v409 = vld [vmem:[%s308 + $0x3c] sm:$0x1]
      %vm410 = vsmask.f32 3328
      %vm411 = vsmask.f32 7440
      %vm412 = vmor %vm410, %vm411
      %v414 = vshrl.u32 %v394, 16
      %v416 = vrot.slane %v414, 4
      %v417 = vshll.u32 %v394, 16
      %v419 = vrot.slane %v417, 5
      %v420 = vor.u32 %v416, %v419
      %v421 = vrot.slane %v420, 4
      %v423 = vshll.u32 %v395, 16
      %v425 = vrot.slane %v423, 5
      %v426 = vsel %vm412, %v421, %v425
      %v428 = vshrl.u32 %v396, 16
      %v430 = vrot.slane %v428, 4
      %v431 = vshll.u32 %v396, 16
      %v433 = vrot.slane %v431, 5
      %v434 = vor.u32 %v430, %v433
      %v435 = vrot.slane %v434, 4
      %v437 = vshll.u32 %v397, 16
      %v439 = vrot.slane %v437, 5
      %v440 = vsel %vm412, %v435, %v439
      %v442 = vshrl.u32 %v398, 16
      %v444 = vrot.slane %v442, 4
      %v445 = vshll.u32 %v398, 16
      %v447 = vrot.slane %v445, 5
      %v448 = vor.u32 %v444, %v447
      %v449 = vrot.slane %v448, 4
      %v451 = vshll.u32 %v399, 16
      %v453 = vrot.slane %v451, 5
      %v454 = vsel %vm412, %v449, %v453
      %v456 = vshrl.u32 %v400, 16
      %v458 = vrot.slane %v456, 4
      %v459 = vshll.u32 %v400, 16
      %v461 = vrot.slane %v459, 5
      %v462 = vor.u32 %v458, %v461
      %v463 = vrot.slane %v462, 4
      %v465 = vshll.u32 %v401, 16
      %v467 = vrot.slane %v465, 5
      %v468 = vsel %vm412, %v463, %v467
      %v470 = vshrl.u32 %v402, 16
      %v472 = vrot.slane %v470, 4
      %v473 = vshll.u32 %v402, 16
      %v475 = vrot.slane %v473, 5
      %v476 = vor.u32 %v472, %v475
      %v477 = vrot.slane %v476, 4
      %v479 = vshll.u32 %v403, 16
      %v481 = vrot.slane %v479, 5
      %v482 = vsel %vm412, %v477, %v481
      %v484 = vshrl.u32 %v404, 16
      %v486 = vrot.slane %v484, 4
      %v487 = vshll.u32 %v404, 16
      %v489 = vrot.slane %v487, 5
      %v490 = vor.u32 %v486, %v489
      %v491 = vrot.slane %v490, 4
      %v493 = vshll.u32 %v405, 16
      %v495 = vrot.slane %v493, 5
      %v496 = vsel %vm412, %v491, %v495
      %v498 = vshrl.u32 %v406, 16
      %v500 = vrot.slane %v498, 4
      %v501 = vshll.u32 %v406, 16
      %v503 = vrot.slane %v501, 5
      %v504 = vor.u32 %v500, %v503
      %v505 = vrot.slane %v504, 4
      %v507 = vshll.u32 %v407, 16
      %v509 = vrot.slane %v507, 5
      %v510 = vsel %vm412, %v505, %v509
      %v512 = vshrl.u32 %v408, 16
      %v514 = vrot.slane %v512, 4
      %v515 = vshll.u32 %v408, 16
      %v517 = vrot.slane %v515, 5
      %v518 = vor.u32 %v514, %v517
      %v519 = vrot.slane %v518, 4
      %v521 = vshll.u32 %v409, 16
      %v523 = vrot.slane %v521, 5
      %v524 = vsel %vm412, %v519, %v523
      %v525 = vunpack.c.l.b16 %v426
      %v526 = vunpack.c.l.b16 %v440
      %v527 = vunpack.c.l.b16 %v454
      %v528 = vunpack.c.l.b16 %v468
      %v529 = vunpack.c.l.b16 %v482
      %v530 = vunpack.c.l.b16 %v496
      %v531 = vunpack.c.l.b16 %v510
      %v532 = vunpack.c.l.b16 %v524
      %v533 = vpack.c.b16 %v526, %v525
      %v534 = vpack.c.b16 %v528, %v527
      %v535 = vpack.c.b16 %v530, %v529
      %v536 = vpack.c.b16 %v532, %v531
      %537 = vrot.lane.b32.xlu0 %v533, 8
      %v538 = vpop.permute.xlu0 %537
      %539 = vrot.lane.b32.xlu0 %v534, 8
      %v540 = vpop.permute.xlu0 %539
      %541 = vrot.lane.b32.xlu0 %v535, 8
      %v542 = vpop.permute.xlu0 %541
      %543 = vrot.lane.b32.xlu0 %v536, 8
      %v544 = vpop.permute.xlu0 %543
      %vm549 = vcmask 97344
      %550 = vst.msk [vmem:[#allocation2] sm:$0xff] %vm549, %v538
      %551 = vst.msk [vmem:[#allocation2 + $0x8] sm:$0xff] %vm549, %v540
      %552 = vst.msk [vmem:[#allocation2 + $0x10] sm:$0xff] %vm549, %v542
      %553 = vst.msk [vmem:[#allocation2 + $0x18] sm:$0xff] %vm549, %v544
      %s554 = sadd.s32 %s306, 36
      %s555 = smul.addr %s554, 4
      %s556 = scalar_lea.vmem %s282, %s555
      %v557 = vld [vmem:[%s556] sm:$0xf]
      %v558 = vld [vmem:[%s556 + $0x8] sm:$0xf]
      %v559 = vld [vmem:[%s556 + $0x10] sm:$0xf]
      %v560 = vld [vmem:[%s556 + $0x18] sm:$0xf]
      %v561 = vld [vmem:[%s556 + $0x20] sm:$0xf]
      %v562 = vld [vmem:[%s556 + $0x28] sm:$0xf]
      %v563 = vld [vmem:[%s556 + $0x30] sm:$0xf]
      %v564 = vld [vmem:[%s556 + $0x38] sm:$0xf]
      %v573 = vunpack.c.l.b16 %v557
      %v574 = vunpack.c.l.b16 %v558
      %v575 = vunpack.c.l.b16 %v559
      %v576 = vunpack.c.l.b16 %v560
      %v577 = vunpack.c.l.b16 %v561
      %v578 = vunpack.c.l.b16 %v562
      %v579 = vunpack.c.l.b16 %v563
      %v580 = vunpack.c.l.b16 %v564
      %v581 = vpack.c.b16 %v574, %v573
      %v582 = vpack.c.b16 %v576, %v575
      %v583 = vpack.c.b16 %v578, %v577
      %v584 = vpack.c.b16 %v580, %v579
      %585 = vrot.lane.b32.xlu0 %v581, 12
      %v586 = vpop.permute.xlu0 %585
      %587 = vrot.lane.b32.xlu0 %v582, 12
      %v588 = vpop.permute.xlu0 %587
      %589 = vrot.lane.b32.xlu0 %v583, 12
      %v590 = vpop.permute.xlu0 %589
      %591 = vrot.lane.b32.xlu0 %v584, 12
      %v592 = vpop.permute.xlu0 %591
      %vm597 = vcmask 130144
      %598 = vst.msk [vmem:[#allocation2] sm:$0xff] %vm597, %v586
      %599 = vst.msk [vmem:[#allocation2 + $0x8] sm:$0xff] %vm597, %v588
      %600 = vst.msk [vmem:[#allocation2 + $0x10] sm:$0xff] %vm597, %v590
      %601 = vst.msk [vmem:[#allocation2 + $0x18] sm:$0xff] %vm597, %v592
      %s602 = sadd.s32 %s306, 54
      %s603 = smul.addr %s602, 4
      %s604 = scalar_lea.vmem %s282, %s603
      %v605 = vld [vmem:[%s604] sm:$0xf]
      %v606 = vld [vmem:[%s604 + $0x8] sm:$0xf]
      %v607 = vld [vmem:[%s604 + $0x10] sm:$0xf]
      %v608 = vld [vmem:[%s604 + $0x18] sm:$0xf]
      %v609 = vld [vmem:[%s604 + $0x20] sm:$0xf]
      %v610 = vld [vmem:[%s604 + $0x28] sm:$0xf]
      %v611 = vld [vmem:[%s604 + $0x30] sm:$0xf]
      %v612 = vld [vmem:[%s604 + $0x38] sm:$0xf]
      %v621 = vunpack.c.l.b16 %v605
      %v622 = vunpack.c.l.b16 %v606
      %v623 = vunpack.c.l.b16 %v607
      %v624 = vunpack.c.l.b16 %v608
      %v625 = vunpack.c.l.b16 %v609
      %v626 = vunpack.c.l.b16 %v610
      %v627 = vunpack.c.l.b16 %v611
      %v628 = vunpack.c.l.b16 %v612
      %v629 = vpack.c.b16 %v622, %v621
      %v630 = vpack.c.b16 %v624, %v623
      %v631 = vpack.c.b16 %v626, %v625
      %v632 = vpack.c.b16 %v628, %v627
      %633 = vrot.lane.b32.xlu0 %v629, 16
      %v634 = vpop.permute.xlu0 %633
      %635 = vrot.lane.b32.xlu0 %v630, 16
      %v636 = vpop.permute.xlu0 %635
      %637 = vrot.lane.b32.xlu0 %v631, 16
      %v638 = vpop.permute.xlu0 %637
      %639 = vrot.lane.b32.xlu0 %v632, 16
      %v640 = vpop.permute.xlu0 %639
      %vm645 = vcmask 162944
      %646 = vst.msk [vmem:[#allocation2] sm:$0xff] %vm645, %v634
      %647 = vst.msk [vmem:[#allocation2 + $0x8] sm:$0xff] %vm645, %v636
      %648 = vst.msk [vmem:[#allocation2 + $0x10] sm:$0xff] %vm645, %v638
      %649 = vst.msk [vmem:[#allocation2 + $0x18] sm:$0xff] %vm645, %v640
      %v650 = vld [vmem:[%s556] sm:$0xf]
      %v651 = vld [vmem:[%s556 + $0x4] sm:$0x1]
      %v652 = vld [vmem:[%s556 + $0x8] sm:$0xf]
      %v653 = vld [vmem:[%s556 + $0xc] sm:$0x1]
      %v654 = vld [vmem:[%s556 + $0x10] sm:$0xf]
      %v655 = vld [vmem:[%s556 + $0x14] sm:$0x1]
      %v656 = vld [vmem:[%s556 + $0x18] sm:$0xf]
      %v657 = vld [vmem:[%s556 + $0x1c] sm:$0x1]
      %v658 = vld [vmem:[%s556 + $0x20] sm:$0xf]
      %v659 = vld [vmem:[%s556 + $0x24] sm:$0x1]
      %v660 = vld [vmem:[%s556 + $0x28] sm:$0xf]
      %v661 = vld [vmem:[%s556 + $0x2c] sm:$0x1]
      %v662 = vld [vmem:[%s556 + $0x30] sm:$0xf]
      %v663 = vld [vmem:[%s556 + $0x34] sm:$0x1]
      %v664 = vld [vmem:[%s556 + $0x38] sm:$0xf]
      %v665 = vld [vmem:[%s556 + $0x3c] sm:$0x1]
      %v667 = vshrl.u32 %v650, 16
      %v669 = vrot.slane %v667, 4
      %v670 = vshll.u32 %v650, 16
      %v672 = vrot.slane %v670, 5
      %v673 = vor.u32 %v669, %v672
      %v674 = vrot.slane %v673, 4
      %v676 = vshll.u32 %v651, 16
      %v678 = vrot.slane %v676, 5
      %v679 = vsel %vm412, %v674, %v678
      %v681 = vshrl.u32 %v652, 16
      %v683 = vrot.slane %v681, 4
      %v684 = vshll.u32 %v652, 16
      %v686 = vrot.slane %v684, 5
      %v687 = vor.u32 %v683, %v686
      %v688 = vrot.slane %v687, 4
      %v690 = vshll.u32 %v653, 16
      %v692 = vrot.slane %v690, 5
      %v693 = vsel %vm412, %v688, %v692
      %v695 = vshrl.u32 %v654, 16
      %v697 = vrot.slane %v695, 4
      %v698 = vshll.u32 %v654, 16
      %v700 = vrot.slane %v698, 5
      %v701 = vor.u32 %v697, %v700
      %v702 = vrot.slane %v701, 4
      %v704 = vshll.u32 %v655, 16
      %v706 = vrot.slane %v704, 5
      %v707 = vsel %vm412, %v702, %v706
      %v709 = vshrl.u32 %v656, 16
      %v711 = vrot.slane %v709, 4
      %v712 = vshll.u32 %v656, 16
      %v714 = vrot.slane %v712, 5
      %v715 = vor.u32 %v711, %v714
      %v716 = vrot.slane %v715, 4
      %v718 = vshll.u32 %v657, 16
      %v720 = vrot.slane %v718, 5
      %v721 = vsel %vm412, %v716, %v720
      %v723 = vshrl.u32 %v658, 16
      %v725 = vrot.slane %v723, 4
      %v726 = vshll.u32 %v658, 16
      %v728 = vrot.slane %v726, 5
      %v729 = vor.u32 %v725, %v728
      %v730 = vrot.slane %v729, 4
      %v732 = vshll.u32 %v659, 16
      %v734 = vrot.slane %v732, 5
      %v735 = vsel %vm412, %v730, %v734
      %v737 = vshrl.u32 %v660, 16
      %v739 = vrot.slane %v737, 4
      %v740 = vshll.u32 %v660, 16
      %v742 = vrot.slane %v740, 5
      %v743 = vor.u32 %v739, %v742
      %v744 = vrot.slane %v743, 4
      %v746 = vshll.u32 %v661, 16
      %v748 = vrot.slane %v746, 5
      %v749 = vsel %vm412, %v744, %v748
      %v751 = vshrl.u32 %v662, 16
      %v753 = vrot.slane %v751, 4
      %v754 = vshll.u32 %v662, 16
      %v756 = vrot.slane %v754, 5
      %v757 = vor.u32 %v753, %v756
      %v758 = vrot.slane %v757, 4
      %v760 = vshll.u32 %v663, 16
      %v762 = vrot.slane %v760, 5
      %v763 = vsel %vm412, %v758, %v762
      %v765 = vshrl.u32 %v664, 16
      %v767 = vrot.slane %v765, 4
      %v768 = vshll.u32 %v664, 16
      %v770 = vrot.slane %v768, 5
      %v771 = vor.u32 %v767, %v770
      %v772 = vrot.slane %v771, 4
      %v774 = vshll.u32 %v665, 16
      %v776 = vrot.slane %v774, 5
      %v777 = vsel %vm412, %v772, %v776
      %v778 = vunpack.c.l.b16 %v679
      %v779 = vunpack.c.l.b16 %v693
      %v780 = vunpack.c.l.b16 %v707
      %v781 = vunpack.c.l.b16 %v721
      %v782 = vunpack.c.l.b16 %v735
      %v783 = vunpack.c.l.b16 %v749
      %v784 = vunpack.c.l.b16 %v763
      %v785 = vunpack.c.l.b16 %v777
      %v786 = vpack.c.b16 %v779, %v778
      %v787 = vpack.c.b16 %v781, %v780
      %v788 = vpack.c.b16 %v783, %v782
      %v789 = vpack.c.b16 %v785, %v784
      %790 = vrot.lane.b32.xlu0 %v786, 20
      %v791 = vpop.permute.xlu0 %790
      %792 = vrot.lane.b32.xlu0 %v787, 20
      %v793 = vpop.permute.xlu0 %792
      %794 = vrot.lane.b32.xlu0 %v788, 20
      %v795 = vpop.permute.xlu0 %794
      %796 = vrot.lane.b32.xlu0 %v789, 20
      %v797 = vpop.permute.xlu0 %796
      %vm802 = vcmask 195744
      %803 = vst.msk [vmem:[#allocation2] sm:$0xff] %vm802, %v791
      %804 = vst.msk [vmem:[#allocation2 + $0x8] sm:$0xff] %vm802, %v793
      %805 = vst.msk [vmem:[#allocation2 + $0x10] sm:$0xff] %vm802, %v795
      %806 = vst.msk [vmem:[#allocation2 + $0x18] sm:$0xff] %vm802, %v797
      %s807 = sadd.s32 %s305, 1
      %s808 = smul.u32 %s807, 2
      %s809 = smul.addr %s808, 4
      %s810 = scalar_lea.vmem %s282, %s809
      %v811 = vld [vmem:[%s810] sm:$0xf]
      %v812 = vld [vmem:[%s810 + $0x8] sm:$0xf]
      %v813 = vld [vmem:[%s810 + $0x10] sm:$0xf]
      %v814 = vld [vmem:[%s810 + $0x18] sm:$0xf]
      %v815 = vld [vmem:[%s810 + $0x20] sm:$0xf]
      %v816 = vld [vmem:[%s810 + $0x28] sm:$0xf]
      %v817 = vld [vmem:[%s810 + $0x30] sm:$0xf]
      %v818 = vld [vmem:[%s810 + $0x38] sm:$0xf]
      %v827 = vunpack.c.l.b16 %v811
      %v828 = vunpack.c.l.b16 %v812
      %v829 = vunpack.c.l.b16 %v813
      %v830 = vunpack.c.l.b16 %v814
      %v831 = vunpack.c.l.b16 %v815
      %v832 = vunpack.c.l.b16 %v816
      %v833 = vunpack.c.l.b16 %v817
      %v834 = vunpack.c.l.b16 %v818
      %v835 = vpack.c.b16 %v828, %v827
      %v836 = vpack.c.b16 %v830, %v829
      %v837 = vpack.c.b16 %v832, %v831
      %v838 = vpack.c.b16 %v834, %v833
      %839 = vrot.lane.b32.xlu0 %v835, 24
      %v840 = vpop.permute.xlu0 %839
      %841 = vrot.lane.b32.xlu0 %v836, 24
      %v842 = vpop.permute.xlu0 %841
      %843 = vrot.lane.b32.xlu0 %v837, 24
      %v844 = vpop.permute.xlu0 %843
      %845 = vrot.lane.b32.xlu0 %v838, 24
      %v846 = vpop.permute.xlu0 %845
      %vm851 = vcmask 228544
      %852 = vst.msk [vmem:[#allocation2] sm:$0xff] %vm851, %v840
      %853 = vst.msk [vmem:[#allocation2 + $0x8] sm:$0xff] %vm851, %v842
      %854 = vst.msk [vmem:[#allocation2 + $0x10] sm:$0xff] %vm851, %v844
      %855 = vst.msk [vmem:[#allocation2 + $0x18] sm:$0xff] %vm851, %v846
      %s856 = sadd.s32 %s808, 18
      %s857 = smul.addr %s856, 4
      %s858 = scalar_lea.vmem %s282, %s857
      %v859 = vld [vmem:[%s858] sm:$0xf]
      %v860 = vld [vmem:[%s858 + $0x8] sm:$0xf]
      %v861 = vld [vmem:[%s858 + $0x10] sm:$0xf]
      %v862 = vld [vmem:[%s858 + $0x18] sm:$0xf]
      %v863 = vld [vmem:[%s858 + $0x20] sm:$0xf]
      %v864 = vld [vmem:[%s858 + $0x28] sm:$0xf]
      %v865 = vld [vmem:[%s858 + $0x30] sm:$0xf]
      %v866 = vld [vmem:[%s858 + $0x38] sm:$0xf]
      %v875 = vunpack.c.l.b16 %v859
      %v876 = vunpack.c.l.b16 %v860
      %v877 = vunpack.c.l.b16 %v861
      %v878 = vunpack.c.l.b16 %v862
      %v879 = vunpack.c.l.b16 %v863
      %v880 = vunpack.c.l.b16 %v864
      %v881 = vunpack.c.l.b16 %v865
      %v882 = vunpack.c.l.b16 %v866
      %v883 = vpack.c.b16 %v876, %v875
      %v884 = vpack.c.b16 %v878, %v877
      %v885 = vpack.c.b16 %v880, %v879
      %v886 = vpack.c.b16 %v882, %v881
      %887 = vrot.lane.b32.xlu0 %v883, 28
      %v888 = vpop.permute.xlu0 %887
      %889 = vrot.lane.b32.xlu0 %v884, 28
      %v890 = vpop.permute.xlu0 %889
      %891 = vrot.lane.b32.xlu0 %v885, 28
      %v892 = vpop.permute.xlu0 %891
      %893 = vrot.lane.b32.xlu0 %v886, 28
      %v894 = vpop.permute.xlu0 %893
      %vm899 = vcmask 261344
      %900 = vst.msk [vmem:[#allocation2] sm:$0xff] %vm899, %v888
      %901 = vst.msk [vmem:[#allocation2 + $0x8] sm:$0xff] %vm899, %v890
      %902 = vst.msk [vmem:[#allocation2 + $0x10] sm:$0xff] %vm899, %v892
      %903 = vst.msk [vmem:[#allocation2 + $0x18] sm:$0xff] %vm899, %v894
      %v904 = vld [vmem:[%s810] sm:$0xf]
      %v905 = vld [vmem:[%s810 + $0x4] sm:$0x1]
      %v906 = vld [vmem:[%s810 + $0x8] sm:$0xf]
      %v907 = vld [vmem:[%s810 + $0xc] sm:$0x1]
      %v908 = vld [vmem:[%s810 + $0x10] sm:$0xf]
      %v909 = vld [vmem:[%s810 + $0x14] sm:$0x1]
      %v910 = vld [vmem:[%s810 + $0x18] sm:$0xf]
      %v911 = vld [vmem:[%s810 + $0x1c] sm:$0x1]
      %v912 = vld [vmem:[%s810 + $0x20] sm:$0xf]
      %v913 = vld [vmem:[%s810 + $0x24] sm:$0x1]
      %v914 = vld [vmem:[%s810 + $0x28] sm:$0xf]
      %v915 = vld [vmem:[%s810 + $0x2c] sm:$0x1]
      %v916 = vld [vmem:[%s810 + $0x30] sm:$0xf]
      %v917 = vld [vmem:[%s810 + $0x34] sm:$0x1]
      %v918 = vld [vmem:[%s810 + $0x38] sm:$0xf]
      %v919 = vld [vmem:[%s810 + $0x3c] sm:$0x1]
      %v921 = vshrl.u32 %v904, 16
      %v923 = vrot.slane %v921, 4
      %v924 = vshll.u32 %v904, 16
      %v926 = vrot.slane %v924, 5
      %v927 = vor.u32 %v923, %v926
      %v928 = vrot.slane %v927, 4
      %v930 = vshll.u32 %v905, 16
      %v932 = vrot.slane %v930, 5
      %v933 = vsel %vm412, %v928, %v932
      %v935 = vshrl.u32 %v906, 16
      %v937 = vrot.slane %v935, 4
      %v938 = vshll.u32 %v906, 16
      %v940 = vrot.slane %v938, 5
      %v941 = vor.u32 %v937, %v940
      %v942 = vrot.slane %v941, 4
      %v944 = vshll.u32 %v907, 16
      %v946 = vrot.slane %v944, 5
      %v947 = vsel %vm412, %v942, %v946
      %v949 = vshrl.u32 %v908, 16
      %v951 = vrot.slane %v949, 4
      %v952 = vshll.u32 %v908, 16
      %v954 = vrot.slane %v952, 5
      %v955 = vor.u32 %v951, %v954
      %v956 = vrot.slane %v955, 4
      %v958 = vshll.u32 %v909, 16
      %v960 = vrot.slane %v958, 5
      %v961 = vsel %vm412, %v956, %v960
      %v963 = vshrl.u32 %v910, 16
      %v965 = vrot.slane %v963, 4
      %v966 = vshll.u32 %v910, 16
      %v968 = vrot.slane %v966, 5
      %v969 = vor.u32 %v965, %v968
      %v970 = vrot.slane %v969, 4
      %v972 = vshll.u32 %v911, 16
      %v974 = vrot.slane %v972, 5
      %v975 = vsel %vm412, %v970, %v974
      %v977 = vshrl.u32 %v912, 16
      %v979 = vrot.slane %v977, 4
      %v980 = vshll.u32 %v912, 16
      %v982 = vrot.slane %v980, 5
      %v983 = vor.u32 %v979, %v982
      %v984 = vrot.slane %v983, 4
      %v986 = vshll.u32 %v913, 16
      %v988 = vrot.slane %v986, 5
      %v989 = vsel %vm412, %v984, %v988
      %v991 = vshrl.u32 %v914, 16
      %v993 = vrot.slane %v991, 4
      %v994 = vshll.u32 %v914, 16
      %v996 = vrot.slane %v994, 5
      %v997 = vor.u32 %v993, %v996
      %v998 = vrot.slane %v997, 4
      %v1000 = vshll.u32 %v915, 16
      %v1002 = vrot.slane %v1000, 5
      %v1003 = vsel %vm412, %v998, %v1002
      %v1005 = vshrl.u32 %v916, 16
      %v1007 = vrot.slane %v1005, 4
      %v1008 = vshll.u32 %v916, 16
      %v1010 = vrot.slane %v1008, 5
      %v1011 = vor.u32 %v1007, %v1010
      %v1012 = vrot.slane %v1011, 4
      %v1014 = vshll.u32 %v917, 16
      %v1016 = vrot.slane %v1014, 5
      %v1017 = vsel %vm412, %v1012, %v1016
      %v1019 = vshrl.u32 %v918, 16
      %v1021 = vrot.slane %v1019, 4
      %v1022 = vshll.u32 %v918, 16
      %v1024 = vrot.slane %v1022, 5
      %v1025 = vor.u32 %v1021, %v1024
      %v1026 = vrot.slane %v1025, 4
      %v1028 = vshll.u32 %v919, 16
      %v1030 = vrot.slane %v1028, 5
      %v1031 = vsel %vm412, %v1026, %v1030
      %v1032 = vunpack.c.l.b16 %v933
      %v1033 = vunpack.c.l.b16 %v947
      %v1034 = vunpack.c.l.b16 %v961
      %v1035 = vunpack.c.l.b16 %v975
      %v1036 = vunpack.c.l.b16 %v989
      %v1037 = vunpack.c.l.b16 %v1003
      %v1038 = vunpack.c.l.b16 %v1017
      %v1039 = vunpack.c.l.b16 %v1031
      %v1040 = vpack.c.b16 %v1033, %v1032
      %v1041 = vpack.c.b16 %v1035, %v1034
      %v1042 = vpack.c.b16 %v1037, %v1036
      %v1043 = vpack.c.b16 %v1039, %v1038
      %1044 = vrot.lane.b32.xlu0 %v1040, 32
      %v1045 = vpop.permute.xlu0 %1044
      %1046 = vrot.lane.b32.xlu0 %v1041, 32
      %v1047 = vpop.permute.xlu0 %1046
      %1048 = vrot.lane.b32.xlu0 %v1042, 32
      %v1049 = vpop.permute.xlu0 %1048
      %1050 = vrot.lane.b32.xlu0 %v1043, 32
      %v1051 = vpop.permute.xlu0 %1050
      %vm1056 = vcmask 294144
      %1057 = vst.msk [vmem:[#allocation2] sm:$0xff] %vm1056, %v1045
      %1058 = vst.msk [vmem:[#allocation2 + $0x8] sm:$0xff] %vm1056, %v1047
      %1059 = vst.msk [vmem:[#allocation2 + $0x10] sm:$0xff] %vm1056, %v1049
      %1060 = vst.msk [vmem:[#allocation2 + $0x18] sm:$0xff] %vm1056, %v1051
      %v1061 = vld [vmem:[#allocation2] sm:$0xff]
      %v1062 = vld [vmem:[#allocation2 + $0x8] sm:$0xff]
      %v1063 = vld [vmem:[#allocation2 + $0x10] sm:$0xff]
      %v1064 = vld [vmem:[#allocation2 + $0x18] sm:$0xff]
      %v1065 = vld [vmem:[%s1] sm:$0xf]
      %v1066 = vld [vmem:[%s1 + $0x4] sm:$0xf]
      %v1067 = vld [vmem:[%s1 + $0x8] sm:$0xf]
      %v1068 = vld [vmem:[%s1 + $0xc] sm:$0xf]
      %v1069 = vld [vmem:[%s1 + $0x10] sm:$0x3]
      %v1070 = vld [vmem:[%s2] sm:$0x1]
      %v1072 = vlaneseq
      %v1073 = vshrl.u32 %v1072, 7
      %v1074 = vsub.s32 0, %v1073
      %v1075 = vrot.slane %v1070, %v1074
      %v1082 = vunpack.c.l.b16 %v1065
      %v1083 = vunpack.c.l.b16 %v1066
      %v1084 = vunpack.c.l.b16 %v1067
      %v1085 = vunpack.c.l.b16 %v1068
      %v1086 = vunpack.c.l.b16 %v1069
      %v1087 = vpack.c.b16 %v1083, %v1082
      %v1088 = vpack.c.b16 %v1085, %v1084
      %v1089 = vpack.c.b16 %v1086, %v1086
      %vm1092 = vcmask 293888
      %v1094 = vsel %vm1092, %v1061, 0
      %v1097 = vsel %vm1092, %v1062, 0
      %v1100 = vsel %vm1092, %v1063, 0
      %v1103 = vsel %vm1092, %v1064, 0
      %vm1105 = vcmask 1041408
      %v1107 = vsel %vm1105, %v1089, 0
      %1109 = vmatprep.subr.bf16.mxu0 0
      %1110 = vmatpush1.bf16.msra.mxu0 %v1087
      %1111 = vmatprep.subr.bf16.mxu0 0
      %1112 = vmatpush1.bf16.msra.mxu0 %v1088
      %1113 = vmatprep.subr.bf16.mxu0 0
      %1114 = vmatpush1.bf16.msra.mxu0 %v1107
      %1115 = vmatprep.subr.bf16.mxu0 0
      %1116 = vmatpush1.bf16.msra.mxu0 0
      %1117 = vmatprep.subr.bf16.mxu0 0
      %1118 = vmatpush1.bf16.msra.mxu0 0
      %1119 = vmatprep.subr.bf16.mxu0 0
      %1120 = vmatpush1.bf16.msra.mxu0 0
      %1121 = vmatprep.subr.bf16.mxu0 0
      %1122 = vmatpush1.bf16.msra.mxu0 0
      %1123 = vmatprep.subr.bf16.mxu0 0
      %1124 = vmatpush1.bf16.msra.mxu0 0
      %1125 = vmatprep.subr.bf16.mxu0 0
      %1126 = vmatpush1.bf16.msra.mxu0 0
      %1127 = vmatprep.subr.bf16.mxu0 0
      %1128 = vmatpush1.bf16.msra.mxu0 0
      %1129 = vmatprep.subr.bf16.mxu0 0
      %1130 = vmatpush1.bf16.msra.mxu0 0
      %1131 = vmatprep.subr.bf16.mxu0 0
      %1132 = vmatpush1.bf16.msra.mxu0 0
      %1133 = vmatprep.subr.bf16.mxu0 0
      %1134 = vmatpush1.bf16.msra.mxu0 0
      %1135 = vmatprep.subr.bf16.mxu0 0
      %1136 = vmatpush1.bf16.msra.mxu0 0
      %1137 = vmatprep.subr.bf16.mxu0 0
      %1138 = vmatpush1.bf16.msra.mxu0 0
      %1139 = vmatprep.subr.bf16.mxu0 0
      %1140 = vmatpush1.bf16.msra.mxu0 0
      %1141 = vmatprep.mubr.bf16.mxu0 0
      %1142 = vmatmul.mubr.bf16.gmra.mrb[0].mxu0 %v1094
      %v1143 = vpop.f32.mrb[0].mxu0
      %v1144 = vadd.f32 %v1075, %v1143
      %v1145 = vpop.f32.mrb[0].mxu0
      %v1146 = vpop.f32.mrb[0].mxu0
      %v1147 = vadd.f32 %v1075, %v1146
      %v1148 = vpop.f32.mrb[0].mxu0
      %1149 = vmatprep.mubr.bf16.mxu0 0
      %1150 = vmatmul.mubr.bf16.gmra.mrb[0].mxu0 %v1097
      %v1151 = vpop.f32.mrb[0].mxu0
      %v1152 = vadd.f32 %v1075, %v1151
      %v1153 = vpop.f32.mrb[0].mxu0
      %v1154 = vpop.f32.mrb[0].mxu0
      %v1155 = vadd.f32 %v1075, %v1154
      %v1156 = vpop.f32.mrb[0].mxu0
      %1157 = vmatprep.mubr.bf16.mxu0 0
      %1158 = vmatmul.mubr.bf16.gmra.mrb[0].mxu0 %v1100
      %v1159 = vpop.f32.mrb[0].mxu0
      %v1160 = vadd.f32 %v1075, %v1159
      %v1161 = vpop.f32.mrb[0].mxu0
      %v1162 = vpop.f32.mrb[0].mxu0
      %v1163 = vadd.f32 %v1075, %v1162
      %v1164 = vpop.f32.mrb[0].mxu0
      %1165 = vmatprep.mubr.bf16.mxu0 0
      %1166 = vmatmul.mubr.bf16.gmra.mrb[0].mxu0 %v1103
      %v1167 = vpop.f32.mrb[0].mxu0
      %v1168 = vadd.f32 %v1075, %v1167
      %v1169 = vpop.f32.mrb[0].mxu0
      %v1170 = vpop.f32.mrb[0].mxu0
      %v1171 = vadd.f32 %v1075, %v1170
      %v1172 = vpop.f32.mrb[0].mxu0
      %1173 = vdwg.mxu0
      %v1174 = vmax.f32 %v1144, 0.0
      %v1175 = vmax.f32 %v1147, 0.0
      %v1176 = vmax.f32 %v1152, 0.0
      %v1177 = vmax.f32 %v1155, 0.0
      %v1178 = vmax.f32 %v1160, 0.0
      %v1179 = vmax.f32 %v1163, 0.0
      %v1180 = vmax.f32 %v1168, 0.0
      %v1181 = vmax.f32 %v1171, 0.0
      %v1182 = vpack.c.bf16 %v1175, %v1174
      %v1183 = vpack.c.bf16 %v1177, %v1176
      %v1184 = vpack.c.bf16 %v1179, %v1178
      %v1185 = vpack.c.bf16 %v1181, %v1180
      %v1190 = vunpack.c.l.b16 %v1182
      %v1191 = vunpack.c.h.b16 %v1182
      %v1192 = vunpack.c.l.b16 %v1183
      %v1193 = vunpack.c.h.b16 %v1183
      %v1194 = vunpack.c.l.b16 %v1184
      %v1195 = vunpack.c.h.b16 %v1184
      %v1196 = vunpack.c.l.b16 %v1185
      %v1197 = vunpack.c.h.b16 %v1185
      %v1198 = vpack.c.b16 %v1190, %v1190
      %v1199 = vpack.c.b16 %v1191, %v1191
      %v1200 = vpack.c.b16 %v1192, %v1192
      %v1201 = vpack.c.b16 %v1193, %v1193
      %v1202 = vpack.c.b16 %v1194, %v1194
      %v1203 = vpack.c.b16 %v1195, %v1195
      %v1204 = vpack.c.b16 %v1196, %v1196
      %v1205 = vpack.c.b16 %v1197, %v1197
      %1214 = vst [vmem:[%s292] sm:$0xf] %v1198
      %1215 = vst [vmem:[%s292 + $0x4] sm:$0xf] %v1199
      %1216 = vst [vmem:[%s292 + $0x8] sm:$0xf] %v1200
      %1217 = vst [vmem:[%s292 + $0xc] sm:$0xf] %v1201
      %1218 = vst [vmem:[%s292 + $0x10] sm:$0xf] %v1202
      %1219 = vst [vmem:[%s292 + $0x14] sm:$0xf] %v1203
      %1220 = vst [vmem:[%s292 + $0x18] sm:$0xf] %v1204
      %1221 = vst [vmem:[%s292 + $0x1c] sm:$0xf] %v1205
      %v1222 = vld [vmem:[%s604] sm:$0xf]
      %v1223 = vld [vmem:[%s604 + $0x8] sm:$0xf]
      %v1224 = vld [vmem:[%s604 + $0x10] sm:$0xf]
      %v1225 = vld [vmem:[%s604 + $0x18] sm:$0xf]
      %v1226 = vld [vmem:[%s604 + $0x20] sm:$0xf]
      %v1227 = vld [vmem:[%s604 + $0x28] sm:$0xf]
      %v1228 = vld [vmem:[%s604 + $0x30] sm:$0xf]
      %v1229 = vld [vmem:[%s604 + $0x38] sm:$0xf]
      %v1230 = vld [vmem:[%s3] sm:$0x3]
      %v1231 = vld [vmem:[%s4] sm:$0x1]
      %v1233 = vlaneseq
      %v1234 = vshrl.u32 %v1233, 7
      %v1235 = vsub.s32 0, %v1234
      %v1236 = vrot.slane %v1231, %v1235
      %v1246 = vunpack.c.l.b16 %v1222
      %v1247 = vunpack.c.l.b16 %v1223
      %v1248 = vunpack.c.l.b16 %v1224
      %v1249 = vunpack.c.l.b16 %v1225
      %v1250 = vunpack.c.l.b16 %v1226
      %v1251 = vunpack.c.l.b16 %v1227
      %v1252 = vunpack.c.l.b16 %v1228
      %v1253 = vunpack.c.l.b16 %v1229
      %v1254 = vpack.c.b16 %v1247, %v1246
      %v1255 = vpack.c.b16 %v1249, %v1248
      %v1256 = vpack.c.b16 %v1251, %v1250
      %v1257 = vpack.c.b16 %v1253, %v1252
      %v1259 = vsel %vm341, %v1254, 0
      %v1262 = vsel %vm341, %v1255, 0
      %v1265 = vsel %vm341, %v1256, 0
      %v1268 = vsel %vm341, %v1257, 0
      %v1271 = vsel %vm1105, %v1230, 0
      %1273 = vmatprep.subr.bf16.mxu0 0
      %1274 = vmatpush1.bf16.msra.mxu0 %v1271
      %1275 = vmatprep.subr.bf16.mxu0 0
      %1276 = vmatpush1.bf16.msra.mxu0 0
      %1277 = vmatprep.subr.bf16.mxu0 0
      %1278 = vmatpush1.bf16.msra.mxu0 0
      %1279 = vmatprep.subr.bf16.mxu0 0
      %1280 = vmatpush1.bf16.msra.mxu0 0
      %1281 = vmatprep.subr.bf16.mxu0 0
      %1282 = vmatpush1.bf16.msra.mxu0 0
      %1283 = vmatprep.subr.bf16.mxu0 0
      %1284 = vmatpush1.bf16.msra.mxu0 0
      %1285 = vmatprep.subr.bf16.mxu0 0
      %1286 = vmatpush1.bf16.msra.mxu0 0
      %1287 = vmatprep.subr.bf16.mxu0 0
      %1288 = vmatpush1.bf16.msra.mxu0 0
      %1289 = vmatprep.subr.bf16.mxu0 0
      %1290 = vmatpush1.bf16.msra.mxu0 0
      %1291 = vmatprep.subr.bf16.mxu0 0
      %1292 = vmatpush1.bf16.msra.mxu0 0
      %1293 = vmatprep.subr.bf16.mxu0 0
      %1294 = vmatpush1.bf16.msra.mxu0 0
      %1295 = vmatprep.subr.bf16.mxu0 0
      %1296 = vmatpush1.bf16.msra.mxu0 0
      %1297 = vmatprep.subr.bf16.mxu0 0
      %1298 = vmatpush1.bf16.msra.mxu0 0
      %1299 = vmatprep.subr.bf16.mxu0 0
      %1300 = vmatpush1.bf16.msra.mxu0 0
      %1301 = vmatprep.subr.bf16.mxu0 0
      %1302 = vmatpush1.bf16.msra.mxu0 0
      %1303 = vmatprep.subr.bf16.mxu0 0
      %1304 = vmatpush1.bf16.msra.mxu0 0
      %1305 = vmatprep.mubr.bf16.mxu0 0
      %1306 = vmatmul.mubr.bf16.gmra.mrb[0].mxu0 %v1259
      %v1307 = vpop.f32.mrb[0].mxu0
      %v1308 = vadd.f32 %v1236, %v1307
      %v1309 = vpop.f32.mrb[0].mxu0
      %v1310 = vpop.f32.mrb[0].mxu0
      %v1311 = vadd.f32 %v1236, %v1310
      %v1312 = vpop.f32.mrb[0].mxu0
      %1313 = vmatprep.mubr.bf16.mxu0 0
      %1314 = vmatmul.mubr.bf16.gmra.mrb[0].mxu0 %v1262
      %v1315 = vpop.f32.mrb[0].mxu0
      %v1316 = vadd.f32 %v1236, %v1315
      %v1317 = vpop.f32.mrb[0].mxu0
      %v1318 = vpop.f32.mrb[0].mxu0
      %v1319 = vadd.f32 %v1236, %v1318
      %v1320 = vpop.f32.mrb[0].mxu0
      %1321 = vmatprep.mubr.bf16.mxu0 0
      %1322 = vmatmul.mubr.bf16.gmra.mrb[0].mxu0 %v1265
      %v1323 = vpop.f32.mrb[0].mxu0
      %v1324 = vadd.f32 %v1236, %v1323
      %v1325 = vpop.f32.mrb[0].mxu0
      %v1326 = vpop.f32.mrb[0].mxu0
      %v1327 = vadd.f32 %v1236, %v1326
      %v1328 = vpop.f32.mrb[0].mxu0
      %1329 = vmatprep.mubr.bf16.mxu0 0
      %1330 = vmatmul.mubr.bf16.gmra.mrb[0].mxu0 %v1268
      %v1331 = vpop.f32.mrb[0].mxu0
      %v1332 = vadd.f32 %v1236, %v1331
      %v1333 = vpop.f32.mrb[0].mxu0
      %v1334 = vpop.f32.mrb[0].mxu0
      %v1335 = vadd.f32 %v1236, %v1334
      %v1336 = vpop.f32.mrb[0].mxu0
      %1337 = vdwg.mxu0
      %v1338 = vpack.c.bf16 %v1311, %v1308
      %v1339 = vpack.c.bf16 %v1319, %v1316
      %v1340 = vpack.c.bf16 %v1327, %v1324
      %v1341 = vpack.c.bf16 %v1335, %v1332
      %v1346 = vunpack.c.l.b16 %v1338
      %v1347 = vunpack.c.h.b16 %v1338
      %v1348 = vunpack.c.l.b16 %v1339
      %v1349 = vunpack.c.h.b16 %v1339
      %v1350 = vunpack.c.l.b16 %v1340
      %v1351 = vunpack.c.h.b16 %v1340
      %v1352 = vunpack.c.l.b16 %v1341
      %v1353 = vunpack.c.h.b16 %v1341
      %v1354 = vpack.c.b16 %v1346, %v1346
      %v1355 = vpack.c.b16 %v1347, %v1347
      %v1356 = vpack.c.b16 %v1348, %v1348
      %v1357 = vpack.c.b16 %v1349, %v1349
      %v1358 = vpack.c.b16 %v1350, %v1350
      %v1359 = vpack.c.b16 %v1351, %v1351
      %v1360 = vpack.c.b16 %v1352, %v1352
      %v1361 = vpack.c.b16 %v1353, %v1353
      %1370 = vst [vmem:[%s302] sm:$0xf] %v1354
      %1371 = vst [vmem:[%s302 + $0x4] sm:$0xf] %v1355
      %1372 = vst [vmem:[%s302 + $0x8] sm:$0xf] %v1356
      %1373 = vst [vmem:[%s302 + $0xc] sm:$0xf] %v1357
      %1374 = vst [vmem:[%s302 + $0x10] sm:$0xf] %v1358
      %1375 = vst [vmem:[%s302 + $0x14] sm:$0xf] %v1359
      %1376 = vst [vmem:[%s302 + $0x18] sm:$0xf] %v1360
      %1377 = vst [vmem:[%s302 + $0x1c] sm:$0xf] %v1361
      %s1378 = smul.u32 8, %s23
      %p1379 = scmp.lt.s32.totalorder %s22, 1
      %s1380 = scalar_select %p1379, %s22, 1
      %p1381 = scmp.lt.s32.totalorder %s1378, 7
      %s1382 = scalar_select %p1381, %s1378, 7
      %s1383 = smul.addr %s1380, 8
      %s1384 = sadd.s32 %s1382, %s1383
      %s1385 = smul.addr %s1384, 4
      %s1386 = scalar_lea.vmem %s5, %s1385
      %s1387 = smul.u32 8, %s23
      %p1388 = scmp.lt.s32.totalorder %s22, 1
      %s1389 = scalar_select %p1388, %s22, 1
      %p1390 = scmp.lt.s32.totalorder %s1387, 7
      %s1391 = scalar_select %p1390, %s1387, 7
      %s1392 = smul.addr %s1389, 8
      %s1393 = sadd.s32 %s1391, %s1392
      %s1394 = smul.addr %s1393, 4
      %s1395 = scalar_lea.vmem %s6, %s1394
      // Predicated region
      $region41: #{basic_block_forward.2} parent=39 // pred_check
        %p1396 = pneg %p160
      $region42: #{basic_block_forward.2} parent=39 // pred_check_branch
        %1398 = sbr.rel (%p1396) target = $region44
      $region43: #{basic_block_forward.2} parent=39 // pred_region
        %s1399 = smul.u32 8, %s23
      $region44: #{basic_block_forward.2} parent=39 // pred_fallthru
        _
      // Predicated region
      $region45: #{basic_block_forward.2} parent=39 // pred_check
        %p1400 = pneg %p188
      $region46: #{basic_block_forward.2} parent=39 // pred_check_branch
        %1402 = sbr.rel (%p1400) target = $region48
      $region47: #{basic_block_forward.2} parent=39 // pred_region
        %s1403 = smul.u32 8, %s23
      $region48: #{basic_block_forward.2} parent=39 // pred_fallthru
        _
    $region40: #{basic_block_forward.2} parent=5 // pred_fallthru
      _
    %p1404 = scmp.le.s32.totalorder 2, %s13
    // Predicated region
    $region49: #{basic_block_forward.2} parent=5 // pred_check
      %p1405 = pneg %p1404
    $region50: #{basic_block_forward.2} parent=5 // pred_check_branch
      %1407 = sbr.rel (%p1405) target = $region52
    $region51: #{basic_block_forward.2} parent=5 // pred_region
      %s1408 = ssub.s32 %s13, 2
      // Predicated region
      $region53: #{basic_block_forward.2} parent=51 // pred_check
        %p1409 = pneg %p166
      $region54: #{basic_block_forward.2} parent=51 // pred_check_branch
        %1411 = sbr.rel (%p1409) target = $region56
      $region55: #{basic_block_forward.2} parent=51 // pred_region
        %s1412 = smul.u32 8, %s25
        %p1413 = scmp.lt.s32.totalorder %s24, 1
        %s1414 = scalar_select %p1413, %s24, 1
        %p1415 = scmp.lt.s32.totalorder %s1412, 7
        %s1416 = scalar_select %p1415, %s1412, 7
        %s1417 = smul.addr %s1414, 8
        %s1418 = sadd.s32 %s1416, %s1417
        %s1419 = smul.addr %s1418, 4
        %s1420 = scalar_lea.vmem %s5, %s1419
      $region56: #{basic_block_forward.2} parent=51 // pred_fallthru
        _
      // Predicated region
      $region57: #{basic_block_forward.2} parent=51 // pred_check
        %p1421 = pneg %p194
      $region58: #{basic_block_forward.2} parent=51 // pred_check_branch
        %1423 = sbr.rel (%p1421) target = $region60
      $region59: #{basic_block_forward.2} parent=51 // pred_region
        %s1424 = smul.u32 8, %s25
        %p1425 = scmp.lt.s32.totalorder %s24, 1
        %s1426 = scalar_select %p1425, %s24, 1
        %p1427 = scmp.lt.s32.totalorder %s1424, 7
        %s1428 = scalar_select %p1427, %s1424, 7
        %s1429 = smul.addr %s1426, 8
        %s1430 = sadd.s32 %s1428, %s1429
        %s1431 = smul.addr %s1430, 4
        %s1432 = scalar_lea.vmem %s6, %s1431
      $region60: #{basic_block_forward.2} parent=51 // pred_fallthru
        _
    $region52: #{basic_block_forward.2} parent=5 // pred_fallthru
      _
  $region6: #{basic_block_forward.2} parent=0 // loop_footer
    %s17 = sadd.s32 1, %s13
  $region7: #{basic_block_forward.2} parent=0 // loop_footer_branch
    %12 = sbr.rel target = $region3
  $region8: #{basic_block_forward.2} parent=0 // loop_exit
    _

// kernel: basic_block_forward.3
$region0: #{basic_block_forward.3}
  #allocation0 [shape = 'u32[]', space=smem, size = 0x4, offset = 0x4, fixed_abs, tag = 'smem constant byte address 0x4 - core index']
  #allocation1 [shape = 'u32[144,128]{1,0:T(1,128)}', space=vmem, size = 0x12000, scoped, tag = 'internal scratch']
  #allocation2 [shape = 'bf16[10,10,128]{2,1,0:T(8,128)(2,1)}', space=vmem, size = 0xa000, scoped, tag = 'scratch operand']
  #allocation3 [shape = 'bf16[64,1280]{1,0:T(16,128)(2,1)}', space=vmem, size = 0x28000, scoped, tag = 'scratch operand']
  %s0 = inlined_call_operand.vmem [shape: bf16[2,64,128], index: 0, kind: input, shape index: {}]
  %s1 = inlined_call_operand.vmem [shape: bf16[1280,128], index: 1, kind: input, shape index: {}]
  %s2 = inlined_call_operand.vmem [shape: f32[1,128], index: 2, kind: input, shape index: {}]
  %s3 = inlined_call_operand.vmem [shape: bf16[2,64,128], index: 3, kind: input, shape index: {}]
  %s4 = inlined_call_operand.vmem [shape: f32[2,64,128], index: 4, kind: output, shape index: {}]
  %s5 = sld [smem:[#allocation0]]
  $region53: #{basic_block_forward.3} parent=0
    _
  %s7 = ssub.s32 1, %s5
  %s8 = scalar_select 0, %s7, %s5
  loop: start=0, step=1, limit=4
  $region2: #{basic_block_forward.3} parent=0 // loop_pre_header
    _
  $region3: #{basic_block_forward.3} parent=0 // loop_header
    %s10 = sphi 0, %s14
    %p11 = scmp.ge.s32.totalorder %s10, 4
    %s17 = sphi 0, %s29
    %s18 = sphi 0, %s25
    %s19 = sphi 0, %s17
    %s20 = sphi 0, %s18
    %s21 = sphi 0, %s19
    %s22 = sphi 0, %s20
    %s32 = sphi 0, %s34
    %s35 = sphi 0, %s32
    %s36 = sphi 0, %s35
    %s52 = sphi 0, %s36
    %s56 = sphi 0, %s56
    %s58 = sphi 0, %s56
    %s59 = sphi 0, %s58
    %s73 = sphi 0, %s59
    %s77 = sphi 0, %s77
    %s79 = sphi 0, %s77
    %s80 = sphi 0, %s79
    %s94 = sphi 0, %s80
    %s102 = sphi 0, %s104
    %s105 = sphi 0, %s102
    %s106 = sphi 0, %s105
    %s122 = sphi 0, %s106
    %s130 = sphi 0, %s132
    %s133 = sphi 0, %s130
    %s134 = sphi 0, %s133
    %s150 = sphi 0, %s134
  $region4: #{basic_block_forward.3} parent=0 // loop_header_branch
    %13 = sbr.rel (%p11) target = $region8
  $region5: #{basic_block_forward.3} parent=0 // loop_body
    %s15 = ssub.s32 %s10, 1
    %s16 = ssub.s32 %s10, 2
    %s23 = sadd.s32 1, %s18
    %p24 = scmp.ge.s32.totalorder %s23, 1
    %s25 = scalar_select %p24, 0, %s23
    %s26 = sadd.s32 1, %s17
    %s27 = scalar_select %p24, %s26, %s17
    %p28 = scmp.ge.s32.totalorder %s27, 2
    %s29 = scalar_select %p28, 0, %s27
    %s30 = ssub.s32 %s17, %s29
    %p31 = scmp.eq.s32.totalorder %s30, 0
    %s33 = sadd.s32 %s32, 1
    %s34 = scalar_select %p31, %s32, %s33
    %p37 = pneg %p31
    %p38 = scmp.eq.s32.totalorder %s10, 1
    %p39 = por %p37, %p38
    %p40 = scmp.ne.s32.totalorder %s32, %s35
    %p41 = scmp.eq.s32.totalorder %s10, 0
    %p42 = por %p40, %p41
    %p43 = scmp.ne.s32.totalorder %s32, %s35
    %p44 = scmp.eq.s32.totalorder %s15, 1
    %p45 = por %p43, %p44
    %p46 = scmp.ne.s32.totalorder %s35, %s36
    %p47 = scmp.eq.s32.totalorder %s15, 0
    %p48 = por %p46, %p47
    %p49 = scmp.ne.s32.totalorder %s35, %s36
    %p50 = scmp.eq.s32.totalorder %s16, 1
    %p51 = por %p49, %p50
    %p53 = scmp.ne.s32.totalorder %s36, %s52
    %p54 = scmp.eq.s32.totalorder %s16, 0
    %p55 = por %p53, %p54
    %s57 = sadd.s32 %s56, 1
    %p60 = scmp.eq.s32.totalorder %s10, 1
    %p61 = scmp.ne.s32.totalorder %s56, %s58
    %p62 = scmp.eq.s32.totalorder %s10, 0
    %p63 = por %p61, %p62
    %p64 = scmp.ne.s32.totalorder %s56, %s58
    %p65 = scmp.eq.s32.totalorder %s15, 1
    %p66 = por %p64, %p65
    %p67 = scmp.ne.s32.totalorder %s58, %s59
    %p68 = scmp.eq.s32.totalorder %s15, 0
    %p69 = por %p67, %p68
    %p70 = scmp.ne.s32.totalorder %s58, %s59
    %p71 = scmp.eq.s32.totalorder %s16, 1
    %p72 = por %p70, %p71
    %p74 = scmp.ne.s32.totalorder %s59, %s73
    %p75 = scmp.eq.s32.totalorder %s16, 0
    %p76 = por %p74, %p75
    %s78 = sadd.s32 %s77, 1
    %p81 = scmp.eq.s32.totalorder %s10, 1
    %p82 = scmp.ne.s32.totalorder %s77, %s79
    %p83 = scmp.eq.s32.totalorder %s10, 0
    %p84 = por %p82, %p83
    %p85 = scmp.ne.s32.totalorder %s77, %s79
    %p86 = scmp.eq.s32.totalorder %s15, 1
    %p87 = por %p85, %p86
    %p88 = scmp.ne.s32.totalorder %s79, %s80
    %p89 = scmp.eq.s32.totalorder %s15, 0
    %p90 = por %p88, %p89
    %p91 = scmp.ne.s32.totalorder %s79, %s80
    %p92 = scmp.eq.s32.totalorder %s16, 1
    %p93 = por %p91, %p92
    %p95 = scmp.ne.s32.totalorder %s80, %s94
    %p96 = scmp.eq.s32.totalorder %s16, 0
    %p97 = por %p95, %p96
    %s98 = ssub.s32 %s17, %s29
    %s99 = ssub.s32 %s18, %s25
    %s100 = sor.u32 %s98, %s99
    %p101 = scmp.eq.s32.totalorder %s100, 0
    %s103 = sadd.s32 %s102, 1
    %s104 = scalar_select %p101, %s102, %s103
    %p107 = pneg %p101
    %p108 = scmp.eq.s32.totalorder %s10, 1
    %p109 = por %p107, %p108
    %p110 = scmp.ne.s32.totalorder %s102, %s105
    %p111 = scmp.eq.s32.totalorder %s10, 0
    %p112 = por %p110, %p111
    %p113 = scmp.ne.s32.totalorder %s102, %s105
    %p114 = scmp.eq.s32.totalorder %s15, 1
    %p115 = por %p113, %p114
    %p116 = scmp.ne.s32.totalorder %s105, %s106
    %p117 = scmp.eq.s32.totalorder %s15, 0
    %p118 = por %p116, %p117
    %p119 = scmp.ne.s32.totalorder %s105, %s106
    %p120 = scmp.eq.s32.totalorder %s16, 1
    %p121 = por %p119, %p120
    %p123 = scmp.ne.s32.totalorder %s106, %s122
    %p124 = scmp.eq.s32.totalorder %s16, 0
    %p125 = por %p123, %p124
    %s126 = ssub.s32 %s17, %s29
    %s127 = ssub.s32 %s18, %s25
    %s128 = sor.u32 %s126, %s127
    %p129 = scmp.eq.s32.totalorder %s128, 0
    %s131 = sadd.s32 %s130, 1
    %s132 = scalar_select %p129, %s130, %s131
    %p135 = pneg %p129
    %p136 = scmp.eq.s32.totalorder %s10, 1
    %p137 = por %p135, %p136
    %p138 = scmp.ne.s32.totalorder %s130, %s133
    %p139 = scmp.eq.s32.totalorder %s10, 0
    %p140 = por %p138, %p139
    %p141 = scmp.ne.s32.totalorder %s130, %s133
    %p142 = scmp.eq.s32.totalorder %s15, 1
    %p143 = por %p141, %p142
    %p144 = scmp.ne.s32.totalorder %s133, %s134
    %p145 = scmp.eq.s32.totalorder %s15, 0
    %p146 = por %p144, %p145
    %p147 = scmp.ne.s32.totalorder %s133, %s134
    %p148 = scmp.eq.s32.totalorder %s16, 1
    %p149 = por %p147, %p148
    %p151 = scmp.ne.s32.totalorder %s134, %s150
    %p152 = scmp.eq.s32.totalorder %s16, 0
    %p153 = por %p151, %p152
    %p154 = scmp.le.s32.totalorder 1, %s10
    %p155 = scmp.lt.s32.totalorder %s10, 3
    %p156 = pnand %p154, %p155
    %p157 = pneg %p156
    // Predicated region
    $region9: #{basic_block_forward.3} parent=5 // pred_check
      _
    $region10: #{basic_block_forward.3} parent=5 // pred_check_branch
      %159 = sbr.rel (%p156) target = $region12
    $region11: #{basic_block_forward.3} parent=5 // pred_region
      %s160 = ssub.s32 %s10, 1
      // Predicated region
      $region13: #{basic_block_forward.3} parent=11 // pred_check
        %p161 = pneg %p69
      $region14: #{basic_block_forward.3} parent=11 // pred_check_branch
        %163 = sbr.rel (%p161) target = $region16
      $region15: #{basic_block_forward.3} parent=11 // pred_region
        _
      $region16: #{basic_block_forward.3} parent=11 // pred_fallthru
        _
      // Predicated region
      $region17: #{basic_block_forward.3} parent=11 // pred_check
        %p164 = pneg %p90
      $region18: #{basic_block_forward.3} parent=11 // pred_check_branch
        %166 = sbr.rel (%p164) target = $region20
      $region19: #{basic_block_forward.3} parent=11 // pred_region
        _
      $region20: #{basic_block_forward.3} parent=11 // pred_fallthru
        _
    $region12: #{basic_block_forward.3} parent=5 // pred_fallthru
      _
    %p167 = scmp.lt.s32.totalorder %s10, 2
    // Predicated region
    $region21: #{basic_block_forward.3} parent=5 // pred_check
      %p168 = pneg %p167
    $region22: #{basic_block_forward.3} parent=5 // pred_check_branch
      %170 = sbr.rel (%p168) target = $region24
    $region23: #{basic_block_forward.3} parent=5 // pred_region
      // Predicated region
      $region25: #{basic_block_forward.3} parent=23 // pred_check
        %p171 = pneg %p42
      $region26: #{basic_block_forward.3} parent=23 // pred_check_branch
        %173 = sbr.rel (%p171) target = $region28
      $region27: #{basic_block_forward.3} parent=23 // pred_region
        %p174 = scmp.lt.s32.totalorder %s17, 1
        %s175 = scalar_select %p174, %s17, 1
        %s176 = smul.addr %s175, 8
        %s177 = smul.addr %s176, 4
        %s178 = scalar_lea.vmem %s0, %s177
      $region28: #{basic_block_forward.3} parent=23 // pred_fallthru
        _
      // Predicated region
      $region29: #{basic_block_forward.3} parent=23 // pred_check
        %p179 = pneg %p112
      $region30: #{basic_block_forward.3} parent=23 // pred_check_branch
        %181 = sbr.rel (%p179) target = $region32
      $region31: #{basic_block_forward.3} parent=23 // pred_region
        %s182 = smul.u32 8, %s18
        %p183 = scmp.lt.s32.totalorder %s17, 1
        %s184 = scalar_select %p183, %s17, 1
        %p185 = scmp.lt.s32.totalorder %s182, 7
        %s186 = scalar_select %p185, %s182, 7
        %s187 = smul.addr %s184, 8
        %s188 = sadd.s32 %s186, %s187
        %s189 = smul.addr %s188, 4
        %s190 = scalar_lea.vmem %s3, %s189
        %s191 = smul.u32 8, %s18
      $region32: #{basic_block_forward.3} parent=23 // pred_fallthru
        _
    $region24: #{basic_block_forward.3} parent=5 // pred_fallthru
      _
    %p192 = scmp.le.s32.totalorder 1, %s10
    %p193 = scmp.lt.s32.totalorder %s10, 3
    %p194 = pnand %p192, %p193
    %p195 = pneg %p194
    // Predicated region
    $region33: #{basic_block_forward.3} parent=5 // pred_check
      _
    $region34: #{basic_block_forward.3} parent=5 // pred_check_branch
      %197 = sbr.rel (%p194) target = $region36
    $region35: #{basic_block_forward.3} parent=5 // pred_region
      %s198 = ssub.s32 %s10, 1
      %p199 = scmp.lt.s32.totalorder %s19, 1
      %s200 = scalar_select %p199, %s19, 1
      %s201 = smul.addr %s200, 8
      %s202 = smul.addr %s201, 4
      %s203 = scalar_lea.vmem %s0, %s202
      %p204 = pneg %p48
      %p205 = pneg %p45
      %p206 = pneg %p69
      %p207 = pneg %p66
      %p208 = pneg %p90
      %p209 = pneg %p87
      %s210 = smul.u32 8, %s20
      %p211 = scmp.lt.s32.totalorder %s19, 1
      %s212 = scalar_select %p211, %s19, 1
      %p213 = scmp.lt.s32.totalorder %s210, 7
      %s214 = scalar_select %p213, %s210, 7
      %s215 = smul.addr %s212, 8
      %s216 = sadd.s32 %s214, %s215
      %s217 = smul.addr %s216, 4
      %s218 = scalar_lea.vmem %s3, %s217
      %p219 = pneg %p118
      %p220 = pneg %p115
      %p221 = pneg %p146
      %p222 = pneg %p143
      %s223 = smul.u32 8, %s20
      %p224 = scmp.lt.s32.totalorder %s19, 1
      %s225 = scalar_select %p224, %s19, 1
      %p226 = scmp.lt.s32.totalorder %s223, 7
      %s227 = scalar_select %p226, %s223, 7
      %s228 = smul.addr %s225, 8
      %s229 = sadd.s32 %s227, %s228
      %s230 = smul.addr %s229, 8
      %s231 = scalar_lea.vmem %s4, %s230
      %p232 = scmp.lt.s32.totalorder %s19, 1
      %s233 = scalar_select %p232, %s19, 1
      %s234 = smul.addr %s233, 8
      %s235 = smul.addr %s234, 4
      %s236 = scalar_lea.vmem %s0, %s235
      %s237 = smul.u32 8, %s20
      %p238 = scmp.lt.s32.totalorder %s19, 1
      %s239 = scalar_select %p238, %s19, 1
      %p240 = scmp.lt.s32.totalorder %s237, 7
      %s241 = scalar_select %p240, %s237, 7
      %s242 = smul.addr %s239, 8
      %s243 = sadd.s32 %s241, %s242
      %s244 = smul.addr %s243, 4
      %s245 = scalar_lea.vmem %s3, %s244
      %s246 = smul.u32 8, %s20
      %s247 = smul.u32 8, %s20
      %p248 = scmp.lt.s32.totalorder %s19, 1
      %s249 = scalar_select %p248, %s19, 1
      %p250 = scmp.lt.s32.totalorder %s247, 7
      %s251 = scalar_select %p250, %s247, 7
      %s252 = smul.addr %s249, 8
      %s253 = sadd.s32 %s251, %s252
      %s254 = smul.addr %s253, 8
      %s255 = scalar_lea.vmem %s4, %s254
      %s256 = smul.u32 8, %s20
      %p258 = scmp.eq.s32.totalorder %s20, 0
      // Predicated region
      $region37: #{basic_block_forward.3} parent=35 // pred_check
        %p259 = pneg %p258
      $region38: #{basic_block_forward.3} parent=35 // pred_check_branch
        %261 = sbr.rel (%p259) target = $region40
      $region39: #{basic_block_forward.3} parent=35 // pred_region
        %262 = vst [vmem:[#allocation2] sm:$0xf] 0
        %263 = vst [vmem:[#allocation2 + $0x4] sm:$0x1] 0
        %264 = vst [vmem:[#allocation2 + $0x8] sm:$0xf] 0
        %265 = vst [vmem:[#allocation2 + $0xc] sm:$0x1] 0
        %266 = vst [vmem:[#allocation2 + $0x10] sm:$0xf] 0
        %267 = vst [vmem:[#allocation2 + $0x14] sm:$0x1] 0
        %268 = vst [vmem:[#allocation2 + $0x18] sm:$0xf] 0
        %269 = vst [vmem:[#allocation2 + $0x1c] sm:$0x1] 0
        %270 = vst [vmem:[#allocation2 + $0x20] sm:$0xf] 0
        %271 = vst [vmem:[#allocation2 + $0x24] sm:$0x1] 0
        %272 = vst [vmem:[#allocation2 + $0x28] sm:$0xf] 0
        %273 = vst [vmem:[#allocation2 + $0x2c] sm:$0x1] 0
        %274 = vst [vmem:[#allocation2 + $0x30] sm:$0xf] 0
        %275 = vst [vmem:[#allocation2 + $0x34] sm:$0x1] 0
        %276 = vst [vmem:[#allocation2 + $0x38] sm:$0xf] 0
        %277 = vst [vmem:[#allocation2 + $0x3c] sm:$0x1] 0
        %278 = vst [vmem:[#allocation2 + $0x40] sm:$0xf] 0
        %279 = vst [vmem:[#allocation2 + $0x44] sm:$0x1] 0
        %280 = vst [vmem:[#allocation2 + $0x48] sm:$0xf] 0
        %281 = vst [vmem:[#allocation2 + $0x4c] sm:$0x1] 0
        %v282 = vld [vmem:[%s236] sm:$0xf]
        %v284 = vshrl.u32 %v282, 16
        %v286 = vrot.slane %v284, 7
        %v287 = vshll.u32 %v282, 16
        %v289 = vor.u32 %v286, %v287
        %v290 = vrot.slane %v286, 4
        %s293 = scalar_lea.vmem [#allocation2], 8
        %vm294 = vcmask 1043456
        %vm295 = vsmask.f32 7938
        %vm296 = vmand %vm294, %vm295
        %v297 = vld [vmem:[%s293] sm:$0xf]
        %v298 = vsel %vm296, %v289, %v297
        %299 = vst [vmem:[%s293] sm:$0xf] %v298
        %vm300 = vcmask 1040384
        %vm301 = vsmask.f32 256
        %vm302 = vmand %vm300, %vm301
        %v303 = vld [vmem:[%s293 + $0x4] sm:$0x1]
        %v304 = vsel %vm302, %v290, %v303
        %305 = vst [vmem:[%s293 + $0x4] sm:$0x1] %v304
        %v306 = vld [vmem:[%s236 + $0x4] sm:$0xf]
        %v308 = vshrl.u32 %v306, 16
        %v310 = vrot.slane %v308, 7
        %v311 = vshll.u32 %v306, 16
        %v313 = vor.u32 %v310, %v311
        %v314 = vrot.slane %v310, 4
        %s317 = scalar_lea.vmem [#allocation2], 16
        %v318 = vld [vmem:[%s317] sm:$0xf]
        %v319 = vsel %vm296, %v313, %v318
        %320 = vst [vmem:[%s317] sm:$0xf] %v319
        %v321 = vld [vmem:[%s317 + $0x4] sm:$0x1]
        %v322 = vsel %vm302, %v314, %v321
        %323 = vst [vmem:[%s317 + $0x4] sm:$0x1] %v322
        %v324 = vld [vmem:[%s236 + $0x8] sm:$0xf]
        %v326 = vshrl.u32 %v324, 16
        %v328 = vrot.slane %v326, 7
        %v329 = vshll.u32 %v324, 16
        %v331 = vor.u32 %v328, %v329
        %v332 = vrot.slane %v328, 4
        %s335 = scalar_lea.vmem [#allocation2], 24
        %v336 = vld [vmem:[%s335] sm:$0xf]
        %v337 = vsel %vm296, %v331, %v336
        %338 = vst [vmem:[%s335] sm:$0xf] %v337
        %v339 = vld [vmem:[%s335 + $0x4] sm:$0x1]
        %v340 = vsel %vm302, %v332, %v339
        %341 = vst [vmem:[%s335 + $0x4] sm:$0x1] %v340
        %v342 = vld [vmem:[%s236 + $0xc] sm:$0xf]
        %v344 = vshrl.u32 %v342, 16
        %v346 = vrot.slane %v344, 7
        %v347 = vshll.u32 %v342, 16
        %v349 = vor.u32 %v346, %v347
        %v350 = vrot.slane %v346, 4
        %s353 = scalar_lea.vmem [#allocation2], 32
        %v354 = vld [vmem:[%s353] sm:$0xf]
        %v355 = vsel %vm296, %v349, %v354
        %356 = vst [vmem:[%s353] sm:$0xf] %v355
        %v357 = vld [vmem:[%s353 + $0x4] sm:$0x1]
        %v358 = vsel %vm302, %v350, %v357
        %359 = vst [vmem:[%s353 + $0x4] sm:$0x1] %v358
        %v360 = vld [vmem:[%s236 + $0x10] sm:$0xf]
        %v362 = vshrl.u32 %v360, 16
        %v364 = vrot.slane %v362, 7
        %v365 = vshll.u32 %v360, 16
        %v367 = vor.u32 %v364, %v365
        %v368 = vrot.slane %v364, 4
        %s371 = scalar_lea.vmem [#allocation2], 40
        %v372 = vld [vmem:[%s371] sm:$0xf]
        %v373 = vsel %vm296, %v367, %v372
        %374 = vst [vmem:[%s371] sm:$0xf] %v373
        %v375 = vld [vmem:[%s371 + $0x4] sm:$0x1]
        %v376 = vsel %vm302, %v368, %v375
        %377 = vst [vmem:[%s371 + $0x4] sm:$0x1] %v376
        %v378 = vld [vmem:[%s236 + $0x14] sm:$0xf]
        %v380 = vshrl.u32 %v378, 16
        %v382 = vrot.slane %v380, 7
        %v383 = vshll.u32 %v378, 16
        %v385 = vor.u32 %v382, %v383
        %v386 = vrot.slane %v382, 4
        %s389 = scalar_lea.vmem [#allocation2], 48
        %v390 = vld [vmem:[%s389] sm:$0xf]
        %v391 = vsel %vm296, %v385, %v390
        %392 = vst [vmem:[%s389] sm:$0xf] %v391
        %v393 = vld [vmem:[%s389 + $0x4] sm:$0x1]
        %v394 = vsel %vm302, %v386, %v393
        %395 = vst [vmem:[%s389 + $0x4] sm:$0x1] %v394
        %v396 = vld [vmem:[%s236 + $0x18] sm:$0xf]
        %v398 = vshrl.u32 %v396, 16
        %v400 = vrot.slane %v398, 7
        %v401 = vshll.u32 %v396, 16
        %v403 = vor.u32 %v400, %v401
        %v404 = vrot.slane %v400, 4
        %s407 = scalar_lea.vmem [#allocation2], 56
        %v408 = vld [vmem:[%s407] sm:$0xf]
        %v409 = vsel %vm296, %v403, %v408
        %410 = vst [vmem:[%s407] sm:$0xf] %v409
        %v411 = vld [vmem:[%s407 + $0x4] sm:$0x1]
        %v412 = vsel %vm302, %v404, %v411
        %413 = vst [vmem:[%s407 + $0x4] sm:$0x1] %v412
        %v414 = vld [vmem:[%s236 + $0x1c] sm:$0xf]
        %v416 = vshrl.u32 %v414, 16
        %v418 = vrot.slane %v416, 7
        %v419 = vshll.u32 %v414, 16
        %v421 = vor.u32 %v418, %v419
        %v422 = vrot.slane %v418, 4
        %s425 = scalar_lea.vmem [#allocation2], 64
        %v426 = vld [vmem:[%s425] sm:$0xf]
        %v427 = vsel %vm296, %v421, %v426
        %428 = vst [vmem:[%s425] sm:$0xf] %v427
        %v429 = vld [vmem:[%s425 + $0x4] sm:$0x1]
        %v430 = vsel %vm302, %v422, %v429
        %431 = vst [vmem:[%s425 + $0x4] sm:$0x1] %v430
      $region40: #{basic_block_forward.3} parent=35 // pred_fallthru
        _
      %s432 = smul.u32 %s20, 8
      %s433 = smul.u32 %s432, 2
      %s434 = smul.addr %s433, 4
      %s435 = scalar_lea.vmem [#allocation2], %s434
      %v436 = vld [vmem:[%s435] sm:$0xf]
      %v437 = vld [vmem:[%s435 + $0x8] sm:$0xf]
      %v438 = vld [vmem:[%s435 + $0x10] sm:$0xf]
      %v439 = vld [vmem:[%s435 + $0x18] sm:$0xf]
      %v440 = vld [vmem:[%s435 + $0x20] sm:$0xf]
      %v441 = vld [vmem:[%s435 + $0x28] sm:$0xf]
      %v442 = vld [vmem:[%s435 + $0x30] sm:$0xf]
      %v443 = vld [vmem:[%s435 + $0x38] sm:$0xf]
      %v452 = vunpack.c.l.b16 %v436
      %v453 = vunpack.c.l.b16 %v437
      %v454 = vunpack.c.l.b16 %v438
      %v455 = vunpack.c.l.b16 %v439
      %v456 = vunpack.c.l.b16 %v440
      %v457 = vunpack.c.l.b16 %v441
      %v458 = vunpack.c.l.b16 %v442
      %v459 = vunpack.c.l.b16 %v443
      %v460 = vpack.c.b16 %v453, %v452
      %v461 = vpack.c.b16 %v455, %v454
      %v462 = vpack.c.b16 %v457, %v456
      %v463 = vpack.c.b16 %v459, %v458
      %468 = vst [vmem:[#allocation3] sm:$0xff] %v460
      %469 = vst [vmem:[#allocation3 + $0x50] sm:$0xff] %v461
      %470 = vst [vmem:[#allocation3 + $0xa0] sm:$0xff] %v462
      %471 = vst [vmem:[#allocation3 + $0xf0] sm:$0xff] %v463
      %v472 = vld [vmem:[%s435] sm:$0xf]
      %v473 = vld [vmem:[%s435 + $0x4] sm:$0x1]
      %v474 = vld [vmem:[%s435 + $0x8] sm:$0xf]
      %v475 = vld [vmem:[%s435 + $0xc] sm:$0x1]
      %v476 = vld [vmem:[%s435 + $0x10] sm:$0xf]
      %v477 = vld [vmem:[%s435 + $0x14] sm:$0x1]
      %v478 = vld [vmem:[%s435 + $0x18] sm:$0xf]
      %v479 = vld [vmem:[%s435 + $0x1c] sm:$0x1]
      %v480 = vld [vmem:[%s435 + $0x20] sm:$0xf]
      %v481 = vld [vmem:[%s435 + $0x24] sm:$0x1]
      %v482 = vld [vmem:[%s435 + $0x28] sm:$0xf]
      %v483 = vld [vmem:[%s435 + $0x2c] sm:$0x1]
      %v484 = vld [vmem:[%s435 + $0x30] sm:$0xf]
      %v485 = vld [vmem:[%s435 + $0x34] sm:$0x1]
      %v486 = vld [vmem:[%s435 + $0x38] sm:$0xf]
      %v487 = vld [vmem:[%s435 + $0x3c] sm:$0x1]
      %vm488 = vsmask.f32 3328
      %vm489 = vsmask.f32 7440
      %vm490 = vmor %vm488, %vm489
      %v492 = vshrl.u32 %v472, 16
      %v494 = vrot.slane %v492, 4
      %v495 = vshll.u32 %v472, 16
      %v497 = vrot.slane %v495, 5
      %v498 = vor.u32 %v494, %v497
      %v499 = vrot.slane %v498, 4
      %v501 = vshll.u32 %v473, 16
      %v503 = vrot.slane %v501, 5
      %v504 = vsel %vm490, %v499, %v503
      %v506 = vshrl.u32 %v474, 16
      %v508 = vrot.slane %v506, 4
      %v509 = vshll.u32 %v474, 16
      %v511 = vrot.slane %v509, 5
      %v512 = vor.u32 %v508, %v511
      %v513 = vrot.slane %v512, 4
      %v515 = vshll.u32 %v475, 16
      %v517 = vrot.slane %v515, 5
      %v518 = vsel %vm490, %v513, %v517
      %v520 = vshrl.u32 %v476, 16
      %v522 = vrot.slane %v520, 4
      %v523 = vshll.u32 %v476, 16
      %v525 = vrot.slane %v523, 5
      %v526 = vor.u32 %v522, %v525
      %v527 = vrot.slane %v526, 4
      %v529 = vshll.u32 %v477, 16
      %v531 = vrot.slane %v529, 5
      %v532 = vsel %vm490, %v527, %v531
      %v534 = vshrl.u32 %v478, 16
      %v536 = vrot.slane %v534, 4
      %v537 = vshll.u32 %v478, 16
      %v539 = vrot.slane %v537, 5
      %v540 = vor.u32 %v536, %v539
      %v541 = vrot.slane %v540, 4
      %v543 = vshll.u32 %v479, 16
      %v545 = vrot.slane %v543, 5
      %v546 = vsel %vm490, %v541, %v545
      %v548 = vshrl.u32 %v480, 16
      %v550 = vrot.slane %v548, 4
      %v551 = vshll.u32 %v480, 16
      %v553 = vrot.slane %v551, 5
      %v554 = vor.u32 %v550, %v553
      %v555 = vrot.slane %v554, 4
      %v557 = vshll.u32 %v481, 16
      %v559 = vrot.slane %v557, 5
      %v560 = vsel %vm490, %v555, %v559
      %v562 = vshrl.u32 %v482, 16
      %v564 = vrot.slane %v562, 4
      %v565 = vshll.u32 %v482, 16
      %v567 = vrot.slane %v565, 5
      %v568 = vor.u32 %v564, %v567
      %v569 = vrot.slane %v568, 4
      %v571 = vshll.u32 %v483, 16
      %v573 = vrot.slane %v571, 5
      %v574 = vsel %vm490, %v569, %v573
      %v576 = vshrl.u32 %v484, 16
      %v578 = vrot.slane %v576, 4
      %v579 = vshll.u32 %v484, 16
      %v581 = vrot.slane %v579, 5
      %v582 = vor.u32 %v578, %v581
      %v583 = vrot.slane %v582, 4
      %v585 = vshll.u32 %v485, 16
      %v587 = vrot.slane %v585, 5
      %v588 = vsel %vm490, %v583, %v587
      %v590 = vshrl.u32 %v486, 16
      %v592 = vrot.slane %v590, 4
      %v593 = vshll.u32 %v486, 16
      %v595 = vrot.slane %v593, 5
      %v596 = vor.u32 %v592, %v595
      %v597 = vrot.slane %v596, 4
      %v599 = vshll.u32 %v487, 16
      %v601 = vrot.slane %v599, 5
      %v602 = vsel %vm490, %v597, %v601
      %v603 = vunpack.c.l.b16 %v504
      %v604 = vunpack.c.l.b16 %v518
      %v605 = vunpack.c.l.b16 %v532
      %v606 = vunpack.c.l.b16 %v546
      %v607 = vunpack.c.l.b16 %v560
      %v608 = vunpack.c.l.b16 %v574
      %v609 = vunpack.c.l.b16 %v588
      %v610 = vunpack.c.l.b16 %v602
      %v611 = vpack.c.b16 %v604, %v603
      %v612 = vpack.c.b16 %v606, %v605
      %v613 = vpack.c.b16 %v608, %v607
      %v614 = vpack.c.b16 %v610, %v609
      %619 = vst [vmem:[#allocation3 + $0x8] sm:$0xff] %v611
      %620 = vst [vmem:[#allocation3 + $0x58] sm:$0xff] %v612
      %621 = vst [vmem:[#allocation3 + $0xa8] sm:$0xff] %v613
      %622 = vst [vmem:[#allocation3 + $0xf8] sm:$0xff] %v614
      %v623 = vld [vmem:[%s435] sm:$0xe]
      %v624 = vld [vmem:[%s435 + $0x4] sm:$0x1]
      %v625 = vld [vmem:[%s435 + $0x8] sm:$0xe]
      %v626 = vld [vmem:[%s435 + $0xc] sm:$0x1]
      %v627 = vld [vmem:[%s435 + $0x10] sm:$0xe]
      %v628 = vld [vmem:[%s435 + $0x14] sm:$0x1]
      %v629 = vld [vmem:[%s435 + $0x18] sm:$0xe]
      %v630 = vld [vmem:[%s435 + $0x1c] sm:$0x1]
      %v631 = vld [vmem:[%s435 + $0x20] sm:$0xe]
      %v632 = vld [vmem:[%s435 + $0x24] sm:$0x1]
      %v633 = vld [vmem:[%s435 + $0x28] sm:$0xe]
      %v634 = vld [vmem:[%s435 + $0x2c] sm:$0x1]
      %v635 = vld [vmem:[%s435 + $0x30] sm:$0xe]
      %v636 = vld [vmem:[%s435 + $0x34] sm:$0x1]
      %v637 = vld [vmem:[%s435 + $0x38] sm:$0xe]
      %v638 = vld [vmem:[%s435 + $0x3c] sm:$0x1]
      %vm655 = vcmask 1042432
      %vm656 = vcmask 1046532
      %vm657 = vmor %vm655, %vm656
      %v658 = vrot.slane %v623, 5
      %v659 = vrot.slane %v658, 4
      %v660 = vrot.slane %v624, 5
      %v661 = vsel %vm657, %v659, %v660
      %v662 = vrot.slane %v625, 5
      %v663 = vrot.slane %v662, 4
      %v664 = vrot.slane %v626, 5
      %v665 = vsel %vm657, %v663, %v664
      %v666 = vrot.slane %v627, 5
      %v667 = vrot.slane %v666, 4
      %v668 = vrot.slane %v628, 5
      %v669 = vsel %vm657, %v667, %v668
      %v670 = vrot.slane %v629, 5
      %v671 = vrot.slane %v670, 4
      %v672 = vrot.slane %v630, 5
      %v673 = vsel %vm657, %v671, %v672
      %v674 = vrot.slane %v631, 5
      %v675 = vrot.slane %v674, 4
      %v676 = vrot.slane %v632, 5
      %v677 = vsel %vm657, %v675, %v676
      %v678 = vrot.slane %v633, 5
      %v679 = vrot.slane %v678, 4
      %v680 = vrot.slane %v634, 5
      %v681 = vsel %vm657, %v679, %v680
      %v682 = vrot.slane %v635, 5
      %v683 = vrot.slane %v682, 4
      %v684 = vrot.slane %v636, 5
      %v685 = vsel %vm657, %v683, %v684
      %v686 = vrot.slane %v637, 5
      %v687 = vrot.slane %v686, 4
      %v688 = vrot.slane %v638, 5
      %v689 = vsel %vm657, %v687, %v688
      %v690 = vunpack.c.l.b16 %v661
      %v691 = vunpack.c.l.b16 %v665
      %v692 = vunpack.c.l.b16 %v669
      %v693 = vunpack.c.l.b16 %v673
      %v694 = vunpack.c.l.b16 %v677
      %v695 = vunpack.c.l.b16 %v681
      %v696 = vunpack.c.l.b16 %v685
      %v697 = vunpack.c.l.b16 %v689
      %v698 = vpack.c.b16 %v691, %v690
      %v699 = vpack.c.b16 %v693, %v692
      %v700 = vpack.c.b16 %v695, %v694
      %v701 = vpack.c.b16 %v697, %v696
      %706 = vst [vmem:[#allocation3 + $0x10] sm:$0xff] %v698
      %707 = vst [vmem:[#allocation3 + $0x60] sm:$0xff] %v699
      %708 = vst [vmem:[#allocation3 + $0xb0] sm:$0xff] %v700
      %709 = vst [vmem:[#allocation3 + $0x100] sm:$0xff] %v701
      %s710 = sadd.s32 %s432, 1
      %s711 = smul.u32 %s710, 2
      %s712 = smul.addr %s711, 4
      %s713 = scalar_lea.vmem [#allocation2], %s712
      %v714 = vld [vmem:[%s713] sm:$0xf]
      %v715 = vld [vmem:[%s713 + $0x8] sm:$0xf]
      %v716 = vld [vmem:[%s713 + $0x10] sm:$0xf]
      %v717 = vld [vmem:[%s713 + $0x18] sm:$0xf]
      %v718 = vld [vmem:[%s713 + $0x20] sm:$0xf]
      %v719 = vld [vmem:[%s713 + $0x28] sm:$0xf]
      %v720 = vld [vmem:[%s713 + $0x30] sm:$0xf]
      %v721 = vld [vmem:[%s713 + $0x38] sm:$0xf]
      %v730 = vunpack.c.l.b16 %v714
      %v731 = vunpack.c.l.b16 %v715
      %v732 = vunpack.c.l.b16 %v716
      %v733 = vunpack.c.l.b16 %v717
      %v734 = vunpack.c.l.b16 %v718
      %v735 = vunpack.c.l.b16 %v719
      %v736 = vunpack.c.l.b16 %v720
      %v737 = vunpack.c.l.b16 %v721
      %v738 = vpack.c.b16 %v731, %v730
      %v739 = vpack.c.b16 %v733, %v732
      %v740 = vpack.c.b16 %v735, %v734
      %v741 = vpack.c.b16 %v737, %v736
      %746 = vst [vmem:[#allocation3 + $0x18] sm:$0xff] %v738
      %747 = vst [vmem:[#allocation3 + $0x68] sm:$0xff] %v739
      %748 = vst [vmem:[#allocation3 + $0xb8] sm:$0xff] %v740
      %749 = vst [vmem:[#allocation3 + $0x108] sm:$0xff] %v741
      %v750 = vld [vmem:[%s713] sm:$0xf]
      %v751 = vld [vmem:[%s713 + $0x4] sm:$0x1]
      %v752 = vld [vmem:[%s713 + $0x8] sm:$0xf]
      %v753 = vld [vmem:[%s713 + $0xc] sm:$0x1]
      %v754 = vld [vmem:[%s713 + $0x10] sm:$0xf]
      %v755 = vld [vmem:[%s713 + $0x14] sm:$0x1]
      %v756 = vld [vmem:[%s713 + $0x18] sm:$0xf]
      %v757 = vld [vmem:[%s713 + $0x1c] sm:$0x1]
      %v758 = vld [vmem:[%s713 + $0x20] sm:$0xf]
      %v759 = vld [vmem:[%s713 + $0x24] sm:$0x1]
      %v760 = vld [vmem:[%s713 + $0x28] sm:$0xf]
      %v761 = vld [vmem:[%s713 + $0x2c] sm:$0x1]
      %v762 = vld [vmem:[%s713 + $0x30] sm:$0xf]
      %v763 = vld [vmem:[%s713 + $0x34] sm:$0x1]
      %v764 = vld [vmem:[%s713 + $0x38] sm:$0xf]
      %v765 = vld [vmem:[%s713 + $0x3c] sm:$0x1]
      %v767 = vshrl.u32 %v750, 16
      %v769 = vrot.slane %v767, 4
      %v770 = vshll.u32 %v750, 16
      %v772 = vrot.slane %v770, 5
      %v773 = vor.u32 %v769, %v772
      %v774 = vrot.slane %v773, 4
      %v776 = vshll.u32 %v751, 16
      %v778 = vrot.slane %v776, 5
      %v779 = vsel %vm490, %v774, %v778
      %v781 = vshrl.u32 %v752, 16
      %v783 = vrot.slane %v781, 4
      %v784 = vshll.u32 %v752, 16
      %v786 = vrot.slane %v784, 5
      %v787 = vor.u32 %v783, %v786
      %v788 = vrot.slane %v787, 4
      %v790 = vshll.u32 %v753, 16
      %v792 = vrot.slane %v790, 5
      %v793 = vsel %vm490, %v788, %v792
      %v795 = vshrl.u32 %v754, 16
      %v797 = vrot.slane %v795, 4
      %v798 = vshll.u32 %v754, 16
      %v800 = vrot.slane %v798, 5
      %v801 = vor.u32 %v797, %v800
      %v802 = vrot.slane %v801, 4
      %v804 = vshll.u32 %v755, 16
      %v806 = vrot.slane %v804, 5
      %v807 = vsel %vm490, %v802, %v806
      %v809 = vshrl.u32 %v756, 16
      %v811 = vrot.slane %v809, 4
      %v812 = vshll.u32 %v756, 16
      %v814 = vrot.slane %v812, 5
      %v815 = vor.u32 %v811, %v814
      %v816 = vrot.slane %v815, 4
      %v818 = vshll.u32 %v757, 16
      %v820 = vrot.slane %v818, 5
      %v821 = vsel %vm490, %v816, %v820
      %v823 = vshrl.u32 %v758, 16
      %v825 = vrot.slane %v823, 4
      %v826 = vshll.u32 %v758, 16
      %v828 = vrot.slane %v826, 5
      %v829 = vor.u32 %v825, %v828
      %v830 = vrot.slane %v829, 4
      %v832 = vshll.u32 %v759, 16
      %v834 = vrot.slane %v832, 5
      %v835 = vsel %vm490, %v830, %v834
      %v837 = vshrl.u32 %v760, 16
      %v839 = vrot.slane %v837, 4
      %v840 = vshll.u32 %v760, 16
      %v842 = vrot.slane %v840, 5
      %v843 = vor.u32 %v839, %v842
      %v844 = vrot.slane %v843, 4
      %v846 = vshll.u32 %v761, 16
      %v848 = vrot.slane %v846, 5
      %v849 = vsel %vm490, %v844, %v848
      %v851 = vshrl.u32 %v762, 16
      %v853 = vrot.slane %v851, 4
      %v854 = vshll.u32 %v762, 16
      %v856 = vrot.slane %v854, 5
      %v857 = vor.u32 %v853, %v856
      %v858 = vrot.slane %v857, 4
      %v860 = vshll.u32 %v763, 16
      %v862 = vrot.slane %v860, 5
      %v863 = vsel %vm490, %v858, %v862
      %v865 = vshrl.u32 %v764, 16
      %v867 = vrot.slane %v865, 4
      %v868 = vshll.u32 %v764, 16
      %v870 = vrot.slane %v868, 5
      %v871 = vor.u32 %v867, %v870
      %v872 = vrot.slane %v871, 4
      %v874 = vshll.u32 %v765, 16
      %v876 = vrot.slane %v874, 5
      %v877 = vsel %vm490, %v872, %v876
      %v878 = vunpack.c.l.b16 %v779
      %v879 = vunpack.c.l.b16 %v793
      %v880 = vunpack.c.l.b16 %v807
      %v881 = vunpack.c.l.b16 %v821
      %v882 = vunpack.c.l.b16 %v835
      %v883 = vunpack.c.l.b16 %v849
      %v884 = vunpack.c.l.b16 %v863
      %v885 = vunpack.c.l.b16 %v877
      %v886 = vpack.c.b16 %v879, %v878
      %v887 = vpack.c.b16 %v881, %v880
      %v888 = vpack.c.b16 %v883, %v882
      %v889 = vpack.c.b16 %v885, %v884
      %894 = vst [vmem:[#allocation3 + $0x20] sm:$0xff] %v886
      %895 = vst [vmem:[#allocation3 + $0x70] sm:$0xff] %v887
      %896 = vst [vmem:[#allocation3 + $0xc0] sm:$0xff] %v888
      %897 = vst [vmem:[#allocation3 + $0x110] sm:$0xff] %v889
      %v898 = vld [vmem:[%s713] sm:$0xe]
      %v899 = vld [vmem:[%s713 + $0x4] sm:$0x1]
      %v900 = vld [vmem:[%s713 + $0x8] sm:$0xe]
      %v901 = vld [vmem:[%s713 + $0xc] sm:$0x1]
      %v902 = vld [vmem:[%s713 + $0x10] sm:$0xe]
      %v903 = vld [vmem:[%s713 + $0x14] sm:$0x1]
      %v904 = vld [vmem:[%s713 + $0x18] sm:$0xe]
      %v905 = vld [vmem:[%s713 + $0x1c] sm:$0x1]
      %v906 = vld [vmem:[%s713 + $0x20] sm:$0xe]
      %v907 = vld [vmem:[%s713 + $0x24] sm:$0x1]
      %v908 = vld [vmem:[%s713 + $0x28] sm:$0xe]
      %v909 = vld [vmem:[%s713 + $0x2c] sm:$0x1]
      %v910 = vld [vmem:[%s713 + $0x30] sm:$0xe]
      %v911 = vld [vmem:[%s713 + $0x34] sm:$0x1]
      %v912 = vld [vmem:[%s713 + $0x38] sm:$0xe]
      %v913 = vld [vmem:[%s713 + $0x3c] sm:$0x1]
      %v930 = vrot.slane %v898, 5
      %v931 = vrot.slane %v930, 4
      %v932 = vrot.slane %v899, 5
      %v933 = vsel %vm657, %v931, %v932
      %v934 = vrot.slane %v900, 5
      %v935 = vrot.slane %v934, 4
      %v936 = vrot.slane %v901, 5
      %v937 = vsel %vm657, %v935, %v936
      %v938 = vrot.slane %v902, 5
      %v939 = vrot.slane %v938, 4
      %v940 = vrot.slane %v903, 5
      %v941 = vsel %vm657, %v939, %v940
      %v942 = vrot.slane %v904, 5
      %v943 = vrot.slane %v942, 4
      %v944 = vrot.slane %v905, 5
      %v945 = vsel %vm657, %v943, %v944
      %v946 = vrot.slane %v906, 5
      %v947 = vrot.slane %v946, 4
      %v948 = vrot.slane %v907, 5
      %v949 = vsel %vm657, %v947, %v948
      %v950 = vrot.slane %v908, 5
      %v951 = vrot.slane %v950, 4
      %v952 = vrot.slane %v909, 5
      %v953 = vsel %vm657, %v951, %v952
      %v954 = vrot.slane %v910, 5
      %v955 = vrot.slane %v954, 4
      %v956 = vrot.slane %v911, 5
      %v957 = vsel %vm657, %v955, %v956
      %v958 = vrot.slane %v912, 5
      %v959 = vrot.slane %v958, 4
      %v960 = vrot.slane %v913, 5
      %v961 = vsel %vm657, %v959, %v960
      %v962 = vunpack.c.l.b16 %v933
      %v963 = vunpack.c.l.b16 %v937
      %v964 = vunpack.c.l.b16 %v941
      %v965 = vunpack.c.l.b16 %v945
      %v966 = vunpack.c.l.b16 %v949
      %v967 = vunpack.c.l.b16 %v953
      %v968 = vunpack.c.l.b16 %v957
      %v969 = vunpack.c.l.b16 %v961
      %v970 = vpack.c.b16 %v963, %v962
      %v971 = vpack.c.b16 %v965, %v964
      %v972 = vpack.c.b16 %v967, %v966
      %v973 = vpack.c.b16 %v969, %v968
      %978 = vst [vmem:[#allocation3 + $0x28] sm:$0xff] %v970
      %979 = vst [vmem:[#allocation3 + $0x78] sm:$0xff] %v971
      %980 = vst [vmem:[#allocation3 + $0xc8] sm:$0xff] %v972
      %981 = vst [vmem:[#allocation3 + $0x118] sm:$0xff] %v973
      %s982 = sadd.s32 %s432, 2
      %s983 = smul.u32 %s982, 2
      %s984 = smul.addr %s983, 4
      %s985 = scalar_lea.vmem [#allocation2], %s984
      %v986 = vld [vmem:[%s985] sm:$0xf]
      %v987 = vld [vmem:[%s985 + $0x8] sm:$0xf]
      %v988 = vld [vmem:[%s985 + $0x10] sm:$0xf]
      %v989 = vld [vmem:[%s985 + $0x18] sm:$0xf]
      %v990 = vld [vmem:[%s985 + $0x20] sm:$0xf]
      %v991 = vld [vmem:[%s985 + $0x28] sm:$0xf]
      %v992 = vld [vmem:[%s985 + $0x30] sm:$0xf]
      %v993 = vld [vmem:[%s985 + $0x38] sm:$0xf]
      %v1002 = vunpack.c.l.b16 %v986
      %v1003 = vunpack.c.l.b16 %v987
      %v1004 = vunpack.c.l.b16 %v988
      %v1005 = vunpack.c.l.b16 %v989
      %v1006 = vunpack.c.l.b16 %v990
      %v1007 = vunpack.c.l.b16 %v991
      %v1008 = vunpack.c.l.b16 %v992
      %v1009 = vunpack.c.l.b16 %v993
      %v1010 = vpack.c.b16 %v1003, %v1002
      %v1011 = vpack.c.b16 %v1005, %v1004
      %v1012 = vpack.c.b16 %v1007, %v1006
      %v1013 = vpack.c.b16 %v1009, %v1008
      %1018 = vst [vmem:[#allocation3 + $0x30] sm:$0xff] %v1010
      %1019 = vst [vmem:[#allocation3 + $0x80] sm:$0xff] %v1011
      %1020 = vst [vmem:[#allocation3 + $0xd0] sm:$0xff] %v1012
      %1021 = vst [vmem:[#allocation3 + $0x120] sm:$0xff] %v1013
      %v1022 = vld [vmem:[%s985] sm:$0xf]
      %v1023 = vld [vmem:[%s985 + $0x4] sm:$0x1]
      %v1024 = vld [vmem:[%s985 + $0x8] sm:$0xf]
      %v1025 = vld [vmem:[%s985 + $0xc] sm:$0x1]
      %v1026 = vld [vmem:[%s985 + $0x10] sm:$0xf]
      %v1027 = vld [vmem:[%s985 + $0x14] sm:$0x1]
      %v1028 = vld [vmem:[%s985 + $0x18] sm:$0xf]
      %v1029 = vld [vmem:[%s985 + $0x1c] sm:$0x1]
      %v1030 = vld [vmem:[%s985 + $0x20] sm:$0xf]
      %v1031 = vld [vmem:[%s985 + $0x24] sm:$0x1]
      %v1032 = vld [vmem:[%s985 + $0x28] sm:$0xf]
      %v1033 = vld [vmem:[%s985 + $0x2c] sm:$0x1]
      %v1034 = vld [vmem:[%s985 + $0x30] sm:$0xf]
      %v1035 = vld [vmem:[%s985 + $0x34] sm:$0x1]
      %v1036 = vld [vmem:[%s985 + $0x38] sm:$0xf]
      %v1037 = vld [vmem:[%s985 + $0x3c] sm:$0x1]
      %v1039 = vshrl.u32 %v1022, 16
      %v1041 = vrot.slane %v1039, 4
      %v1042 = vshll.u32 %v1022, 16
      %v1044 = vrot.slane %v1042, 5
      %v1045 = vor.u32 %v1041, %v1044
      %v1046 = vrot.slane %v1045, 4
      %v1048 = vshll.u32 %v1023, 16
      %v1050 = vrot.slane %v1048, 5
      %v1051 = vsel %vm490, %v1046, %v1050
      %v1053 = vshrl.u32 %v1024, 16
      %v1055 = vrot.slane %v1053, 4
      %v1056 = vshll.u32 %v1024, 16
      %v1058 = vrot.slane %v1056, 5
      %v1059 = vor.u32 %v1055, %v1058
      %v1060 = vrot.slane %v1059, 4
      %v1062 = vshll.u32 %v1025, 16
      %v1064 = vrot.slane %v1062, 5
      %v1065 = vsel %vm490, %v1060, %v1064
      %v1067 = vshrl.u32 %v1026, 16
      %v1069 = vrot.slane %v1067, 4
      %v1070 = vshll.u32 %v1026, 16
      %v1072 = vrot.slane %v1070, 5
      %v1073 = vor.u32 %v1069, %v1072
      %v1074 = vrot.slane %v1073, 4
      %v1076 = vshll.u32 %v1027, 16
      %v1078 = vrot.slane %v1076, 5
      %v1079 = vsel %vm490, %v1074, %v1078
      %v1081 = vshrl.u32 %v1028, 16
      %v1083 = vrot.slane %v1081, 4
      %v1084 = vshll.u32 %v1028, 16
      %v1086 = vrot.slane %v1084, 5
      %v1087 = vor.u32 %v1083, %v1086
      %v1088 = vrot.slane %v1087, 4
      %v1090 = vshll.u32 %v1029, 16
      %v1092 = vrot.slane %v1090, 5
      %v1093 = vsel %vm490, %v1088, %v1092
      %v1095 = vshrl.u32 %v1030, 16
      %v1097 = vrot.slane %v1095, 4
      %v1098 = vshll.u32 %v1030, 16
      %v1100 = vrot.slane %v1098, 5
      %v1101 = vor.u32 %v1097, %v1100
      %v1102 = vrot.slane %v1101, 4
      %v1104 = vshll.u32 %v1031, 16
      %v1106 = vrot.slane %v1104, 5
      %v1107 = vsel %vm490, %v1102, %v1106
      %v1109 = vshrl.u32 %v1032, 16
      %v1111 = vrot.slane %v1109, 4
      %v1112 = vshll.u32 %v1032, 16
      %v1114 = vrot.slane %v1112, 5
      %v1115 = vor.u32 %v1111, %v1114
      %v1116 = vrot.slane %v1115, 4
      %v1118 = vshll.u32 %v1033, 16
      %v1120 = vrot.slane %v1118, 5
      %v1121 = vsel %vm490, %v1116, %v1120
      %v1123 = vshrl.u32 %v1034, 16
      %v1125 = vrot.slane %v1123, 4
      %v1126 = vshll.u32 %v1034, 16
      %v1128 = vrot.slane %v1126, 5
      %v1129 = vor.u32 %v1125, %v1128
      %v1130 = vrot.slane %v1129, 4
      %v1132 = vshll.u32 %v1035, 16
      %v1134 = vrot.slane %v1132, 5
      %v1135 = vsel %vm490, %v1130, %v1134
      %v1137 = vshrl.u32 %v1036, 16
      %v1139 = vrot.slane %v1137, 4
      %v1140 = vshll.u32 %v1036, 16
      %v1142 = vrot.slane %v1140, 5
      %v1143 = vor.u32 %v1139, %v1142
      %v1144 = vrot.slane %v1143, 4
      %v1146 = vshll.u32 %v1037, 16
      %v1148 = vrot.slane %v1146, 5
      %v1149 = vsel %vm490, %v1144, %v1148
      %v1150 = vunpack.c.l.b16 %v1051
      %v1151 = vunpack.c.l.b16 %v1065
      %v1152 = vunpack.c.l.b16 %v1079
      %v1153 = vunpack.c.l.b16 %v1093
      %v1154 = vunpack.c.l.b16 %v1107
      %v1155 = vunpack.c.l.b16 %v1121
      %v1156 = vunpack.c.l.b16 %v1135
      %v1157 = vunpack.c.l.b16 %v1149
      %v1158 = vpack.c.b16 %v1151, %v1150
      %v1159 = vpack.c.b16 %v1153, %v1152
      %v1160 = vpack.c.b16 %v1155, %v1154
      %v1161 = vpack.c.b16 %v1157, %v1156
      %1166 = vst [vmem:[#allocation3 + $0x38] sm:$0xff] %v1158
      %1167 = vst [vmem:[#allocation3 + $0x88] sm:$0xff] %v1159
      %1168 = vst [vmem:[#allocation3 + $0xd8] sm:$0xff] %v1160
      %1169 = vst [vmem:[#allocation3 + $0x128] sm:$0xff] %v1161
      %v1170 = vld [vmem:[%s985] sm:$0xe]
      %v1171 = vld [vmem:[%s985 + $0x4] sm:$0x1]
      %v1172 = vld [vmem:[%s985 + $0x8] sm:$0xe]
      %v1173 = vld [vmem:[%s985 + $0xc] sm:$0x1]
      %v1174 = vld [vmem:[%s985 + $0x10] sm:$0xe]
      %v1175 = vld [vmem:[%s985 + $0x14] sm:$0x1]
      %v1176 = vld [vmem:[%s985 + $0x18] sm:$0xe]
      %v1177 = vld [vmem:[%s985 + $0x1c] sm:$0x1]
      %v1178 = vld [vmem:[%s985 + $0x20] sm:$0xe]
      %v1179 = vld [vmem:[%s985 + $0x24] sm:$0x1]
      %v1180 = vld [vmem:[%s985 + $0x28] sm:$0xe]
      %v1181 = vld [vmem:[%s985 + $0x2c] sm:$0x1]
      %v1182 = vld [vmem:[%s985 + $0x30] sm:$0xe]
      %v1183 = vld [vmem:[%s985 + $0x34] sm:$0x1]
      %v1184 = vld [vmem:[%s985 + $0x38] sm:$0xe]
      %v1185 = vld [vmem:[%s985 + $0x3c] sm:$0x1]
      %v1202 = vrot.slane %v1170, 5
      %v1203 = vrot.slane %v1202, 4
      %v1204 = vrot.slane %v1171, 5
      %v1205 = vsel %vm657, %v1203, %v1204
      %v1206 = vrot.slane %v1172, 5
      %v1207 = vrot.slane %v1206, 4
      %v1208 = vrot.slane %v1173, 5
      %v1209 = vsel %vm657, %v1207, %v1208
      %v1210 = vrot.slane %v1174, 5
      %v1211 = vrot.slane %v1210, 4
      %v1212 = vrot.slane %v1175, 5
      %v1213 = vsel %vm657, %v1211, %v1212
      %v1214 = vrot.slane %v1176, 5
      %v1215 = vrot.slane %v1214, 4
      %v1216 = vrot.slane %v1177, 5
      %v1217 = vsel %vm657, %v1215, %v1216
      %v1218 = vrot.slane %v1178, 5
      %v1219 = vrot.slane %v1218, 4
      %v1220 = vrot.slane %v1179, 5
      %v1221 = vsel %vm657, %v1219, %v1220
      %v1222 = vrot.slane %v1180, 5
      %v1223 = vrot.slane %v1222, 4
      %v1224 = vrot.slane %v1181, 5
      %v1225 = vsel %vm657, %v1223, %v1224
      %v1226 = vrot.slane %v1182, 5
      %v1227 = vrot.slane %v1226, 4
      %v1228 = vrot.slane %v1183, 5
      %v1229 = vsel %vm657, %v1227, %v1228
      %v1230 = vrot.slane %v1184, 5
      %v1231 = vrot.slane %v1230, 4
      %v1232 = vrot.slane %v1185, 5
      %v1233 = vsel %vm657, %v1231, %v1232
      %v1234 = vunpack.c.l.b16 %v1205
      %v1235 = vunpack.c.l.b16 %v1209
      %v1236 = vunpack.c.l.b16 %v1213
      %v1237 = vunpack.c.l.b16 %v1217
      %v1238 = vunpack.c.l.b16 %v1221
      %v1239 = vunpack.c.l.b16 %v1225
      %v1240 = vunpack.c.l.b16 %v1229
      %v1241 = vunpack.c.l.b16 %v1233
      %v1242 = vpack.c.b16 %v1235, %v1234
      %v1243 = vpack.c.b16 %v1237, %v1236
      %v1244 = vpack.c.b16 %v1239, %v1238
      %v1245 = vpack.c.b16 %v1241, %v1240
      %1250 = vst [vmem:[#allocation3 + $0x40] sm:$0xff] %v1242
      %1251 = vst [vmem:[#allocation3 + $0x90] sm:$0xff] %v1243
      %1252 = vst [vmem:[#allocation3 + $0xe0] sm:$0xff] %v1244
      %1253 = vst [vmem:[#allocation3 + $0x130] sm:$0xff] %v1245
      %v1254 = vld [vmem:[%s245] sm:$0xf]
      %v1255 = vld [vmem:[%s245 + $0x4] sm:$0xf]
      %v1256 = vld [vmem:[%s245 + $0x8] sm:$0xf]
      %v1257 = vld [vmem:[%s245 + $0xc] sm:$0xf]
      %v1258 = vld [vmem:[%s245 + $0x10] sm:$0xf]
      %v1259 = vld [vmem:[%s245 + $0x14] sm:$0xf]
      %v1260 = vld [vmem:[%s245 + $0x18] sm:$0xf]
      %v1261 = vld [vmem:[%s245 + $0x1c] sm:$0xf]
      %v1270 = vunpack.c.l.b16 %v1254
      %v1271 = vunpack.c.l.b16 %v1255
      %v1272 = vunpack.c.l.b16 %v1256
      %v1273 = vunpack.c.l.b16 %v1257
      %v1274 = vunpack.c.l.b16 %v1258
      %v1275 = vunpack.c.l.b16 %v1259
      %v1276 = vunpack.c.l.b16 %v1260
      %v1277 = vunpack.c.l.b16 %v1261
      %v1278 = vpack.c.b16 %v1271, %v1270
      %v1279 = vpack.c.b16 %v1273, %v1272
      %v1280 = vpack.c.b16 %v1275, %v1274
      %v1281 = vpack.c.b16 %v1277, %v1276
      %1286 = vst [vmem:[#allocation3 + $0x48] sm:$0xff] %v1278
      %1287 = vst [vmem:[#allocation3 + $0x98] sm:$0xff] %v1279
      %1288 = vst [vmem:[#allocation3 + $0xe8] sm:$0xff] %v1280
      %1289 = vst [vmem:[#allocation3 + $0x138] sm:$0xff] %v1281
      %v1290 = vld [vmem:[#allocation3] sm:$0xff]
      %v1291 = vld [vmem:[#allocation3 + $0x8] sm:$0xff]
      %v1292 = vld [vmem:[#allocation3 + $0x10] sm:$0xff]
      %v1293 = vld [vmem:[#allocation3 + $0x18] sm:$0xff]
      %v1294 = vld [vmem:[#allocation3 + $0x20] sm:$0xff]
      %v1295 = vld [vmem:[#allocation3 + $0x28] sm:$0xff]
      %v1296 = vld [vmem:[#allocation3 + $0x30] sm:$0xff]
      %v1297 = vld [vmem:[#allocation3 + $0x38] sm:$0xff]
      %v1298 = vld [vmem:[#allocation3 + $0x40] sm:$0xff]
      %v1299 = vld [vmem:[#allocation3 + $0x48] sm:$0xff]
      %v1300 = vld [vmem:[#allocation3 + $0x50] sm:$0xff]
      %v1301 = vld [vmem:[#allocation3 + $0x58] sm:$0xff]
      %v1302 = vld [vmem:[#allocation3 + $0x60] sm:$0xff]
      %v1303 = vld [vmem:[#allocation3 + $0x68] sm:$0xff]
      %v1304 = vld [vmem:[#allocation3 + $0x70] sm:$0xff]
      %v1305 = vld [vmem:[#allocation3 + $0x78] sm:$0xff]
      %v1306 = vld [vmem:[#allocation3 + $0x80] sm:$0xff]
      %v1307 = vld [vmem:[#allocation3 + $0x88] sm:$0xff]
      %v1308 = vld [vmem:[#allocation3 + $0x90] sm:$0xff]
      %v1309 = vld [vmem:[#allocation3 + $0x98] sm:$0xff]
      %v1310 = vld [vmem:[#allocation3 + $0xa0] sm:$0xff]
      %v1311 = vld [vmem:[#allocation3 + $0xa8] sm:$0xff]
      %v1312 = vld [vmem:[#allocation3 + $0xb0] sm:$0xff]
      %v1313 = vld [vmem:[#allocation3 + $0xb8] sm:$0xff]
      %v1314 = vld [vmem:[#allocation3 + $0xc0] sm:$0xff]
      %v1315 = vld [vmem:[#allocation3 + $0xc8] sm:$0xff]
      %v1316 = vld [vmem:[#allocation3 + $0xd0] sm:$0xff]
      %v1317 = vld [vmem:[#allocation3 + $0xd8] sm:$0xff]
      %v1318 = vld [vmem:[#allocation3 + $0xe0] sm:$0xff]
      %v1319 = vld [vmem:[#allocation3 + $0xe8] sm:$0xff]
      %v1320 = vld [vmem:[#allocation3 + $0xf0] sm:$0xff]
      %v1321 = vld [vmem:[#allocation3 + $0xf8] sm:$0xff]
      %v1322 = vld [vmem:[#allocation3 + $0x100] sm:$0xff]
      %v1323 = vld [vmem:[#allocation3 + $0x108] sm:$0xff]
      %v1324 = vld [vmem:[#allocation3 + $0x110] sm:$0xff]
      %v1325 = vld [vmem:[#allocation3 + $0x118] sm:$0xff]
      %v1326 = vld [vmem:[#allocation3 + $0x120] sm:$0xff]
      %v1327 = vld [vmem:[#allocation3 + $0x128] sm:$0xff]
      %v1328 = vld [vmem:[#allocation3 + $0x130] sm:$0xff]
      %v1329 = vld [vmem:[#allocation3 + $0x138] sm:$0xff]
      %v1330 = vld [vmem:[%s1] sm:$0xf]
      %v1331 = vld [vmem:[%s1 + $0x4] sm:$0xf]
      %v1332 = vld [vmem:[%s1 + $0x8] sm:$0xf]
      %v1333 = vld [vmem:[%s1 + $0xc] sm:$0xf]
      %v1334 = vld [vmem:[%s1 + $0x10] sm:$0xf]
      %v1335 = vld [vmem:[%s1 + $0x14] sm:$0xf]
      %v1336 = vld [vmem:[%s1 + $0x18] sm:$0xf]
      %v1337 = vld [vmem:[%s1 + $0x1c] sm:$0xf]
      %v1338 = vld [vmem:[%s1 + $0x20] sm:$0xf]
      %v1339 = vld [vmem:[%s1 + $0x24] sm:$0xf]
      %v1340 = vld [vmem:[%s1 + $0x28] sm:$0xf]
      %v1341 = vld [vmem:[%s1 + $0x2c] sm:$0xf]
      %v1342 = vld [vmem:[%s1 + $0x30] sm:$0xf]
      %v1343 = vld [vmem:[%s1 + $0x34] sm:$0xf]
      %v1344 = vld [vmem:[%s1 + $0x38] sm:$0xf]
      %v1345 = vld [vmem:[%s1 + $0x3c] sm:$0xf]
      %v1346 = vld [vmem:[%s1 + $0x40] sm:$0xf]
      %v1347 = vld [vmem:[%s1 + $0x44] sm:$0xf]
      %v1348 = vld [vmem:[%s1 + $0x48] sm:$0xf]
      %v1349 = vld [vmem:[%s1 + $0x4c] sm:$0xf]
      %v1350 = vld [vmem:[%s1 + $0x50] sm:$0xf]
      %v1351 = vld [vmem:[%s1 + $0x54] sm:$0xf]
      %v1352 = vld [vmem:[%s1 + $0x58] sm:$0xf]
      %v1353 = vld [vmem:[%s1 + $0x5c] sm:$0xf]
      %v1354 = vld [vmem:[%s1 + $0x60] sm:$0xf]
      %v1355 = vld [vmem:[%s1 + $0x64] sm:$0xf]
      %v1356 = vld [vmem:[%s1 + $0x68] sm:$0xf]
      %v1357 = vld [vmem:[%s1 + $0x6c] sm:$0xf]
      %v1358 = vld [vmem:[%s1 + $0x70] sm:$0xf]
      %v1359 = vld [vmem:[%s1 + $0x74] sm:$0xf]
      %v1360 = vld [vmem:[%s1 + $0x78] sm:$0xf]
      %v1361 = vld [vmem:[%s1 + $0x7c] sm:$0xf]
      %v1362 = vld [vmem:[%s1 + $0x80] sm:$0xf]
      %v1363 = vld [vmem:[%s1 + $0x84] sm:$0xf]
      %v1364 = vld [vmem:[%s1 + $0x88] sm:$0xf]
      %v1365 = vld [vmem:[%s1 + $0x8c] sm:$0xf]
      %v1366 = vld [vmem:[%s1 + $0x90] sm:$0xf]
      %v1367 = vld [vmem:[%s1 + $0x94] sm:$0xf]
      %v1368 = vld [vmem:[%s1 + $0x98] sm:$0xf]
      %v1369 = vld [vmem:[%s1 + $0x9c] sm:$0xf]
      %v1370 = vld [vmem:[%s1 + $0xa0] sm:$0xf]
      %v1371 = vld [vmem:[%s1 + $0xa4] sm:$0xf]
      %v1372 = vld [vmem:[%s1 + $0xa8] sm:$0xf]
      %v1373 = vld [vmem:[%s1 + $0xac] sm:$0xf]
      %v1374 = vld [vmem:[%s1 + $0xb0] sm:$0xf]
      %v1375 = vld [vmem:[%s1 + $0xb4] sm:$0xf]
      %v1376 = vld [vmem:[%s1 + $0xb8] sm:$0xf]
      %v1377 = vld [vmem:[%s1 + $0xbc] sm:$0xf]
      %v1378 = vld [vmem:[%s1 + $0xc0] sm:$0xf]
      %v1379 = vld [vmem:[%s1 + $0xc4] sm:$0xf]
      %v1380 = vld [vmem:[%s1 + $0xc8] sm:$0xf]
      %v1381 = vld [vmem:[%s1 + $0xcc] sm:$0xf]
      %v1382 = vld [vmem:[%s1 + $0xd0] sm:$0xf]
      %v1383 = vld [vmem:[%s1 + $0xd4] sm:$0xf]
      %v1384 = vld [vmem:[%s1 + $0xd8] sm:$0xf]
      %v1385 = vld [vmem:[%s1 + $0xdc] sm:$0xf]
      %v1386 = vld [vmem:[%s1 + $0xe0] sm:$0xf]
      %v1387 = vld [vmem:[%s1 + $0xe4] sm:$0xf]
      %v1388 = vld [vmem:[%s1 + $0xe8] sm:$0xf]
      %v1389 = vld [vmem:[%s1 + $0xec] sm:$0xf]
      %v1390 = vld [vmem:[%s1 + $0xf0] sm:$0xf]
      %v1391 = vld [vmem:[%s1 + $0xf4] sm:$0xf]
      %v1392 = vld [vmem:[%s1 + $0xf8] sm:$0xf]
      %v1393 = vld [vmem:[%s1 + $0xfc] sm:$0xf]
      %v1394 = vld [vmem:[%s1 + $0x100] sm:$0xf]
      %v1395 = vld [vmem:[%s1 + $0x104] sm:$0xf]
      %v1396 = vld [vmem:[%s1 + $0x108] sm:$0xf]
      %v1397 = vld [vmem:[%s1 + $0x10c] sm:$0xf]
      %v1398 = vld [vmem:[%s1 + $0x110] sm:$0xf]
      %v1399 = vld [vmem:[%s1 + $0x114] sm:$0xf]
      %v1400 = vld [vmem:[%s1 + $0x118] sm:$0xf]
      %v1401 = vld [vmem:[%s1 + $0x11c] sm:$0xf]
      %v1402 = vld [vmem:[%s1 + $0x120] sm:$0xf]
      %v1403 = vld [vmem:[%s1 + $0x124] sm:$0xf]
      %v1404 = vld [vmem:[%s1 + $0x128] sm:$0xf]
      %v1405 = vld [vmem:[%s1 + $0x12c] sm:$0xf]
      %v1406 = vld [vmem:[%s1 + $0x130] sm:$0xf]
      %v1407 = vld [vmem:[%s1 + $0x134] sm:$0xf]
      %v1408 = vld [vmem:[%s1 + $0x138] sm:$0xf]
      %v1409 = vld [vmem:[%s1 + $0x13c] sm:$0xf]
      %v1410 = vld [vmem:[%s1 + $0x140] sm:$0xf]
      %v1411 = vld [vmem:[%s1 + $0x144] sm:$0xf]
      %v1412 = vld [vmem:[%s1 + $0x148] sm:$0xf]
      %v1413 = vld [vmem:[%s1 + $0x14c] sm:$0xf]
      %v1414 = vld [vmem:[%s1 + $0x150] sm:$0xf]
      %v1415 = vld [vmem:[%s1 + $0x154] sm:$0xf]
      %v1416 = vld [vmem:[%s1 + $0x158] sm:$0xf]
      %v1417 = vld [vmem:[%s1 + $0x15c] sm:$0xf]
      %v1418 = vld [vmem:[%s1 + $0x160] sm:$0xf]
      %v1419 = vld [vmem:[%s1 + $0x164] sm:$0xf]
      %v1420 = vld [vmem:[%s1 + $0x168] sm:$0xf]
      %v1421 = vld [vmem:[%s1 + $0x16c] sm:$0xf]
      %v1422 = vld [vmem:[%s1 + $0x170] sm:$0xf]
      %v1423 = vld [vmem:[%s1 + $0x174] sm:$0xf]
      %v1424 = vld [vmem:[%s1 + $0x178] sm:$0xf]
      %v1425 = vld [vmem:[%s1 + $0x17c] sm:$0xf]
      %v1426 = vld [vmem:[%s1 + $0x180] sm:$0xf]
      %v1427 = vld [vmem:[%s1 + $0x184] sm:$0xf]
      %v1428 = vld [vmem:[%s1 + $0x188] sm:$0xf]
      %v1429 = vld [vmem:[%s1 + $0x18c] sm:$0xf]
      %v1430 = vld [vmem:[%s1 + $0x190] sm:$0xf]
      %v1431 = vld [vmem:[%s1 + $0x194] sm:$0xf]
      %v1432 = vld [vmem:[%s1 + $0x198] sm:$0xf]
      %v1433 = vld [vmem:[%s1 + $0x19c] sm:$0xf]
      %v1434 = vld [vmem:[%s1 + $0x1a0] sm:$0xf]
      %v1435 = vld [vmem:[%s1 + $0x1a4] sm:$0xf]
      %v1436 = vld [vmem:[%s1 + $0x1a8] sm:$0xf]
      %v1437 = vld [vmem:[%s1 + $0x1ac] sm:$0xf]
      %v1438 = vld [vmem:[%s1 + $0x1b0] sm:$0xf]
      %v1439 = vld [vmem:[%s1 + $0x1b4] sm:$0xf]
      %v1440 = vld [vmem:[%s1 + $0x1b8] sm:$0xf]
      %v1441 = vld [vmem:[%s1 + $0x1bc] sm:$0xf]
      %v1442 = vld [vmem:[%s1 + $0x1c0] sm:$0xf]
      %v1443 = vld [vmem:[%s1 + $0x1c4] sm:$0xf]
      %v1444 = vld [vmem:[%s1 + $0x1c8] sm:$0xf]
      %v1445 = vld [vmem:[%s1 + $0x1cc] sm:$0xf]
      %v1446 = vld [vmem:[%s1 + $0x1d0] sm:$0xf]
      %v1447 = vld [vmem:[%s1 + $0x1d4] sm:$0xf]
      %v1448 = vld [vmem:[%s1 + $0x1d8] sm:$0xf]
      %v1449 = vld [vmem:[%s1 + $0x1dc] sm:$0xf]
      %v1450 = vld [vmem:[%s1 + $0x1e0] sm:$0xf]
      %v1451 = vld [vmem:[%s1 + $0x1e4] sm:$0xf]
      %v1452 = vld [vmem:[%s1 + $0x1e8] sm:$0xf]
      %v1453 = vld [vmem:[%s1 + $0x1ec] sm:$0xf]
      %v1454 = vld [vmem:[%s1 + $0x1f0] sm:$0xf]
      %v1455 = vld [vmem:[%s1 + $0x1f4] sm:$0xf]
      %v1456 = vld [vmem:[%s1 + $0x1f8] sm:$0xf]
      %v1457 = vld [vmem:[%s1 + $0x1fc] sm:$0xf]
      %v1458 = vld [vmem:[%s1 + $0x200] sm:$0xf]
      %v1459 = vld [vmem:[%s1 + $0x204] sm:$0xf]
      %v1460 = vld [vmem:[%s1 + $0x208] sm:$0xf]
      %v1461 = vld [vmem:[%s1 + $0x20c] sm:$0xf]
      %v1462 = vld [vmem:[%s1 + $0x210] sm:$0xf]
      %v1463 = vld [vmem:[%s1 + $0x214] sm:$0xf]
      %v1464 = vld [vmem:[%s1 + $0x218] sm:$0xf]
      %v1465 = vld [vmem:[%s1 + $0x21c] sm:$0xf]
      %v1466 = vld [vmem:[%s1 + $0x220] sm:$0xf]
      %v1467 = vld [vmem:[%s1 + $0x224] sm:$0xf]
      %v1468 = vld [vmem:[%s1 + $0x228] sm:$0xf]
      %v1469 = vld [vmem:[%s1 + $0x22c] sm:$0xf]
      %v1470 = vld [vmem:[%s1 + $0x230] sm:$0xf]
      %v1471 = vld [vmem:[%s1 + $0x234] sm:$0xf]
      %v1472 = vld [vmem:[%s1 + $0x238] sm:$0xf]
      %v1473 = vld [vmem:[%s1 + $0x23c] sm:$0xf]
      %v1474 = vld [vmem:[%s1 + $0x240] sm:$0xf]
      %v1475 = vld [vmem:[%s1 + $0x244] sm:$0xf]
      %v1476 = vld [vmem:[%s1 + $0x248] sm:$0xf]
      %v1477 = vld [vmem:[%s1 + $0x24c] sm:$0xf]
      %v1478 = vld [vmem:[%s1 + $0x250] sm:$0xf]
      %v1479 = vld [vmem:[%s1 + $0x254] sm:$0xf]
      %v1480 = vld [vmem:[%s1 + $0x258] sm:$0xf]
      %v1481 = vld [vmem:[%s1 + $0x25c] sm:$0xf]
      %v1482 = vld [vmem:[%s1 + $0x260] sm:$0xf]
      %v1483 = vld [vmem:[%s1 + $0x264] sm:$0xf]
      %v1484 = vld [vmem:[%s1 + $0x268] sm:$0xf]
      %v1485 = vld [vmem:[%s1 + $0x26c] sm:$0xf]
      %v1486 = vld [vmem:[%s1 + $0x270] sm:$0xf]
      %v1487 = vld [vmem:[%s1 + $0x274] sm:$0xf]
      %v1488 = vld [vmem:[%s1 + $0x278] sm:$0xf]
      %v1489 = vld [vmem:[%s1 + $0x27c] sm:$0xf]
      %v1490 = vld [vmem:[%s2] sm:$0x1]
      %v1492 = vlaneseq
      %v1493 = vshrl.u32 %v1492, 7
      %v1494 = vsub.s32 0, %v1493
      %v1495 = vrot.slane %v1490, %v1494
      %v1657 = vunpack.c.l.b16 %v1330
      %v1658 = vunpack.c.l.b16 %v1331
      %v1659 = vunpack.c.l.b16 %v1332
      %v1660 = vunpack.c.l.b16 %v1333
      %v1661 = vunpack.c.l.b16 %v1334
      %v1662 = vunpack.c.l.b16 %v1335
      %v1663 = vunpack.c.l.b16 %v1336
      %v1664 = vunpack.c.l.b16 %v1337
      %v1665 = vunpack.c.l.b16 %v1338
      %v1666 = vunpack.c.l.b16 %v1339
      %v1667 = vunpack.c.l.b16 %v1340
      %v1668 = vunpack.c.l.b16 %v1341
      %v1669 = vunpack.c.l.b16 %v1342
      %v1670 = vunpack.c.l.b16 %v1343
      %v1671 = vunpack.c.l.b16 %v1344
      %v1672 = vunpack.c.l.b16 %v1345
      %v1673 = vunpack.c.l.b16 %v1346
      %v1674 = vunpack.c.l.b16 %v1347
      %v1675 = vunpack.c.l.b16 %v1348
      %v1676 = vunpack.c.l.b16 %v1349
      %v1677 = vunpack.c.l.b16 %v1350
      %v1678 = vunpack.c.l.b16 %v1351
      %v1679 = vunpack.c.l.b16 %v1352
      %v1680 = vunpack.c.l.b16 %v1353
      %v1681 = vunpack.c.l.b16 %v1354
      %v1682 = vunpack.c.l.b16 %v1355
      %v1683 = vunpack.c.l.b16 %v1356
      %v1684 = vunpack.c.l.b16 %v1357
      %v1685 = vunpack.c.l.b16 %v1358
      %v1686 = vunpack.c.l.b16 %v1359
      %v1687 = vunpack.c.l.b16 %v1360
      %v1688 = vunpack.c.l.b16 %v1361
      %v1689 = vunpack.c.l.b16 %v1362
      %v1690 = vunpack.c.l.b16 %v1363
      %v1691 = vunpack.c.l.b16 %v1364
      %v1692 = vunpack.c.l.b16 %v1365
      %v1693 = vunpack.c.l.b16 %v1366
      %v1694 = vunpack.c.l.b16 %v1367
      %v1695 = vunpack.c.l.b16 %v1368
      %v1696 = vunpack.c.l.b16 %v1369
      %v1697 = vunpack.c.l.b16 %v1370
      %v1698 = vunpack.c.l.b16 %v1371
      %v1699 = vunpack.c.l.b16 %v1372
      %v1700 = vunpack.c.l.b16 %v1373
      %v1701 = vunpack.c.l.b16 %v1374
      %v1702 = vunpack.c.l.b16 %v1375
      %v1703 = vunpack.c.l.b16 %v1376
      %v1704 = vunpack.c.l.b16 %v1377
      %v1705 = vunpack.c.l.b16 %v1378
      %v1706 = vunpack.c.l.b16 %v1379
      %v1707 = vunpack.c.l.b16 %v1380
      %v1708 = vunpack.c.l.b16 %v1381
      %v1709 = vunpack.c.l.b16 %v1382
      %v1710 = vunpack.c.l.b16 %v1383
      %v1711 = vunpack.c.l.b16 %v1384
      %v1712 = vunpack.c.l.b16 %v1385
      %v1713 = vunpack.c.l.b16 %v1386
      %v1714 = vunpack.c.l.b16 %v1387
      %v1715 = vunpack.c.l.b16 %v1388
      %v1716 = vunpack.c.l.b16 %v1389
      %v1717 = vunpack.c.l.b16 %v1390
      %v1718 = vunpack.c.l.b16 %v1391
      %v1719 = vunpack.c.l.b16 %v1392
      %v1720 = vunpack.c.l.b16 %v1393
      %v1721 = vunpack.c.l.b16 %v1394
      %v1722 = vunpack.c.l.b16 %v1395
      %v1723 = vunpack.c.l.b16 %v1396
      %v1724 = vunpack.c.l.b16 %v1397
      %v1725 = vunpack.c.l.b16 %v1398
      %v1726 = vunpack.c.l.b16 %v1399
      %v1727 = vunpack.c.l.b16 %v1400
      %v1728 = vunpack.c.l.b16 %v1401
      %v1729 = vunpack.c.l.b16 %v1402
      %v1730 = vunpack.c.l.b16 %v1403
      %v1731 = vunpack.c.l.b16 %v1404
      %v1732 = vunpack.c.l.b16 %v1405
      %v1733 = vunpack.c.l.b16 %v1406
      %v1734 = vunpack.c.l.b16 %v1407
      %v1735 = vunpack.c.l.b16 %v1408
      %v1736 = vunpack.c.l.b16 %v1409
      %v1737 = vunpack.c.l.b16 %v1410
      %v1738 = vunpack.c.l.b16 %v1411
      %v1739 = vunpack.c.l.b16 %v1412
      %v1740 = vunpack.c.l.b16 %v1413
      %v1741 = vunpack.c.l.b16 %v1414
      %v1742 = vunpack.c.l.b16 %v1415
      %v1743 = vunpack.c.l.b16 %v1416
      %v1744 = vunpack.c.l.b16 %v1417
      %v1745 = vunpack.c.l.b16 %v1418
      %v1746 = vunpack.c.l.b16 %v1419
      %v1747 = vunpack.c.l.b16 %v1420
      %v1748 = vunpack.c.l.b16 %v1421
      %v1749 = vunpack.c.l.b16 %v1422
      %v1750 = vunpack.c.l.b16 %v1423
      %v1751 = vunpack.c.l.b16 %v1424
      %v1752 = vunpack.c.l.b16 %v1425
      %v1753 = vunpack.c.l.b16 %v1426
      %v1754 = vunpack.c.l.b16 %v1427
      %v1755 = vunpack.c.l.b16 %v1428
      %v1756 = vunpack.c.l.b16 %v1429
      %v1757 = vunpack.c.l.b16 %v1430
      %v1758 = vunpack.c.l.b16 %v1431
      %v1759 = vunpack.c.l.b16 %v1432
      %v1760 = vunpack.c.l.b16 %v1433
      %v1761 = vunpack.c.l.b16 %v1434
      %v1762 = vunpack.c.l.b16 %v1435
      %v1763 = vunpack.c.l.b16 %v1436
      %v1764 = vunpack.c.l.b16 %v1437
      %v1765 = vunpack.c.l.b16 %v1438
      %v1766 = vunpack.c.l.b16 %v1439
      %v1767 = vunpack.c.l.b16 %v1440
      %v1768 = vunpack.c.l.b16 %v1441
      %v1769 = vunpack.c.l.b16 %v1442
      %v1770 = vunpack.c.l.b16 %v1443
      %v1771 = vunpack.c.l.b16 %v1444
      %v1772 = vunpack.c.l.b16 %v1445
      %v1773 = vunpack.c.l.b16 %v1446
      %v1774 = vunpack.c.l.b16 %v1447
      %v1775 = vunpack.c.l.b16 %v1448
      %v1776 = vunpack.c.l.b16 %v1449
      %v1777 = vunpack.c.l.b16 %v1450
      %v1778 = vunpack.c.l.b16 %v1451
      %v1779 = vunpack.c.l.b16 %v1452
      %v1780 = vunpack.c.l.b16 %v1453
      %v1781 = vunpack.c.l.b16 %v1454
      %v1782 = vunpack.c.l.b16 %v1455
      %v1783 = vunpack.c.l.b16 %v1456
      %v1784 = vunpack.c.l.b16 %v1457
      %v1785 = vunpack.c.l.b16 %v1458
      %v1786 = vunpack.c.l.b16 %v1459
      %v1787 = vunpack.c.l.b16 %v1460
      %v1788 = vunpack.c.l.b16 %v1461
      %v1789 = vunpack.c.l.b16 %v1462
      %v1790 = vunpack.c.l.b16 %v1463
      %v1791 = vunpack.c.l.b16 %v1464
      %v1792 = vunpack.c.l.b16 %v1465
      %v1793 = vunpack.c.l.b16 %v1466
      %v1794 = vunpack.c.l.b16 %v1467
      %v1795 = vunpack.c.l.b16 %v1468
      %v1796 = vunpack.c.l.b16 %v1469
      %v1797 = vunpack.c.l.b16 %v1470
      %v1798 = vunpack.c.l.b16 %v1471
      %v1799 = vunpack.c.l.b16 %v1472
      %v1800 = vunpack.c.l.b16 %v1473
      %v1801 = vunpack.c.l.b16 %v1474
      %v1802 = vunpack.c.l.b16 %v1475
      %v1803 = vunpack.c.l.b16 %v1476
      %v1804 = vunpack.c.l.b16 %v1477
      %v1805 = vunpack.c.l.b16 %v1478
      %v1806 = vunpack.c.l.b16 %v1479
      %v1807 = vunpack.c.l.b16 %v1480
      %v1808 = vunpack.c.l.b16 %v1481
      %v1809 = vunpack.c.l.b16 %v1482
      %v1810 = vunpack.c.l.b16 %v1483
      %v1811 = vunpack.c.l.b16 %v1484
      %v1812 = vunpack.c.l.b16 %v1485
      %v1813 = vunpack.c.l.b16 %v1486
      %v1814 = vunpack.c.l.b16 %v1487
      %v1815 = vunpack.c.l.b16 %v1488
      %v1816 = vunpack.c.l.b16 %v1489
      %v1817 = vpack.c.b16 %v1658, %v1657
      %v1818 = vpack.c.b16 %v1660, %v1659
      %v1819 = vpack.c.b16 %v1662, %v1661
      %v1820 = vpack.c.b16 %v1664, %v1663
      %v1821 = vpack.c.b16 %v1666, %v1665
      %v1822 = vpack.c.b16 %v1668, %v1667
      %v1823 = vpack.c.b16 %v1670, %v1669
      %v1824 = vpack.c.b16 %v1672, %v1671
      %v1825 = vpack.c.b16 %v1674, %v1673
      %v1826 = vpack.c.b16 %v1676, %v1675
      %v1827 = vpack.c.b16 %v1678, %v1677
      %v1828 = vpack.c.b16 %v1680, %v1679
      %v1829 = vpack.c.b16 %v1682, %v1681
      %v1830 = vpack.c.b16 %v1684, %v1683
      %v1831 = vpack.c.b16 %v1686, %v1685
      %v1832 = vpack.c.b16 %v1688, %v1687
      %v1833 = vpack.c.b16 %v1690, %v1689
      %v1834 = vpack.c.b16 %v1692, %v1691
      %v1835 = vpack.c.b16 %v1694, %v1693
      %v1836 = vpack.c.b16 %v1696, %v1695
      %v1837 = vpack.c.b16 %v1698, %v1697
      %v1838 = vpack.c.b16 %v1700, %v1699
      %v1839 = vpack.c.b16 %v1702, %v1701
      %v1840 = vpack.c.b16 %v1704, %v1703
      %v1841 = vpack.c.b16 %v1706, %v1705
      %v1842 = vpack.c.b16 %v1708, %v1707
      %v1843 = vpack.c.b16 %v1710, %v1709
      %v1844 = vpack.c.b16 %v1712, %v1711
      %v1845 = vpack.c.b16 %v1714, %v1713
      %v1846 = vpack.c.b16 %v1716, %v1715
      %v1847 = vpack.c.b16 %v1718, %v1717
      %v1848 = vpack.c.b16 %v1720, %v1719
      %v1849 = vpack.c.b16 %v1722, %v1721
      %v1850 = vpack.c.b16 %v1724, %v1723
      %v1851 = vpack.c.b16 %v1726, %v1725
      %v1852 = vpack.c.b16 %v1728, %v1727
      %v1853 = vpack.c.b16 %v1730, %v1729
      %v1854 = vpack.c.b16 %v1732, %v1731
      %v1855 = vpack.c.b16 %v1734, %v1733
      %v1856 = vpack.c.b16 %v1736, %v1735
      %v1857 = vpack.c.b16 %v1738, %v1737
      %v1858 = vpack.c.b16 %v1740, %v1739
      %v1859 = vpack.c.b16 %v1742, %v1741
      %v1860 = vpack.c.b16 %v1744, %v1743
      %v1861 = vpack.c.b16 %v1746, %v1745
      %v1862 = vpack.c.b16 %v1748, %v1747
      %v1863 = vpack.c.b16 %v1750, %v1749
      %v1864 = vpack.c.b16 %v1752, %v1751
      %v1865 = vpack.c.b16 %v1754, %v1753
      %v1866 = vpack.c.b16 %v1756, %v1755
      %v1867 = vpack.c.b16 %v1758, %v1757
      %v1868 = vpack.c.b16 %v1760, %v1759
      %v1869 = vpack.c.b16 %v1762, %v1761
      %v1870 = vpack.c.b16 %v1764, %v1763
      %v1871 = vpack.c.b16 %v1766, %v1765
      %v1872 = vpack.c.b16 %v1768, %v1767
      %v1873 = vpack.c.b16 %v1770, %v1769
      %v1874 = vpack.c.b16 %v1772, %v1771
      %v1875 = vpack.c.b16 %v1774, %v1773
      %v1876 = vpack.c.b16 %v1776, %v1775
      %v1877 = vpack.c.b16 %v1778, %v1777
      %v1878 = vpack.c.b16 %v1780, %v1779
      %v1879 = vpack.c.b16 %v1782, %v1781
      %v1880 = vpack.c.b16 %v1784, %v1783
      %v1881 = vpack.c.b16 %v1786, %v1785
      %v1882 = vpack.c.b16 %v1788, %v1787
      %v1883 = vpack.c.b16 %v1790, %v1789
      %v1884 = vpack.c.b16 %v1792, %v1791
      %v1885 = vpack.c.b16 %v1794, %v1793
      %v1886 = vpack.c.b16 %v1796, %v1795
      %v1887 = vpack.c.b16 %v1798, %v1797
      %v1888 = vpack.c.b16 %v1800, %v1799
      %v1889 = vpack.c.b16 %v1802, %v1801
      %v1890 = vpack.c.b16 %v1804, %v1803
      %v1891 = vpack.c.b16 %v1806, %v1805
      %v1892 = vpack.c.b16 %v1808, %v1807
      %v1893 = vpack.c.b16 %v1810, %v1809
      %v1894 = vpack.c.b16 %v1812, %v1811
      %v1895 = vpack.c.b16 %v1814, %v1813
      %v1896 = vpack.c.b16 %v1816, %v1815
      %1977 = vmatprep.subr.bf16.mxu0 0
      %1978 = vmatpush1.bf16.msra.mxu0 %v1817
      %1979 = vmatprep.subr.bf16.mxu0 0
      %1980 = vmatpush1.bf16.msra.mxu0 %v1818
      %1981 = vmatprep.subr.bf16.mxu0 0
      %1982 = vmatpush1.bf16.msra.mxu0 %v1819
      %1983 = vmatprep.subr.bf16.mxu0 0
      %1984 = vmatpush1.bf16.msra.mxu0 %v1820
      %1985 = vmatprep.subr.bf16.mxu0 0
      %1986 = vmatpush1.bf16.msra.mxu0 %v1821
      %1987 = vmatprep.subr.bf16.mxu0 0
      %1988 = vmatpush1.bf16.msra.mxu0 %v1822
      %1989 = vmatprep.subr.bf16.mxu0 0
      %1990 = vmatpush1.bf16.msra.mxu0 %v1823
      %1991 = vmatprep.subr.bf16.mxu0 0
      %1992 = vmatpush1.bf16.msra.mxu0 %v1824
      %1993 = vmatprep.subr.bf16.mxu0 0
      %1994 = vmatpush1.bf16.msra.mxu0 %v1825
      %1995 = vmatprep.subr.bf16.mxu0 0
      %1996 = vmatpush1.bf16.msra.mxu0 %v1826
      %1997 = vmatprep.subr.bf16.mxu0 0
      %1998 = vmatpush1.bf16.msra.mxu0 %v1827
      %1999 = vmatprep.subr.bf16.mxu0 0
      %2000 = vmatpush1.bf16.msra.mxu0 %v1828
      %2001 = vmatprep.subr.bf16.mxu0 0
      %2002 = vmatpush1.bf16.msra.mxu0 %v1829
      %2003 = vmatprep.subr.bf16.mxu0 0
      %2004 = vmatpush1.bf16.msra.mxu0 %v1830
      %2005 = vmatprep.subr.bf16.mxu0 0
      %2006 = vmatpush1.bf16.msra.mxu0 %v1831
      %2007 = vmatprep.subr.bf16.mxu0 0
      %2008 = vmatpush1.bf16.msra.mxu0 %v1832
      %2009 = vmatprep.mubr.bf16.mxu0 %v1291
      %2010 = vmatmul.mubr.bf16.gmra.mrb[0].mxu0 %v1290
      %v2011 = vpop.f32.mrb[0].mxu0
      %v2012 = vadd.f32 %v1495, %v2011
      %v2013 = vpop.f32.mrb[0].mxu0
      %v2014 = vpop.f32.mrb[0].mxu0
      %v2015 = vadd.f32 %v1495, %v2014
      %v2016 = vpop.f32.mrb[0].mxu0
      %2017 = vmatprep.mubr.bf16.mxu0 %v1301
      %2018 = vmatmul.mubr.bf16.gmra.mrb[0].mxu0 %v1300
      %v2019 = vpop.f32.mrb[0].mxu0
      %v2020 = vadd.f32 %v1495, %v2019
      %v2021 = vpop.f32.mrb[0].mxu0
      %v2022 = vpop.f32.mrb[0].mxu0
      %v2023 = vadd.f32 %v1495, %v2022
      %v2024 = vpop.f32.mrb[0].mxu0
      %2025 = vmatprep.mubr.bf16.mxu0 %v1311
      %2026 = vmatmul.mubr.bf16.gmra.mrb[0].mxu0 %v1310
      %v2027 = vpop.f32.mrb[0].mxu0
      %v2028 = vadd.f32 %v1495, %v2027
      %v2029 = vpop.f32.mrb[0].mxu0
      %v2030 = vpop.f32.mrb[0].mxu0
      %v2031 = vadd.f32 %v1495, %v2030
      %v2032 = vpop.f32.mrb[0].mxu0
      %2033 = vmatprep.mubr.bf16.mxu0 %v1321
      %2034 = vmatmul.mubr.bf16.gmra.mrb[0].mxu0 %v1320
      %v2035 = vpop.f32.mrb[0].mxu0
      %v2036 = vadd.f32 %v1495, %v2035
      %v2037 = vpop.f32.mrb[0].mxu0
      %v2038 = vpop.f32.mrb[0].mxu0
      %v2039 = vadd.f32 %v1495, %v2038
      %v2040 = vpop.f32.mrb[0].mxu0
      %2041 = vdwg.mxu0
      %2042 = vmatprep.subr.bf16.mxu0 0
      %2043 = vmatpush1.bf16.msra.mxu0 %v1833
      %2044 = vmatprep.subr.bf16.mxu0 0
      %2045 = vmatpush1.bf16.msra.mxu0 %v1834
      %2046 = vmatprep.subr.bf16.mxu0 0
      %2047 = vmatpush1.bf16.msra.mxu0 %v1835
      %2048 = vmatprep.subr.bf16.mxu0 0
      %2049 = vmatpush1.bf16.msra.mxu0 %v1836
      %2050 = vmatprep.subr.bf16.mxu0 0
      %2051 = vmatpush1.bf16.msra.mxu0 %v1837
      %2052 = vmatprep.subr.bf16.mxu0 0
      %2053 = vmatpush1.bf16.msra.mxu0 %v1838
      %2054 = vmatprep.subr.bf16.mxu0 0
      %2055 = vmatpush1.bf16.msra.mxu0 %v1839
      %2056 = vmatprep.subr.bf16.mxu0 0
      %2057 = vmatpush1.bf16.msra.mxu0 %v1840
      %2058 = vmatprep.subr.bf16.mxu0 0
      %2059 = vmatpush1.bf16.msra.mxu0 %v1841
      %2060 = vmatprep.subr.bf16.mxu0 0
      %2061 = vmatpush1.bf16.msra.mxu0 %v1842
      %2062 = vmatprep.subr.bf16.mxu0 0
      %2063 = vmatpush1.bf16.msra.mxu0 %v1843
      %2064 = vmatprep.subr.bf16.mxu0 0
      %2065 = vmatpush1.bf16.msra.mxu0 %v1844
      %2066 = vmatprep.subr.bf16.mxu0 0
      %2067 = vmatpush1.bf16.msra.mxu0 %v1845
      %2068 = vmatprep.subr.bf16.mxu0 0
      %2069 = vmatpush1.bf16.msra.mxu0 %v1846
      %2070 = vmatprep.subr.bf16.mxu0 0
      %2071 = vmatpush1.bf16.msra.mxu0 %v1847
      %2072 = vmatprep.subr.bf16.mxu0 0
      %2073 = vmatpush1.bf16.msra.mxu0 %v1848
      %2074 = vmatprep.mubr.bf16.mxu0 %v1293
      %2075 = vmatmul.mubr.bf16.gmra.mrb[0].mxu0 %v1292
      %v2076 = vpop.f32.mrb[0].mxu0
      %v2077 = vadd.f32 %v2012, %v2076
      %v2078 = vpop.f32.mrb[0].mxu0
      %v2079 = vpop.f32.mrb[0].mxu0
      %v2080 = vadd.f32 %v2015, %v2079
      %v2081 = vpop.f32.mrb[0].mxu0
      %2082 = vmatprep.mubr.bf16.mxu0 %v1303
      %2083 = vmatmul.mubr.bf16.gmra.mrb[0].mxu0 %v1302
      %v2084 = vpop.f32.mrb[0].mxu0
      %v2085 = vadd.f32 %v2020, %v2084
      %v2086 = vpop.f32.mrb[0].mxu0
      %v2087 = vpop.f32.mrb[0].mxu0
      %v2088 = vadd.f32 %v2023, %v2087
      %v2089 = vpop.f32.mrb[0].mxu0
      %2090 = vmatprep.mubr.bf16.mxu0 %v1313
      %2091 = vmatmul.mubr.bf16.gmra.mrb[0].mxu0 %v1312
      %v2092 = vpop.f32.mrb[0].mxu0
      %v2093 = vadd.f32 %v2028, %v2092
      %v2094 = vpop.f32.mrb[0].mxu0
      %v2095 = vpop.f32.mrb[0].mxu0
      %v2096 = vadd.f32 %v2031, %v2095
      %v2097 = vpop.f32.mrb[0].mxu0
      %2098 = vmatprep.mubr.bf16.mxu0 %v1323
      %2099 = vmatmul.mubr.bf16.gmra.mrb[0].mxu0 %v1322
      %v2100 = vpop.f32.mrb[0].mxu0
      %v2101 = vadd.f32 %v2036, %v2100
      %v2102 = vpop.f32.mrb[0].mxu0
      %v2103 = vpop.f32.mrb[0].mxu0
      %v2104 = vadd.f32 %v2039, %v2103
      %v2105 = vpop.f32.mrb[0].mxu0
      %2106 = vdwg.mxu0
      %2107 = vmatprep.subr.bf16.mxu0 0
      %2108 = vmatpush1.bf16.msra.mxu0 %v1849
      %2109 = vmatprep.subr.bf16.mxu0 0
      %2110 = vmatpush1.bf16.msra.mxu0 %v1850
      %2111 = vmatprep.subr.bf16.mxu0 0
      %2112 = vmatpush1.bf16.msra.mxu0 %v1851
      %2113 = vmatprep.subr.bf16.mxu0 0
      %2114 = vmatpush1.bf16.msra.mxu0 %v1852
      %2115 = vmatprep.subr.bf16.mxu0 0
      %2116 = vmatpush1.bf16.msra.mxu0 %v1853
      %2117 = vmatprep.subr.bf16.mxu0 0
      %2118 = vmatpush1.bf16.msra.mxu0 %v1854
      %2119 = vmatprep.subr.bf16.mxu0 0
      %2120 = vmatpush1.bf16.msra.mxu0 %v1855
      %2121 = vmatprep.subr.bf16.mxu0 0
      %2122 = vmatpush1.bf16.msra.mxu0 %v1856
      %2123 = vmatprep.subr.bf16.mxu0 0
      %2124 = vmatpush1.bf16.msra.mxu0 %v1857
      %2125 = vmatprep.subr.bf16.mxu0 0
      %2126 = vmatpush1.bf16.msra.mxu0 %v1858
      %2127 = vmatprep.subr.bf16.mxu0 0
      %2128 = vmatpush1.bf16.msra.mxu0 %v1859
      %2129 = vmatprep.subr.bf16.mxu0 0
      %2130 = vmatpush1.bf16.msra.mxu0 %v1860
      %2131 = vmatprep.subr.bf16.mxu0 0
      %2132 = vmatpush1.bf16.msra.mxu0 %v1861
      %2133 = vmatprep.subr.bf16.mxu0 0
      %2134 = vmatpush1.bf16.msra.mxu0 %v1862
      %2135 = vmatprep.subr.bf16.mxu0 0
      %2136 = vmatpush1.bf16.msra.mxu0 %v1863
      %2137 = vmatprep.subr.bf16.mxu0 0
      %2138 = vmatpush1.bf16.msra.mxu0 %v1864
      %2139 = vmatprep.mubr.bf16.mxu0 %v1295
      %2140 = vmatmul.mubr.bf16.gmra.mrb[0].mxu0 %v1294
      %v2141 = vpop.f32.mrb[0].mxu0
      %v2142 = vadd.f32 %v2077, %v2141
      %v2143 = vpop.f32.mrb[0].mxu0
      %v2144 = vpop.f32.mrb[0].mxu0
      %v2145 = vadd.f32 %v2080, %v2144
      %v2146 = vpop.f32.mrb[0].mxu0
      %2147 = vmatprep.mubr.bf16.mxu0 %v1305
      %2148 = vmatmul.mubr.bf16.gmra.mrb[0].mxu0 %v1304
      %v2149 = vpop.f32.mrb[0].mxu0
      %v2150 = vadd.f32 %v2085, %v2149
      %v2151 = vpop.f32.mrb[0].mxu0
      %v2152 = vpop.f32.mrb[0].mxu0
      %v2153 = vadd.f32 %v2088, %v2152
      %v2154 = vpop.f32.mrb[0].mxu0
      %2155 = vmatprep.mubr.bf16.mxu0 %v1315
      %2156 = vmatmul.mubr.bf16.gmra.mrb[0].mxu0 %v1314
      %v2157 = vpop.f32.mrb[0].mxu0
      %v2158 = vadd.f32 %v2093, %v2157
      %v2159 = vpop.f32.mrb[0].mxu0
      %v2160 = vpop.f32.mrb[0].mxu0
      %v2161 = vadd.f32 %v2096, %v2160
      %v2162 = vpop.f32.mrb[0].mxu0
      %2163 = vmatprep.mubr.bf16.mxu0 %v1325
      %2164 = vmatmul.mubr.bf16.gmra.mrb[0].mxu0 %v1324
      %v2165 = vpop.f32.mrb[0].mxu0
      %v2166 = vadd.f32 %v2101, %v2165
      %v2167 = vpop.f32.mrb[0].mxu0
      %v2168 = vpop.f32.mrb[0].mxu0
      %v2169 = vadd.f32 %v2104, %v2168
      %v2170 = vpop.f32.mrb[0].mxu0
      %2171 = vdwg.mxu0
      %2172 = vmatprep.subr.bf16.mxu0 0
      %2173 = vmatpush1.bf16.msra.mxu0 %v1865
      %2174 = vmatprep.subr.bf16.mxu0 0
      %2175 = vmatpush1.bf16.msra.mxu0 %v1866
      %2176 = vmatprep.subr.bf16.mxu0 0
      %2177 = vmatpush1.bf16.msra.mxu0 %v1867
      %2178 = vmatprep.subr.bf16.mxu0 0
      %2179 = vmatpush1.bf16.msra.mxu0 %v1868
      %2180 = vmatprep.subr.bf16.mxu0 0
      %2181 = vmatpush1.bf16.msra.mxu0 %v1869
      %2182 = vmatprep.subr.bf16.mxu0 0
      %2183 = vmatpush1.bf16.msra.mxu0 %v1870
      %2184 = vmatprep.subr.bf16.mxu0 0
      %2185 = vmatpush1.bf16.msra.mxu0 %v1871
      %2186 = vmatprep.subr.bf16.mxu0 0
      %2187 = vmatpush1.bf16.msra.mxu0 %v1872
      %2188 = vmatprep.subr.bf16.mxu0 0
      %2189 = vmatpush1.bf16.msra.mxu0 %v1873
      %2190 = vmatprep.subr.bf16.mxu0 0
      %2191 = vmatpush1.bf16.msra.mxu0 %v1874
      %2192 = vmatprep.subr.bf16.mxu0 0
      %2193 = vmatpush1.bf16.msra.mxu0 %v1875
      %2194 = vmatprep.subr.bf16.mxu0 0
      %2195 = vmatpush1.bf16.msra.mxu0 %v1876
      %2196 = vmatprep.subr.bf16.mxu0 0
      %2197 = vmatpush1.bf16.msra.mxu0 %v1877
      %2198 = vmatprep.subr.bf16.mxu0 0
      %2199 = vmatpush1.bf16.msra.mxu0 %v1878
      %2200 = vmatprep.subr.bf16.mxu0 0
      %2201 = vmatpush1.bf16.msra.mxu0 %v1879
      %2202 = vmatprep.subr.bf16.mxu0 0
      %2203 = vmatpush1.bf16.msra.mxu0 %v1880
      %2204 = vmatprep.mubr.bf16.mxu0 %v1297
      %2205 = vmatmul.mubr.bf16.gmra.mrb[0].mxu0 %v1296
      %v2206 = vpop.f32.mrb[0].mxu0
      %v2207 = vadd.f32 %v2142, %v2206
      %v2208 = vpop.f32.mrb[0].mxu0
      %v2209 = vpop.f32.mrb[0].mxu0
      %v2210 = vadd.f32 %v2145, %v2209
      %v2211 = vpop.f32.mrb[0].mxu0
      %2212 = vmatprep.mubr.bf16.mxu0 %v1307
      %2213 = vmatmul.mubr.bf16.gmra.mrb[0].mxu0 %v1306
      %v2214 = vpop.f32.mrb[0].mxu0
      %v2215 = vadd.f32 %v2150, %v2214
      %v2216 = vpop.f32.mrb[0].mxu0
      %v2217 = vpop.f32.mrb[0].mxu0
      %v2218 = vadd.f32 %v2153, %v2217
      %v2219 = vpop.f32.mrb[0].mxu0
      %2220 = vmatprep.mubr.bf16.mxu0 %v1317
      %2221 = vmatmul.mubr.bf16.gmra.mrb[0].mxu0 %v1316
      %v2222 = vpop.f32.mrb[0].mxu0
      %v2223 = vadd.f32 %v2158, %v2222
      %v2224 = vpop.f32.mrb[0].mxu0
      %v2225 = vpop.f32.mrb[0].mxu0
      %v2226 = vadd.f32 %v2161, %v2225
      %v2227 = vpop.f32.mrb[0].mxu0
      %2228 = vmatprep.mubr.bf16.mxu0 %v1327
      %2229 = vmatmul.mubr.bf16.gmra.mrb[0].mxu0 %v1326
      %v2230 = vpop.f32.mrb[0].mxu0
      %v2231 = vadd.f32 %v2166, %v2230
      %v2232 = vpop.f32.mrb[0].mxu0
      %v2233 = vpop.f32.mrb[0].mxu0
      %v2234 = vadd.f32 %v2169, %v2233
      %v2235 = vpop.f32.mrb[0].mxu0
      %2236 = vdwg.mxu0
      %2237 = vmatprep.subr.bf16.mxu0 0
      %2238 = vmatpush1.bf16.msra.mxu0 %v1881
      %2239 = vmatprep.subr.bf16.mxu0 0
      %2240 = vmatpush1.bf16.msra.mxu0 %v1882
      %2241 = vmatprep.subr.bf16.mxu0 0
      %2242 = vmatpush1.bf16.msra.mxu0 %v1883
      %2243 = vmatprep.subr.bf16.mxu0 0
      %2244 = vmatpush1.bf16.msra.mxu0 %v1884
      %2245 = vmatprep.subr.bf16.mxu0 0
      %2246 = vmatpush1.bf16.msra.mxu0 %v1885
      %2247 = vmatprep.subr.bf16.mxu0 0
      %2248 = vmatpush1.bf16.msra.mxu0 %v1886
      %2249 = vmatprep.subr.bf16.mxu0 0
      %2250 = vmatpush1.bf16.msra.mxu0 %v1887
      %2251 = vmatprep.subr.bf16.mxu0 0
      %2252 = vmatpush1.bf16.msra.mxu0 %v1888
      %2253 = vmatprep.subr.bf16.mxu0 0
      %2254 = vmatpush1.bf16.msra.mxu0 %v1889
      %2255 = vmatprep.subr.bf16.mxu0 0
      %2256 = vmatpush1.bf16.msra.mxu0 %v1890
      %2257 = vmatprep.subr.bf16.mxu0 0
      %2258 = vmatpush1.bf16.msra.mxu0 %v1891
      %2259 = vmatprep.subr.bf16.mxu0 0
      %2260 = vmatpush1.bf16.msra.mxu0 %v1892
      %2261 = vmatprep.subr.bf16.mxu0 0
      %2262 = vmatpush1.bf16.msra.mxu0 %v1893
      %2263 = vmatprep.subr.bf16.mxu0 0
      %2264 = vmatpush1.bf16.msra.mxu0 %v1894
      %2265 = vmatprep.subr.bf16.mxu0 0
      %2266 = vmatpush1.bf16.msra.mxu0 %v1895
      %2267 = vmatprep.subr.bf16.mxu0 0
      %2268 = vmatpush1.bf16.msra.mxu0 %v1896
      %2269 = vmatprep.mubr.bf16.mxu0 %v1299
      %2270 = vmatmul.mubr.bf16.gmra.mrb[0].mxu0 %v1298
      %v2271 = vpop.f32.mrb[0].mxu0
      %v2272 = vadd.f32 %v2207, %v2271
      %v2273 = vpop.f32.mrb[0].mxu0
      %v2274 = vpop.f32.mrb[0].mxu0
      %v2275 = vadd.f32 %v2210, %v2274
      %v2276 = vpop.f32.mrb[0].mxu0
      %2277 = vmatprep.mubr.bf16.mxu0 %v1309
      %2278 = vmatmul.mubr.bf16.gmra.mrb[0].mxu0 %v1308
      %v2279 = vpop.f32.mrb[0].mxu0
      %v2280 = vadd.f32 %v2215, %v2279
      %v2281 = vpop.f32.mrb[0].mxu0
      %v2282 = vpop.f32.mrb[0].mxu0
      %v2283 = vadd.f32 %v2218, %v2282
      %v2284 = vpop.f32.mrb[0].mxu0
      %2285 = vmatprep.mubr.bf16.mxu0 %v1319
      %2286 = vmatmul.mubr.bf16.gmra.mrb[0].mxu0 %v1318
      %v2287 = vpop.f32.mrb[0].mxu0
      %v2288 = vadd.f32 %v2223, %v2287
      %v2289 = vpop.f32.mrb[0].mxu0
      %v2290 = vpop.f32.mrb[0].mxu0
      %v2291 = vadd.f32 %v2226, %v2290
      %v2292 = vpop.f32.mrb[0].mxu0
      %2293 = vmatprep.mubr.bf16.mxu0 %v1329
      %2294 = vmatmul.mubr.bf16.gmra.mrb[0].mxu0 %v1328
      %v2295 = vpop.f32.mrb[0].mxu0
      %v2296 = vadd.f32 %v2231, %v2295
      %v2297 = vpop.f32.mrb[0].mxu0
      %v2298 = vpop.f32.mrb[0].mxu0
      %v2299 = vadd.f32 %v2234, %v2298
      %v2300 = vpop.f32.mrb[0].mxu0
      %2301 = vdwg.mxu0
      %v2302 = vmax.f32 %v2272, 0.0
      %v2303 = vmax.f32 %v2275, 0.0
      %v2304 = vmax.f32 %v2280, 0.0
      %v2305 = vmax.f32 %v2283, 0.0
      %v2306 = vmax.f32 %v2288, 0.0
      %v2307 = vmax.f32 %v2291, 0.0
      %v2308 = vmax.f32 %v2296, 0.0
      %v2309 = vmax.f32 %v2299, 0.0
      %2310 = vst [vmem:[%s255] sm:$0xff] %v2302
      %2311 = vst [vmem:[%s255 + $0x8] sm:$0xff] %v2303
      %2312 = vst [vmem:[%s255 + $0x10] sm:$0xff] %v2304
      %2313 = vst [vmem:[%s255 + $0x18] sm:$0xff] %v2305
      %2314 = vst [vmem:[%s255 + $0x20] sm:$0xff] %v2306
      %2315 = vst [vmem:[%s255 + $0x28] sm:$0xff] %v2307
      %2316 = vst [vmem:[%s255 + $0x30] sm:$0xff] %v2308
      %2317 = vst [vmem:[%s255 + $0x38] sm:$0xff] %v2309
      %s2318 = smul.u32 8, %s20
      %p2319 = scmp.lt.s32.totalorder %s19, 1
      %s2320 = scalar_select %p2319, %s19, 1
      %p2321 = scmp.lt.s32.totalorder %s2318, 7
      %s2322 = scalar_select %p2321, %s2318, 7
      %s2323 = smul.addr %s2320, 8
      %s2324 = sadd.s32 %s2322, %s2323
      %s2325 = smul.addr %s2324, 8
      %s2326 = scalar_lea.vmem %s4, %s2325
      // Predicated region
      $region41: #{basic_block_forward.3} parent=35 // pred_check
        %p2327 = pneg %p143
      $region42: #{basic_block_forward.3} parent=35 // pred_check_branch
        %2329 = sbr.rel (%p2327) target = $region44
      $region43: #{basic_block_forward.3} parent=35 // pred_region
        %s2330 = smul.u32 8, %s20
      $region44: #{basic_block_forward.3} parent=35 // pred_fallthru
        _
    $region36: #{basic_block_forward.3} parent=5 // pred_fallthru
      _
    %p2331 = scmp.le.s32.totalorder 2, %s10
    // Predicated region
    $region45: #{basic_block_forward.3} parent=5 // pred_check
      %p2332 = pneg %p2331
    $region46: #{basic_block_forward.3} parent=5 // pred_check_branch
      %2334 = sbr.rel (%p2332) target = $region48
    $region47: #{basic_block_forward.3} parent=5 // pred_region
      %s2335 = ssub.s32 %s10, 2
      // Predicated region
      $region49: #{basic_block_forward.3} parent=47 // pred_check
        %p2336 = pneg %p149
      $region50: #{basic_block_forward.3} parent=47 // pred_check_branch
        %2338 = sbr.rel (%p2336) target = $region52
      $region51: #{basic_block_forward.3} parent=47 // pred_region
        %s2339 = smul.u32 8, %s22
        %p2340 = scmp.lt.s32.totalorder %s21, 1
        %s2341 = scalar_select %p2340, %s21, 1
        %p2342 = scmp.lt.s32.totalorder %s2339, 7
        %s2343 = scalar_select %p2342, %s2339, 7
        %s2344 = smul.addr %s2341, 8
        %s2345 = sadd.s32 %s2343, %s2344
        %s2346 = smul.addr %s2345, 8
        %s2347 = scalar_lea.vmem %s4, %s2346
      $region52: #{basic_block_forward.3} parent=47 // pred_fallthru
        _
    $region48: #{basic_block_forward.3} parent=5 // pred_fallthru
      _
  $region6: #{basic_block_forward.3} parent=0 // loop_footer
    %s14 = sadd.s32 1, %s10
  $region7: #{basic_block_forward.3} parent=0 // loop_footer_branch
    %9 = sbr.rel target = $region3
  $region8: #{basic_block_forward.3} parent=0 // loop_exit
    _

</llo_original>
